<compile_context>
chip_gen: v5e
topology: v5e:2x2
jax: 0.10.0
libtpu: 0.0.40
codegen_flags: <defaults>
</compile_context>

<pallas_src>
import functools

import jax
import jax.numpy as jnp
from jax import lax
from jax.experimental import pallas as pl
from jax.experimental.pallas import tpu as pltpu


# MXU operand dtype.  jnp.float32 == exact parity with the fp32 reference.
# On v5e (f32 matmuls are multi-pass emulated on the bf16 MXU) set to
# jnp.bfloat16 -- accumulation stays f32 either way.
_MM_DTYPE = jnp.float32


def _mm(a, b):
    return jnp.dot(a.astype(_MM_DTYPE), b.astype(_MM_DTYPE),
                   preferred_element_type=jnp.float32)


def _bmm(a, b):
    return jnp.einsum("bij,bjf->bif", a.astype(_MM_DTYPE), b.astype(_MM_DTYPE),
                      preferred_element_type=jnp.float32)


# ----------------------------------------------------------------------------
# Single fused kernel: GCN encoder (all layers, all steps, both branches)
#                      + multi-layer LSTM + Linear head
# ----------------------------------------------------------------------------
def _gcn_lstm_kernel(g1_ref, f1_ref, g2_ref, f2_ref, *refs,
                     n_gcn_layers, n_lstm_layers):
    o_ref = refs[-1]
    fc_b_ref = refs[-2]
    fc_w_ref = refs[-3]
    gcn_refs = refs[:2 * n_gcn_layers]                       # w0,b0,w1,b1,...
    lstm_refs = refs[2 * n_gcn_layers:2 * n_gcn_layers + 3 * n_lstm_layers]

    t_steps, n, _ = g1_ref.shape
    rows = 2 * n                     # both branches stacked on the node axis

    # ------------------------- GCN encoder ---------------------------------
    # A_hat = D^-1/2 (A+I) D^-1/2, applied as d * ((A+I) @ (d * X)) so only
    # column-vector (lane-broadcast) scalings are needed.
    r = lax.broadcasted_iota(jnp.int32, (n, n), 0)
    c = lax.broadcasted_iota(jnp.int32, (n, n), 1)
    eye = (r == c).astype(jnp.float32)

    a1 = g1_ref[...] + eye[None]                              # (T, N, N)
    a2 = g2_ref[...] + eye[None]
    d1 = lax.rsqrt(jnp.sum(a1, axis=-1, keepdims=True))       # (T, N, 1)
    d2 = lax.rsqrt(jnp.sum(a2, axis=-1, keepdims=True))

    # Branches stacked on the node axis from the start -> LSTM layout for free.
    h = jnp.concatenate([f1_ref[...], f2_ref[...]], axis=1)   # (T, 2N, F_in)

    for l in range(n_gcn_layers):
        w = gcn_refs[2 * l][...]
        b = gcn_refs[2 * l + 1][...]
        f_out = w.shape[-1]
        # One 128-row matmul per layer for the feature transform.
        hw = _mm(h.reshape(t_steps * rows, -1), w).reshape(t_steps, rows, f_out)
        # Per-graph aggregation stays a small batched einsum (per branch).
        agg1 = d1 * _bmm(a1, d1 * hw[:, :n])                  # (T, N, F_out)
        agg2 = d2 * _bmm(a2, d2 * hw[:, n:])
        h = jnp.concatenate([agg1, agg2], axis=1) + b         # (T, 2N, F_out)
        if l < n_gcn_layers - 1:
            h = jnp.maximum(h, 0.0)

    # ------------------------- LSTM (layer-major) --------------------------
    x = h                                                     # (T, 2N, F0)
    h_last = None
    for l in range(n_lstm_layers):
        wih_ref = lstm_refs[3 * l]        # (4, F_in, H), gate order i,f,g,o
        whh_ref = lstm_refs[3 * l + 1]    # (4, H, H)
        b_ref = lstm_refs[3 * l + 2]      # (4, 1, H)  (b_ih + b_hh)
        hdim = whh_ref.shape[-1]

        # Input projections for ALL T steps: one (T*2N=128, F) matmul per gate,
        # bias added (broadcast) once -- off the recurrent critical path.
        x_flat = x.reshape(t_steps * rows, -1)
        xp = [_mm(x_flat, wih_ref[k]) + b_ref[k] for k in range(4)]
        # Hoist recurrent weights out of the unrolled time loop.
        whh = [whh_ref[k][...] for k in range(4)]

        h_l = jnp.zeros((rows, hdim), jnp.float32)
        c_l = jnp.zeros((rows, hdim), jnp.float32)
        h_seq = []
        for t in range(t_steps):          # T is small -> fully unrolled
            r0 = t * rows
            g = [xp[k][r0:r0 + rows] + _mm(h_l, whh[k]) for k in range(4)]
            i_g = jax.nn.sigmoid(g[0])
            f_g = jax.nn.sigmoid(g[1])
            g_g = jnp.tanh(g[2])
            o_g = jax.nn.sigmoid(g[3])
            c_l = f_g * c_l + i_g * g_g
            h_l = o_g * jnp.tanh(c_l)
            h_seq.append(h_l)
        x = jnp.stack(h_seq, axis=0)      # (T, 2N, H): input to next layer
        h_last = h_l

    # ------------------------- Linear head ---------------------------------
    # concat(h1_last, h2_last) @ fc_w + fc_b, expressed as two dots so no
    # lane-axis concatenation is needed.
    hdim = h_last.shape[-1]
    fc_w = fc_w_ref[...]                  # (2H, out)
    out = (_mm(h_last[:n], fc_w[:hdim]) + _mm(h_last[n:], fc_w[hdim:])
           + fc_b_ref[...])
    o_ref[...] = out.astype(o_ref.dtype)


# ----------------------------------------------------------------------------
# Wrapper
# ----------------------------------------------------------------------------
def gcn_lstm_forward(g1, feats1, g2, feats2, time_split, params):
    """g*: (T, N, N), feats*: (T, N, F_in)  ->  (N, lstm_out)."""
    gcn_p, lstm_p, fc_w, fc_b = params
    n = g1.shape[1]
    out_dim = fc_w.shape[1]

    flat = []
    for w, b in gcn_p:
        flat += [w, b]
    for wih, whh, b in lstm_p:
        flat += [wih, whh, b]
    flat += [fc_w, fc_b]

    vmem = pl.BlockSpec(memory_space=pltpu.MemorySpace.VMEM)
    kernel = functools.partial(_gcn_lstm_kernel,
                               n_gcn_layers=len(gcn_p),
                               n_lstm_layers=len(lstm_p))
    out = pl.pallas_call(
        kernel,
        out_shape=jax.ShapeDtypeStruct((n, out_dim), jnp.float32),
        in_specs=[vmem] * (4 + len(flat)),
        out_specs=vmem,
    )(g1[:time_split], feats1[:time_split],
      g2[:time_split], feats2[:time_split], *flat)
    # TODO(synk): nn.Dropout is stochastic in train mode; eval-mode = identity.
    return out


# ----------------------------------------------------------------------------
# Parameter setup
# ----------------------------------------------------------------------------
def init_params(key, gcn_in, gcn_hid, gcn_out, gcn_layers,
                lstm_hid, lstm_out, lstm_layers):
    keys = jax.random.split(key, 64)
    kidx = 0

    def nxt():
        nonlocal kidx
        k = keys[kidx]
        kidx += 1
        return k

    # GCN layers
    gcn_dims = ([gcn_in] + [gcn_hid] * (gcn_layers - 1) + [gcn_out]
                if gcn_layers > 1 else [gcn_in, gcn_out])
    gcn_p = []
    for l in range(gcn_layers):
        w = 0.1 * jax.random.normal(nxt(), (gcn_dims[l], gcn_dims[l + 1]),
                                    jnp.float32)
        b = 0.05 * jax.random.normal(nxt(), (1, gcn_dims[l + 1]), jnp.float32)
        gcn_p.append((w, b))

    # LSTM layers, gate-major storage: (4, F_in, H) / (4, H, H) / (4, 1, H);
    # gate order i, f, g, o; bias is b_ih + b_hh combined.
    lstm_p = []
    for l in range(lstm_layers):
        f_in = gcn_out if l == 0 else lstm_hid
        w_ih = 0.1 * jax.random.normal(nxt(), (4, f_in, lstm_hid), jnp.float32)
        w_hh = 0.1 * jax.random.normal(nxt(), (4, lstm_hid, lstm_hid),
                                       jnp.float32)
        b = 0.05 * jax.random.normal(nxt(), (4, 1, lstm_hid), jnp.float32)
        lstm_p.append((w_ih, w_hh, b))

    fc_w = 0.1 * jax.random.normal(nxt(), (2 * lstm_hid, lstm_out), jnp.float32)
    fc_b = 0.05 * jax.random.normal(nxt(), (1, lstm_out), jnp.float32)
    return gcn_p, lstm_p, fc_w, fc_b


if __name__ == "__main__":
    key = jax.random.PRNGKey(0)
    k_a1, k_a2, k_f1, k_f2, k_p = jax.random.split(key, 5)

    T, N = 4, 16                              # time_split, num graph nodes
    gcn_in, gcn_hid, gcn_out, gcn_layers = 8, 16, 16, 2
    lstm_hid, lstm_out, lstm_layers = 32, 8, 2

    def rand_adj(k):
        a = (jax.random.uniform(k, (T, N, N)) < 0.3).astype(jnp.float32)
        return jnp.maximum(a, jnp.transpose(a, (0, 2, 1)))   # symmetric 0/1

    g1 = rand_adj(k_a1)
    g2 = rand_adj(k_a2)
    features1 = jax.random.normal(k_f1, (T, N, gcn_in), jnp.float32)
    features2 = jax.random.normal(k_f2, (T, N, gcn_in), jnp.float32)

    params = init_params(k_p, gcn_in, gcn_hid, gcn_out, gcn_layers,
                         lstm_hid, lstm_out, lstm_layers)

    fwd = jax.jit(lambda a1, f1, a2, f2, p:
                  gcn_lstm_forward(a1, f1, a2, f2, T, p))
    out = jax.block_until_ready(fwd(g1, features1, g2, features2, params))
    assert out.shape == (N, lstm_out)
    print("KERNEL_OK")
</pallas_src>

<mosaic_0001>
module attributes {stable_mosaic.version = 11 : i64} {
  func.func @_gcn_lstm_kernel(%arg0: memref<4x16x16xf32, #tpu.memory_space<vmem>>, %arg1: memref<4x16x8xf32, #tpu.memory_space<vmem>>, %arg2: memref<4x16x16xf32, #tpu.memory_space<vmem>>, %arg3: memref<4x16x8xf32, #tpu.memory_space<vmem>>, %arg4: memref<8x16xf32, #tpu.memory_space<vmem>>, %arg5: memref<1x16xf32, #tpu.memory_space<vmem>>, %arg6: memref<16x16xf32, #tpu.memory_space<vmem>>, %arg7: memref<1x16xf32, #tpu.memory_space<vmem>>, %arg8: memref<4x16x32xf32, #tpu.memory_space<vmem>>, %arg9: memref<4x32x32xf32, #tpu.memory_space<vmem>>, %arg10: memref<4x1x32xf32, #tpu.memory_space<vmem>>, %arg11: memref<4x32x32xf32, #tpu.memory_space<vmem>>, %arg12: memref<4x32x32xf32, #tpu.memory_space<vmem>>, %arg13: memref<4x1x32xf32, #tpu.memory_space<vmem>>, %arg14: memref<64x8xf32, #tpu.memory_space<vmem>>, %arg15: memref<1x8xf32, #tpu.memory_space<vmem>>, %arg16: memref<16x8xf32, #tpu.memory_space<vmem>>) attributes {dimension_semantics = [], scalar_prefetch = 0 : i64, scratch_operands = 0 : i64, tpu.core_type = #tpu.core_type<tc>} {
    %0 = tpu.iota {dimensions = array<i32: 0>} : vector<16x16xi32>
    %1 = tpu.iota {dimensions = array<i32: 1>} : vector<16x16xi32>
    %2 = arith.cmpi eq, %0, %1 : vector<16x16xi32>
    %3 = arith.extui %2 : vector<16x16xi1> to vector<16x16xi32>
    %4 = arith.sitofp %3 : vector<16x16xi32> to vector<16x16xf32>
    %c0 = arith.constant 0 : index
    %c0_0 = arith.constant 0 : index
    %c0_1 = arith.constant 0 : index
    %5 = vector.load %arg0[%c0, %c0_0, %c0_1] : memref<4x16x16xf32, #tpu.memory_space<vmem>>, vector<4x16x16xf32>
    %6 = vector.shape_cast %4 : vector<16x16xf32> to vector<1x16x16xf32>
    %7 = vector.broadcast %6 : vector<1x16x16xf32> to vector<4x16x16xf32>
    %8 = arith.addf %5, %7 : vector<4x16x16xf32>
    %c0_2 = arith.constant 0 : index
    %c0_3 = arith.constant 0 : index
    %c0_4 = arith.constant 0 : index
    %9 = vector.load %arg2[%c0_2, %c0_3, %c0_4] : memref<4x16x16xf32, #tpu.memory_space<vmem>>, vector<4x16x16xf32>
    %10 = vector.shape_cast %4 : vector<16x16xf32> to vector<1x16x16xf32>
    %11 = vector.broadcast %10 : vector<1x16x16xf32> to vector<4x16x16xf32>
    %12 = arith.addf %9, %11 : vector<4x16x16xf32>
    %cst = arith.constant dense<0.000000e+00> : vector<4x16xf32>
    %13 = vector.multi_reduction <add>, %8, %cst [2] : vector<4x16x16xf32> to vector<4x16xf32>
    %14 = vector.shape_cast %13 : vector<4x16xf32> to vector<4x16x1xf32>
    %15 = math.rsqrt %14 : vector<4x16x1xf32>
    %cst_5 = arith.constant dense<0.000000e+00> : vector<4x16xf32>
    %16 = vector.multi_reduction <add>, %12, %cst_5 [2] : vector<4x16x16xf32> to vector<4x16xf32>
    %17 = vector.shape_cast %16 : vector<4x16xf32> to vector<4x16x1xf32>
    %18 = math.rsqrt %17 : vector<4x16x1xf32>
    %c0_6 = arith.constant 0 : index
    %c0_7 = arith.constant 0 : index
    %c0_8 = arith.constant 0 : index
    %19 = vector.load %arg1[%c0_6, %c0_7, %c0_8] : memref<4x16x8xf32, #tpu.memory_space<vmem>>, vector<4x16x8xf32>
    %c0_9 = arith.constant 0 : index
    %c0_10 = arith.constant 0 : index
    %c0_11 = arith.constant 0 : index
    %20 = vector.load %arg3[%c0_9, %c0_10, %c0_11] : memref<4x16x8xf32, #tpu.memory_space<vmem>>, vector<4x16x8xf32>
    %21 = tpu.concatenate %19, %20 in 1 : vector<4x16x8xf32>, vector<4x16x8xf32> -> vector<4x32x8xf32>
    %c0_12 = arith.constant 0 : index
    %c0_13 = arith.constant 0 : index
    %22 = vector.load %arg4[%c0_12, %c0_13] : memref<8x16xf32, #tpu.memory_space<vmem>>, vector<8x16xf32>
    %c0_14 = arith.constant 0 : index
    %c0_15 = arith.constant 0 : index
    %23 = vector.load %arg5[%c0_14, %c0_15] : memref<1x16xf32, #tpu.memory_space<vmem>>, vector<1x16xf32>
    %24 = vector.shape_cast %21 : vector<4x32x8xf32> to vector<128x8xf32>
    %cst_16 = arith.constant dense<0.000000e+00> : vector<128x16xf32>
    %25 = tpu.matmul %24, %22, %cst_16 {dimension_numbers = #tpu.dot_dimension_numbers<[1], [0], [0], [1], [0, 0, 1, 1], [], []>} : vector<128x8xf32>, vector<8x16xf32>, vector<128x16xf32> -> vector<128x16xf32>
    %26 = vector.shape_cast %25 : vector<128x16xf32> to vector<4x32x16xf32>
    %27 = vector.extract_strided_slice %26 {offsets = [0, 0, 0], sizes = [4, 16, 16], strides = [1, 1, 1]} : vector<4x32x16xf32> to vector<4x16x16xf32>
    %28 = vector.broadcast %15 : vector<4x16x1xf32> to vector<4x16x16xf32>
    %29 = arith.mulf %28, %27 : vector<4x16x16xf32>
    "tpu.trace_start"() <{level = 10 : i32, message = "bij,bjf->bif"}> : () -> ()
    %cst_17 = arith.constant dense<0.000000e+00> : vector<4x16x16xf32>
    %30 = tpu.matmul %8, %29, %cst_17 {dimension_numbers = #tpu.dot_dimension_numbers<[2], [1], [1], [2], [0, 0, 0, 1, 1, 2], [0], [0]>} : vector<4x16x16xf32>, vector<4x16x16xf32>, vector<4x16x16xf32> -> vector<4x16x16xf32>
    "tpu.trace_stop"() : () -> ()
    %31 = vector.broadcast %15 : vector<4x16x1xf32> to vector<4x16x16xf32>
    %32 = arith.mulf %31, %30 : vector<4x16x16xf32>
    %33 = vector.extract_strided_slice %26 {offsets = [0, 16, 0], sizes = [4, 16, 16], strides = [1, 1, 1]} : vector<4x32x16xf32> to vector<4x16x16xf32>
    %34 = vector.broadcast %18 : vector<4x16x1xf32> to vector<4x16x16xf32>
    %35 = arith.mulf %34, %33 : vector<4x16x16xf32>
    "tpu.trace_start"() <{level = 10 : i32, message = "bij,bjf->bif"}> : () -> ()
    %cst_18 = arith.constant dense<0.000000e+00> : vector<4x16x16xf32>
    %36 = tpu.matmul %12, %35, %cst_18 {dimension_numbers = #tpu.dot_dimension_numbers<[2], [1], [1], [2], [0, 0, 0, 1, 1, 2], [0], [0]>} : vector<4x16x16xf32>, vector<4x16x16xf32>, vector<4x16x16xf32> -> vector<4x16x16xf32>
    "tpu.trace_stop"() : () -> ()
    %37 = vector.broadcast %18 : vector<4x16x1xf32> to vector<4x16x16xf32>
    %38 = arith.mulf %37, %36 : vector<4x16x16xf32>
    %39 = tpu.concatenate %32, %38 in 1 : vector<4x16x16xf32>, vector<4x16x16xf32> -> vector<4x32x16xf32>
    %40 = vector.shape_cast %23 : vector<1x16xf32> to vector<1x1x16xf32>
    %41 = vector.broadcast %40 : vector<1x1x16xf32> to vector<4x32x16xf32>
    %42 = arith.addf %39, %41 : vector<4x32x16xf32>
    %cst_19 = arith.constant 0.000000e+00 : f32
    %43 = vector.broadcast %cst_19 : f32 to vector<4x32x16xf32>
    %44 = arith.maximumf %42, %43 : vector<4x32x16xf32>
    %c0_20 = arith.constant 0 : index
    %c0_21 = arith.constant 0 : index
    %45 = vector.load %arg6[%c0_20, %c0_21] : memref<16x16xf32, #tpu.memory_space<vmem>>, vector<16x16xf32>
    %c0_22 = arith.constant 0 : index
    %c0_23 = arith.constant 0 : index
    %46 = vector.load %arg7[%c0_22, %c0_23] : memref<1x16xf32, #tpu.memory_space<vmem>>, vector<1x16xf32>
    %47 = vector.shape_cast %44 : vector<4x32x16xf32> to vector<128x16xf32>
    %cst_24 = arith.constant dense<0.000000e+00> : vector<128x16xf32>
    %48 = tpu.matmul %47, %45, %cst_24 {dimension_numbers = #tpu.dot_dimension_numbers<[1], [0], [0], [1], [0, 0, 1, 1], [], []>} : vector<128x16xf32>, vector<16x16xf32>, vector<128x16xf32> -> vector<128x16xf32>
    %49 = vector.shape_cast %48 : vector<128x16xf32> to vector<4x32x16xf32>
    %50 = vector.extract_strided_slice %49 {offsets = [0, 0, 0], sizes = [4, 16, 16], strides = [1, 1, 1]} : vector<4x32x16xf32> to vector<4x16x16xf32>
    %51 = vector.broadcast %15 : vector<4x16x1xf32> to vector<4x16x16xf32>
    %52 = arith.mulf %51, %50 : vector<4x16x16xf32>
    "tpu.trace_start"() <{level = 10 : i32, message = "bij,bjf->bif"}> : () -> ()
    %cst_25 = arith.constant dense<0.000000e+00> : vector<4x16x16xf32>
    %53 = tpu.matmul %8, %52, %cst_25 {dimension_numbers = #tpu.dot_dimension_numbers<[2], [1], [1], [2], [0, 0, 0, 1, 1, 2], [0], [0]>} : vector<4x16x16xf32>, vector<4x16x16xf32>, vector<4x16x16xf32> -> vector<4x16x16xf32>
    "tpu.trace_stop"() : () -> ()
    %54 = vector.broadcast %15 : vector<4x16x1xf32> to vector<4x16x16xf32>
    %55 = arith.mulf %54, %53 : vector<4x16x16xf32>
    %56 = vector.extract_strided_slice %49 {offsets = [0, 16, 0], sizes = [4, 16, 16], strides = [1, 1, 1]} : vector<4x32x16xf32> to vector<4x16x16xf32>
    %57 = vector.broadcast %18 : vector<4x16x1xf32> to vector<4x16x16xf32>
    %58 = arith.mulf %57, %56 : vector<4x16x16xf32>
    "tpu.trace_start"() <{level = 10 : i32, message = "bij,bjf->bif"}> : () -> ()
    %cst_26 = arith.constant dense<0.000000e+00> : vector<4x16x16xf32>
    %59 = tpu.matmul %12, %58, %cst_26 {dimension_numbers = #tpu.dot_dimension_numbers<[2], [1], [1], [2], [0, 0, 0, 1, 1, 2], [0], [0]>} : vector<4x16x16xf32>, vector<4x16x16xf32>, vector<4x16x16xf32> -> vector<4x16x16xf32>
    "tpu.trace_stop"() : () -> ()
    %60 = vector.broadcast %18 : vector<4x16x1xf32> to vector<4x16x16xf32>
    %61 = arith.mulf %60, %59 : vector<4x16x16xf32>
    %62 = tpu.concatenate %55, %61 in 1 : vector<4x16x16xf32>, vector<4x16x16xf32> -> vector<4x32x16xf32>
    %63 = vector.shape_cast %46 : vector<1x16xf32> to vector<1x1x16xf32>
    %64 = vector.broadcast %63 : vector<1x1x16xf32> to vector<4x32x16xf32>
    %65 = arith.addf %62, %64 : vector<4x32x16xf32>
    %66 = vector.shape_cast %65 : vector<4x32x16xf32> to vector<128x16xf32>
    %c0_27 = arith.constant 0 : index
    %c0_28 = arith.constant 0 : index
    %c0_29 = arith.constant 0 : index
    %67 = vector.load %arg8[%c0_27, %c0_28, %c0_29] : memref<4x16x32xf32, #tpu.memory_space<vmem>>, vector<1x16x32xf32>
    %68 = vector.shape_cast %67 : vector<1x16x32xf32> to vector<16x32xf32>
    %cst_30 = arith.constant dense<0.000000e+00> : vector<128x32xf32>
    %69 = tpu.matmul %66, %68, %cst_30 {dimension_numbers = #tpu.dot_dimension_numbers<[1], [0], [0], [1], [0, 0, 1, 1], [], []>} : vector<128x16xf32>, vector<16x32xf32>, vector<128x32xf32> -> vector<128x32xf32>
    %c0_31 = arith.constant 0 : index
    %c0_32 = arith.constant 0 : index
    %c0_33 = arith.constant 0 : index
    %70 = vector.load %arg10[%c0_31, %c0_32, %c0_33] : memref<4x1x32xf32, #tpu.memory_space<vmem>>, vector<1x1x32xf32>
    %71 = vector.shape_cast %70 : vector<1x1x32xf32> to vector<1x32xf32>
    %72 = vector.broadcast %71 : vector<1x32xf32> to vector<128x32xf32>
    %73 = arith.addf %69, %72 : vector<128x32xf32>
    %c1 = arith.constant 1 : index
    %c0_34 = arith.constant 0 : index
    %c0_35 = arith.constant 0 : index
    %74 = vector.load %arg8[%c1, %c0_34, %c0_35] : memref<4x16x32xf32, #tpu.memory_space<vmem>>, vector<1x16x32xf32>
    %75 = vector.shape_cast %74 : vector<1x16x32xf32> to vector<16x32xf32>
    %cst_36 = arith.constant dense<0.000000e+00> : vector<128x32xf32>
    %76 = tpu.matmul %66, %75, %cst_36 {dimension_numbers = #tpu.dot_dimension_numbers<[1], [0], [0], [1], [0, 0, 1, 1], [], []>} : vector<128x16xf32>, vector<16x32xf32>, vector<128x32xf32> -> vector<128x32xf32>
    %c1_37 = arith.constant 1 : index
    %c0_38 = arith.constant 0 : index
    %c0_39 = arith.constant 0 : index
    %77 = vector.load %arg10[%c1_37, %c0_38, %c0_39] : memref<4x1x32xf32, #tpu.memory_space<vmem>>, vector<1x1x32xf32>
    %78 = vector.shape_cast %77 : vector<1x1x32xf32> to vector<1x32xf32>
    %79 = vector.broadcast %78 : vector<1x32xf32> to vector<128x32xf32>
    %80 = arith.addf %76, %79 : vector<128x32xf32>
    %c2 = arith.constant 2 : index
    %c0_40 = arith.constant 0 : index
    %c0_41 = arith.constant 0 : index
    %81 = vector.load %arg8[%c2, %c0_40, %c0_41] : memref<4x16x32xf32, #tpu.memory_space<vmem>>, vector<1x16x32xf32>
    %82 = vector.shape_cast %81 : vector<1x16x32xf32> to vector<16x32xf32>
    %cst_42 = arith.constant dense<0.000000e+00> : vector<128x32xf32>
    %83 = tpu.matmul %66, %82, %cst_42 {dimension_numbers = #tpu.dot_dimension_numbers<[1], [0], [0], [1], [0, 0, 1, 1], [], []>} : vector<128x16xf32>, vector<16x32xf32>, vector<128x32xf32> -> vector<128x32xf32>
    %c2_43 = arith.constant 2 : index
    %c0_44 = arith.constant 0 : index
    %c0_45 = arith.constant 0 : index
    %84 = vector.load %arg10[%c2_43, %c0_44, %c0_45] : memref<4x1x32xf32, #tpu.memory_space<vmem>>, vector<1x1x32xf32>
    %85 = vector.shape_cast %84 : vector<1x1x32xf32> to vector<1x32xf32>
    %86 = vector.broadcast %85 : vector<1x32xf32> to vector<128x32xf32>
    %87 = arith.addf %83, %86 : vector<128x32xf32>
    %c3 = arith.constant 3 : index
    %c0_46 = arith.constant 0 : index
    %c0_47 = arith.constant 0 : index
    %88 = vector.load %arg8[%c3, %c0_46, %c0_47] : memref<4x16x32xf32, #tpu.memory_space<vmem>>, vector<1x16x32xf32>
    %89 = vector.shape_cast %88 : vector<1x16x32xf32> to vector<16x32xf32>
    %cst_48 = arith.constant dense<0.000000e+00> : vector<128x32xf32>
    %90 = tpu.matmul %66, %89, %cst_48 {dimension_numbers = #tpu.dot_dimension_numbers<[1], [0], [0], [1], [0, 0, 1, 1], [], []>} : vector<128x16xf32>, vector<16x32xf32>, vector<128x32xf32> -> vector<128x32xf32>
    %c3_49 = arith.constant 3 : index
    %c0_50 = arith.constant 0 : index
    %c0_51 = arith.constant 0 : index
    %91 = vector.load %arg10[%c3_49, %c0_50, %c0_51] : memref<4x1x32xf32, #tpu.memory_space<vmem>>, vector<1x1x32xf32>
    %92 = vector.shape_cast %91 : vector<1x1x32xf32> to vector<1x32xf32>
    %93 = vector.broadcast %92 : vector<1x32xf32> to vector<128x32xf32>
    %94 = arith.addf %90, %93 : vector<128x32xf32>
    %c0_52 = arith.constant 0 : index
    %c0_53 = arith.constant 0 : index
    %c0_54 = arith.constant 0 : index
    %95 = vector.load %arg9[%c0_52, %c0_53, %c0_54] : memref<4x32x32xf32, #tpu.memory_space<vmem>>, vector<1x32x32xf32>
    %96 = vector.shape_cast %95 : vector<1x32x32xf32> to vector<32x32xf32>
    %c1_55 = arith.constant 1 : index
    %c0_56 = arith.constant 0 : index
    %c0_57 = arith.constant 0 : index
    %97 = vector.load %arg9[%c1_55, %c0_56, %c0_57] : memref<4x32x32xf32, #tpu.memory_space<vmem>>, vector<1x32x32xf32>
    %98 = vector.shape_cast %97 : vector<1x32x32xf32> to vector<32x32xf32>
    %c2_58 = arith.constant 2 : index
    %c0_59 = arith.constant 0 : index
    %c0_60 = arith.constant 0 : index
    %99 = vector.load %arg9[%c2_58, %c0_59, %c0_60] : memref<4x32x32xf32, #tpu.memory_space<vmem>>, vector<1x32x32xf32>
    %100 = vector.shape_cast %99 : vector<1x32x32xf32> to vector<32x32xf32>
    %c3_61 = arith.constant 3 : index
    %c0_62 = arith.constant 0 : index
    %c0_63 = arith.constant 0 : index
    %101 = vector.load %arg9[%c3_61, %c0_62, %c0_63] : memref<4x32x32xf32, #tpu.memory_space<vmem>>, vector<1x32x32xf32>
    %102 = vector.shape_cast %101 : vector<1x32x32xf32> to vector<32x32xf32>
    %cst_64 = arith.constant 0.000000e+00 : f32
    %103 = vector.broadcast %cst_64 : f32 to vector<32x32xf32>
    %cst_65 = arith.constant 0.000000e+00 : f32
    %104 = vector.broadcast %cst_65 : f32 to vector<32x32xf32>
    %105 = vector.extract_strided_slice %73 {offsets = [0, 0], sizes = [32, 32], strides = [1, 1]} : vector<128x32xf32> to vector<32x32xf32>
    %cst_66 = arith.constant dense<0.000000e+00> : vector<32x32xf32>
    %106 = tpu.matmul %103, %96, %cst_66 {dimension_numbers = #tpu.dot_dimension_numbers<[1], [0], [0], [1], [0, 0, 1, 1], [], []>} : vector<32x32xf32>, vector<32x32xf32>, vector<32x32xf32> -> vector<32x32xf32>
    %107 = arith.addf %105, %106 : vector<32x32xf32>
    %108 = vector.extract_strided_slice %80 {offsets = [0, 0], sizes = [32, 32], strides = [1, 1]} : vector<128x32xf32> to vector<32x32xf32>
    %cst_67 = arith.constant dense<0.000000e+00> : vector<32x32xf32>
    %109 = tpu.matmul %103, %98, %cst_67 {dimension_numbers = #tpu.dot_dimension_numbers<[1], [0], [0], [1], [0, 0, 1, 1], [], []>} : vector<32x32xf32>, vector<32x32xf32>, vector<32x32xf32> -> vector<32x32xf32>
    %110 = arith.addf %108, %109 : vector<32x32xf32>
    %111 = vector.extract_strided_slice %87 {offsets = [0, 0], sizes = [32, 32], strides = [1, 1]} : vector<128x32xf32> to vector<32x32xf32>
    %cst_68 = arith.constant dense<0.000000e+00> : vector<32x32xf32>
    %112 = tpu.matmul %103, %100, %cst_68 {dimension_numbers = #tpu.dot_dimension_numbers<[1], [0], [0], [1], [0, 0, 1, 1], [], []>} : vector<32x32xf32>, vector<32x32xf32>, vector<32x32xf32> -> vector<32x32xf32>
    %113 = arith.addf %111, %112 : vector<32x32xf32>
    %114 = vector.extract_strided_slice %94 {offsets = [0, 0], sizes = [32, 32], strides = [1, 1]} : vector<128x32xf32> to vector<32x32xf32>
    %cst_69 = arith.constant dense<0.000000e+00> : vector<32x32xf32>
    %115 = tpu.matmul %103, %102, %cst_69 {dimension_numbers = #tpu.dot_dimension_numbers<[1], [0], [0], [1], [0, 0, 1, 1], [], []>} : vector<32x32xf32>, vector<32x32xf32>, vector<32x32xf32> -> vector<32x32xf32>
    %116 = arith.addf %114, %115 : vector<32x32xf32>
    %117 = arith.negf %107 : vector<32x32xf32>
    %118 = math.exp %117 : vector<32x32xf32>
    %cst_70 = arith.constant 1.000000e+00 : f32
    %119 = vector.broadcast %cst_70 : f32 to vector<32x32xf32>
    %120 = arith.addf %119, %118 : vector<32x32xf32>
    %121 = arith.divf %119, %120 : vector<32x32xf32>
    %122 = arith.negf %110 : vector<32x32xf32>
    %123 = math.exp %122 : vector<32x32xf32>
    %cst_71 = arith.constant 1.000000e+00 : f32
    %124 = vector.broadcast %cst_71 : f32 to vector<32x32xf32>
    %125 = arith.addf %124, %123 : vector<32x32xf32>
    %126 = arith.divf %124, %125 : vector<32x32xf32>
    %127 = math.tanh %113 : vector<32x32xf32>
    %128 = arith.negf %116 : vector<32x32xf32>
    %129 = math.exp %128 : vector<32x32xf32>
    %cst_72 = arith.constant 1.000000e+00 : f32
    %130 = vector.broadcast %cst_72 : f32 to vector<32x32xf32>
    %131 = arith.addf %130, %129 : vector<32x32xf32>
    %132 = arith.divf %130, %131 : vector<32x32xf32>
    %133 = arith.mulf %126, %104 : vector<32x32xf32>
    %134 = arith.mulf %121, %127 : vector<32x32xf32>
    %135 = arith.addf %133, %134 : vector<32x32xf32>
    %136 = math.tanh %135 : vector<32x32xf32>
    %137 = arith.mulf %132, %136 : vector<32x32xf32>
    %138 = vector.extract_strided_slice %73 {offsets = [32, 0], sizes = [32, 32], strides = [1, 1]} : vector<128x32xf32> to vector<32x32xf32>
    %cst_73 = arith.constant dense<0.000000e+00> : vector<32x32xf32>
    %139 = tpu.matmul %137, %96, %cst_73 {dimension_numbers = #tpu.dot_dimension_numbers<[1], [0], [0], [1], [0, 0, 1, 1], [], []>} : vector<32x32xf32>, vector<32x32xf32>, vector<32x32xf32> -> vector<32x32xf32>
    %140 = arith.addf %138, %139 : vector<32x32xf32>
    %141 = vector.extract_strided_slice %80 {offsets = [32, 0], sizes = [32, 32], strides = [1, 1]} : vector<128x32xf32> to vector<32x32xf32>
    %cst_74 = arith.constant dense<0.000000e+00> : vector<32x32xf32>
    %142 = tpu.matmul %137, %98, %cst_74 {dimension_numbers = #tpu.dot_dimension_numbers<[1], [0], [0], [1], [0, 0, 1, 1], [], []>} : vector<32x32xf32>, vector<32x32xf32>, vector<32x32xf32> -> vector<32x32xf32>
    %143 = arith.addf %141, %142 : vector<32x32xf32>
    %144 = vector.extract_strided_slice %87 {offsets = [32, 0], sizes = [32, 32], strides = [1, 1]} : vector<128x32xf32> to vector<32x32xf32>
    %cst_75 = arith.constant dense<0.000000e+00> : vector<32x32xf32>
    %145 = tpu.matmul %137, %100, %cst_75 {dimension_numbers = #tpu.dot_dimension_numbers<[1], [0], [0], [1], [0, 0, 1, 1], [], []>} : vector<32x32xf32>, vector<32x32xf32>, vector<32x32xf32> -> vector<32x32xf32>
    %146 = arith.addf %144, %145 : vector<32x32xf32>
    %147 = vector.extract_strided_slice %94 {offsets = [32, 0], sizes = [32, 32], strides = [1, 1]} : vector<128x32xf32> to vector<32x32xf32>
    %cst_76 = arith.constant dense<0.000000e+00> : vector<32x32xf32>
    %148 = tpu.matmul %137, %102, %cst_76 {dimension_numbers = #tpu.dot_dimension_numbers<[1], [0], [0], [1], [0, 0, 1, 1], [], []>} : vector<32x32xf32>, vector<32x32xf32>, vector<32x32xf32> -> vector<32x32xf32>
    %149 = arith.addf %147, %148 : vector<32x32xf32>
    %150 = arith.negf %140 : vector<32x32xf32>
    %151 = math.exp %150 : vector<32x32xf32>
    %cst_77 = arith.constant 1.000000e+00 : f32
    %152 = vector.broadcast %cst_77 : f32 to vector<32x32xf32>
    %153 = arith.addf %152, %151 : vector<32x32xf32>
    %154 = arith.divf %152, %153 : vector<32x32xf32>
    %155 = arith.negf %143 : vector<32x32xf32>
    %156 = math.exp %155 : vector<32x32xf32>
    %cst_78 = arith.constant 1.000000e+00 : f32
    %157 = vector.broadcast %cst_78 : f32 to vector<32x32xf32>
    %158 = arith.addf %157, %156 : vector<32x32xf32>
    %159 = arith.divf %157, %158 : vector<32x32xf32>
    %160 = math.tanh %146 : vector<32x32xf32>
    %161 = arith.negf %149 : vector<32x32xf32>
    %162 = math.exp %161 : vector<32x32xf32>
    %cst_79 = arith.constant 1.000000e+00 : f32
    %163 = vector.broadcast %cst_79 : f32 to vector<32x32xf32>
    %164 = arith.addf %163, %162 : vector<32x32xf32>
    %165 = arith.divf %163, %164 : vector<32x32xf32>
    %166 = arith.mulf %159, %135 : vector<32x32xf32>
    %167 = arith.mulf %154, %160 : vector<32x32xf32>
    %168 = arith.addf %166, %167 : vector<32x32xf32>
    %169 = math.tanh %168 : vector<32x32xf32>
    %170 = arith.mulf %165, %169 : vector<32x32xf32>
    %171 = vector.extract_strided_slice %73 {offsets = [64, 0], sizes = [32, 32], strides = [1, 1]} : vector<128x32xf32> to vector<32x32xf32>
    %cst_80 = arith.constant dense<0.000000e+00> : vector<32x32xf32>
    %172 = tpu.matmul %170, %96, %cst_80 {dimension_numbers = #tpu.dot_dimension_numbers<[1], [0], [0], [1], [0, 0, 1, 1], [], []>} : vector<32x32xf32>, vector<32x32xf32>, vector<32x32xf32> -> vector<32x32xf32>
    %173 = arith.addf %171, %172 : vector<32x32xf32>
    %174 = vector.extract_strided_slice %80 {offsets = [64, 0], sizes = [32, 32], strides = [1, 1]} : vector<128x32xf32> to vector<32x32xf32>
    %cst_81 = arith.constant dense<0.000000e+00> : vector<32x32xf32>
    %175 = tpu.matmul %170, %98, %cst_81 {dimension_numbers = #tpu.dot_dimension_numbers<[1], [0], [0], [1], [0, 0, 1, 1], [], []>} : vector<32x32xf32>, vector<32x32xf32>, vector<32x32xf32> -> vector<32x32xf32>
    %176 = arith.addf %174, %175 : vector<32x32xf32>
    %177 = vector.extract_strided_slice %87 {offsets = [64, 0], sizes = [32, 32], strides = [1, 1]} : vector<128x32xf32> to vector<32x32xf32>
    %cst_82 = arith.constant dense<0.000000e+00> : vector<32x32xf32>
    %178 = tpu.matmul %170, %100, %cst_82 {dimension_numbers = #tpu.dot_dimension_numbers<[1], [0], [0], [1], [0, 0, 1, 1], [], []>} : vector<32x32xf32>, vector<32x32xf32>, vector<32x32xf32> -> vector<32x32xf32>
    %179 = arith.addf %177, %178 : vector<32x32xf32>
    %180 = vector.extract_strided_slice %94 {offsets = [64, 0], sizes = [32, 32], strides = [1, 1]} : vector<128x32xf32> to vector<32x32xf32>
    %cst_83 = arith.constant dense<0.000000e+00> : vector<32x32xf32>
    %181 = tpu.matmul %170, %102, %cst_83 {dimension_numbers = #tpu.dot_dimension_numbers<[1], [0], [0], [1], [0, 0, 1, 1], [], []>} : vector<32x32xf32>, vector<32x32xf32>, vector<32x32xf32> -> vector<32x32xf32>
    %182 = arith.addf %180, %181 : vector<32x32xf32>
    %183 = arith.negf %173 : vector<32x32xf32>
    %184 = math.exp %183 : vector<32x32xf32>
    %cst_84 = arith.constant 1.000000e+00 : f32
    %185 = vector.broadcast %cst_84 : f32 to vector<32x32xf32>
    %186 = arith.addf %185, %184 : vector<32x32xf32>
    %187 = arith.divf %185, %186 : vector<32x32xf32>
    %188 = arith.negf %176 : vector<32x32xf32>
    %189 = math.exp %188 : vector<32x32xf32>
    %cst_85 = arith.constant 1.000000e+00 : f32
    %190 = vector.broadcast %cst_85 : f32 to vector<32x32xf32>
    %191 = arith.addf %190, %189 : vector<32x32xf32>
    %192 = arith.divf %190, %191 : vector<32x32xf32>
    %193 = math.tanh %179 : vector<32x32xf32>
    %194 = arith.negf %182 : vector<32x32xf32>
    %195 = math.exp %194 : vector<32x32xf32>
    %cst_86 = arith.constant 1.000000e+00 : f32
    %196 = vector.broadcast %cst_86 : f32 to vector<32x32xf32>
    %197 = arith.addf %196, %195 : vector<32x32xf32>
    %198 = arith.divf %196, %197 : vector<32x32xf32>
    %199 = arith.mulf %192, %168 : vector<32x32xf32>
    %200 = arith.mulf %187, %193 : vector<32x32xf32>
    %201 = arith.addf %199, %200 : vector<32x32xf32>
    %202 = math.tanh %201 : vector<32x32xf32>
    %203 = arith.mulf %198, %202 : vector<32x32xf32>
    %204 = vector.extract_strided_slice %73 {offsets = [96, 0], sizes = [32, 32], strides = [1, 1]} : vector<128x32xf32> to vector<32x32xf32>
    %cst_87 = arith.constant dense<0.000000e+00> : vector<32x32xf32>
    %205 = tpu.matmul %203, %96, %cst_87 {dimension_numbers = #tpu.dot_dimension_numbers<[1], [0], [0], [1], [0, 0, 1, 1], [], []>} : vector<32x32xf32>, vector<32x32xf32>, vector<32x32xf32> -> vector<32x32xf32>
    %206 = arith.addf %204, %205 : vector<32x32xf32>
    %207 = vector.extract_strided_slice %80 {offsets = [96, 0], sizes = [32, 32], strides = [1, 1]} : vector<128x32xf32> to vector<32x32xf32>
    %cst_88 = arith.constant dense<0.000000e+00> : vector<32x32xf32>
    %208 = tpu.matmul %203, %98, %cst_88 {dimension_numbers = #tpu.dot_dimension_numbers<[1], [0], [0], [1], [0, 0, 1, 1], [], []>} : vector<32x32xf32>, vector<32x32xf32>, vector<32x32xf32> -> vector<32x32xf32>
    %209 = arith.addf %207, %208 : vector<32x32xf32>
    %210 = vector.extract_strided_slice %87 {offsets = [96, 0], sizes = [32, 32], strides = [1, 1]} : vector<128x32xf32> to vector<32x32xf32>
    %cst_89 = arith.constant dense<0.000000e+00> : vector<32x32xf32>
    %211 = tpu.matmul %203, %100, %cst_89 {dimension_numbers = #tpu.dot_dimension_numbers<[1], [0], [0], [1], [0, 0, 1, 1], [], []>} : vector<32x32xf32>, vector<32x32xf32>, vector<32x32xf32> -> vector<32x32xf32>
    %212 = arith.addf %210, %211 : vector<32x32xf32>
    %213 = vector.extract_strided_slice %94 {offsets = [96, 0], sizes = [32, 32], strides = [1, 1]} : vector<128x32xf32> to vector<32x32xf32>
    %cst_90 = arith.constant dense<0.000000e+00> : vector<32x32xf32>
    %214 = tpu.matmul %203, %102, %cst_90 {dimension_numbers = #tpu.dot_dimension_numbers<[1], [0], [0], [1], [0, 0, 1, 1], [], []>} : vector<32x32xf32>, vector<32x32xf32>, vector<32x32xf32> -> vector<32x32xf32>
    %215 = arith.addf %213, %214 : vector<32x32xf32>
    %216 = arith.negf %206 : vector<32x32xf32>
    %217 = math.exp %216 : vector<32x32xf32>
    %cst_91 = arith.constant 1.000000e+00 : f32
    %218 = vector.broadcast %cst_91 : f32 to vector<32x32xf32>
    %219 = arith.addf %218, %217 : vector<32x32xf32>
    %220 = arith.divf %218, %219 : vector<32x32xf32>
    %221 = arith.negf %209 : vector<32x32xf32>
    %222 = math.exp %221 : vector<32x32xf32>
    %cst_92 = arith.constant 1.000000e+00 : f32
    %223 = vector.broadcast %cst_92 : f32 to vector<32x32xf32>
    %224 = arith.addf %223, %222 : vector<32x32xf32>
    %225 = arith.divf %223, %224 : vector<32x32xf32>
    %226 = math.tanh %212 : vector<32x32xf32>
    %227 = arith.negf %215 : vector<32x32xf32>
    %228 = math.exp %227 : vector<32x32xf32>
    %cst_93 = arith.constant 1.000000e+00 : f32
    %229 = vector.broadcast %cst_93 : f32 to vector<32x32xf32>
    %230 = arith.addf %229, %228 : vector<32x32xf32>
    %231 = arith.divf %229, %230 : vector<32x32xf32>
    %232 = arith.mulf %225, %201 : vector<32x32xf32>
    %233 = arith.mulf %220, %226 : vector<32x32xf32>
    %234 = arith.addf %232, %233 : vector<32x32xf32>
    %235 = math.tanh %234 : vector<32x32xf32>
    %236 = arith.mulf %231, %235 : vector<32x32xf32>
    %237 = vector.shape_cast %137 : vector<32x32xf32> to vector<1x32x32xf32>
    %238 = vector.shape_cast %170 : vector<32x32xf32> to vector<1x32x32xf32>
    %239 = vector.shape_cast %203 : vector<32x32xf32> to vector<1x32x32xf32>
    %240 = vector.shape_cast %236 : vector<32x32xf32> to vector<1x32x32xf32>
    %241 = tpu.concatenate %237, %238, %239, %240 in 0 : vector<1x32x32xf32>, vector<1x32x32xf32>, vector<1x32x32xf32>, vector<1x32x32xf32> -> vector<4x32x32xf32>
    %242 = vector.shape_cast %241 : vector<4x32x32xf32> to vector<128x32xf32>
    %c0_94 = arith.constant 0 : index
    %c0_95 = arith.constant 0 : index
    %c0_96 = arith.constant 0 : index
    %243 = vector.load %arg11[%c0_94, %c0_95, %c0_96] : memref<4x32x32xf32, #tpu.memory_space<vmem>>, vector<1x32x32xf32>
    %244 = vector.shape_cast %243 : vector<1x32x32xf32> to vector<32x32xf32>
    %cst_97 = arith.constant dense<0.000000e+00> : vector<128x32xf32>
    %245 = tpu.matmul %242, %244, %cst_97 {dimension_numbers = #tpu.dot_dimension_numbers<[1], [0], [0], [1], [0, 0, 1, 1], [], []>} : vector<128x32xf32>, vector<32x32xf32>, vector<128x32xf32> -> vector<128x32xf32>
    %c0_98 = arith.constant 0 : index
    %c0_99 = arith.constant 0 : index
    %c0_100 = arith.constant 0 : index
    %246 = vector.load %arg13[%c0_98, %c0_99, %c0_100] : memref<4x1x32xf32, #tpu.memory_space<vmem>>, vector<1x1x32xf32>
    %247 = vector.shape_cast %246 : vector<1x1x32xf32> to vector<1x32xf32>
    %248 = vector.broadcast %247 : vector<1x32xf32> to vector<128x32xf32>
    %249 = arith.addf %245, %248 : vector<128x32xf32>
    %c1_101 = arith.constant 1 : index
    %c0_102 = arith.constant 0 : index
    %c0_103 = arith.constant 0 : index
    %250 = vector.load %arg11[%c1_101, %c0_102, %c0_103] : memref<4x32x32xf32, #tpu.memory_space<vmem>>, vector<1x32x32xf32>
    %251 = vector.shape_cast %250 : vector<1x32x32xf32> to vector<32x32xf32>
    %cst_104 = arith.constant dense<0.000000e+00> : vector<128x32xf32>
    %252 = tpu.matmul %242, %251, %cst_104 {dimension_numbers = #tpu.dot_dimension_numbers<[1], [0], [0], [1], [0, 0, 1, 1], [], []>} : vector<128x32xf32>, vector<32x32xf32>, vector<128x32xf32> -> vector<128x32xf32>
    %c1_105 = arith.constant 1 : index
    %c0_106 = arith.constant 0 : index
    %c0_107 = arith.constant 0 : index
    %253 = vector.load %arg13[%c1_105, %c0_106, %c0_107] : memref<4x1x32xf32, #tpu.memory_space<vmem>>, vector<1x1x32xf32>
    %254 = vector.shape_cast %253 : vector<1x1x32xf32> to vector<1x32xf32>
    %255 = vector.broadcast %254 : vector<1x32xf32> to vector<128x32xf32>
    %256 = arith.addf %252, %255 : vector<128x32xf32>
    %c2_108 = arith.constant 2 : index
    %c0_109 = arith.constant 0 : index
    %c0_110 = arith.constant 0 : index
    %257 = vector.load %arg11[%c2_108, %c0_109, %c0_110] : memref<4x32x32xf32, #tpu.memory_space<vmem>>, vector<1x32x32xf32>
    %258 = vector.shape_cast %257 : vector<1x32x32xf32> to vector<32x32xf32>
    %cst_111 = arith.constant dense<0.000000e+00> : vector<128x32xf32>
    %259 = tpu.matmul %242, %258, %cst_111 {dimension_numbers = #tpu.dot_dimension_numbers<[1], [0], [0], [1], [0, 0, 1, 1], [], []>} : vector<128x32xf32>, vector<32x32xf32>, vector<128x32xf32> -> vector<128x32xf32>
    %c2_112 = arith.constant 2 : index
    %c0_113 = arith.constant 0 : index
    %c0_114 = arith.constant 0 : index
    %260 = vector.load %arg13[%c2_112, %c0_113, %c0_114] : memref<4x1x32xf32, #tpu.memory_space<vmem>>, vector<1x1x32xf32>
    %261 = vector.shape_cast %260 : vector<1x1x32xf32> to vector<1x32xf32>
    %262 = vector.broadcast %261 : vector<1x32xf32> to vector<128x32xf32>
    %263 = arith.addf %259, %262 : vector<128x32xf32>
    %c3_115 = arith.constant 3 : index
    %c0_116 = arith.constant 0 : index
    %c0_117 = arith.constant 0 : index
    %264 = vector.load %arg11[%c3_115, %c0_116, %c0_117] : memref<4x32x32xf32, #tpu.memory_space<vmem>>, vector<1x32x32xf32>
    %265 = vector.shape_cast %264 : vector<1x32x32xf32> to vector<32x32xf32>
    %cst_118 = arith.constant dense<0.000000e+00> : vector<128x32xf32>
    %266 = tpu.matmul %242, %265, %cst_118 {dimension_numbers = #tpu.dot_dimension_numbers<[1], [0], [0], [1], [0, 0, 1, 1], [], []>} : vector<128x32xf32>, vector<32x32xf32>, vector<128x32xf32> -> vector<128x32xf32>
    %c3_119 = arith.constant 3 : index
    %c0_120 = arith.constant 0 : index
    %c0_121 = arith.constant 0 : index
    %267 = vector.load %arg13[%c3_119, %c0_120, %c0_121] : memref<4x1x32xf32, #tpu.memory_space<vmem>>, vector<1x1x32xf32>
    %268 = vector.shape_cast %267 : vector<1x1x32xf32> to vector<1x32xf32>
    %269 = vector.broadcast %268 : vector<1x32xf32> to vector<128x32xf32>
    %270 = arith.addf %266, %269 : vector<128x32xf32>
    %c0_122 = arith.constant 0 : index
    %c0_123 = arith.constant 0 : index
    %c0_124 = arith.constant 0 : index
    %271 = vector.load %arg12[%c0_122, %c0_123, %c0_124] : memref<4x32x32xf32, #tpu.memory_space<vmem>>, vector<1x32x32xf32>
    %272 = vector.shape_cast %271 : vector<1x32x32xf32> to vector<32x32xf32>
    %c1_125 = arith.constant 1 : index
    %c0_126 = arith.constant 0 : index
    %c0_127 = arith.constant 0 : index
    %273 = vector.load %arg12[%c1_125, %c0_126, %c0_127] : memref<4x32x32xf32, #tpu.memory_space<vmem>>, vector<1x32x32xf32>
    %274 = vector.shape_cast %273 : vector<1x32x32xf32> to vector<32x32xf32>
    %c2_128 = arith.constant 2 : index
    %c0_129 = arith.constant 0 : index
    %c0_130 = arith.constant 0 : index
    %275 = vector.load %arg12[%c2_128, %c0_129, %c0_130] : memref<4x32x32xf32, #tpu.memory_space<vmem>>, vector<1x32x32xf32>
    %276 = vector.shape_cast %275 : vector<1x32x32xf32> to vector<32x32xf32>
    %c3_131 = arith.constant 3 : index
    %c0_132 = arith.constant 0 : index
    %c0_133 = arith.constant 0 : index
    %277 = vector.load %arg12[%c3_131, %c0_132, %c0_133] : memref<4x32x32xf32, #tpu.memory_space<vmem>>, vector<1x32x32xf32>
    %278 = vector.shape_cast %277 : vector<1x32x32xf32> to vector<32x32xf32>
    %cst_134 = arith.constant 0.000000e+00 : f32
    %279 = vector.broadcast %cst_134 : f32 to vector<32x32xf32>
    %cst_135 = arith.constant 0.000000e+00 : f32
    %280 = vector.broadcast %cst_135 : f32 to vector<32x32xf32>
    %281 = vector.extract_strided_slice %249 {offsets = [0, 0], sizes = [32, 32], strides = [1, 1]} : vector<128x32xf32> to vector<32x32xf32>
    %cst_136 = arith.constant dense<0.000000e+00> : vector<32x32xf32>
    %282 = tpu.matmul %279, %272, %cst_136 {dimension_numbers = #tpu.dot_dimension_numbers<[1], [0], [0], [1], [0, 0, 1, 1], [], []>} : vector<32x32xf32>, vector<32x32xf32>, vector<32x32xf32> -> vector<32x32xf32>
    %283 = arith.addf %281, %282 : vector<32x32xf32>
    %284 = vector.extract_strided_slice %256 {offsets = [0, 0], sizes = [32, 32], strides = [1, 1]} : vector<128x32xf32> to vector<32x32xf32>
    %cst_137 = arith.constant dense<0.000000e+00> : vector<32x32xf32>
    %285 = tpu.matmul %279, %274, %cst_137 {dimension_numbers = #tpu.dot_dimension_numbers<[1], [0], [0], [1], [0, 0, 1, 1], [], []>} : vector<32x32xf32>, vector<32x32xf32>, vector<32x32xf32> -> vector<32x32xf32>
    %286 = arith.addf %284, %285 : vector<32x32xf32>
    %287 = vector.extract_strided_slice %263 {offsets = [0, 0], sizes = [32, 32], strides = [1, 1]} : vector<128x32xf32> to vector<32x32xf32>
    %cst_138 = arith.constant dense<0.000000e+00> : vector<32x32xf32>
    %288 = tpu.matmul %279, %276, %cst_138 {dimension_numbers = #tpu.dot_dimension_numbers<[1], [0], [0], [1], [0, 0, 1, 1], [], []>} : vector<32x32xf32>, vector<32x32xf32>, vector<32x32xf32> -> vector<32x32xf32>
    %289 = arith.addf %287, %288 : vector<32x32xf32>
    %290 = vector.extract_strided_slice %270 {offsets = [0, 0], sizes = [32, 32], strides = [1, 1]} : vector<128x32xf32> to vector<32x32xf32>
    %cst_139 = arith.constant dense<0.000000e+00> : vector<32x32xf32>
    %291 = tpu.matmul %279, %278, %cst_139 {dimension_numbers = #tpu.dot_dimension_numbers<[1], [0], [0], [1], [0, 0, 1, 1], [], []>} : vector<32x32xf32>, vector<32x32xf32>, vector<32x32xf32> -> vector<32x32xf32>
    %292 = arith.addf %290, %291 : vector<32x32xf32>
    %293 = arith.negf %283 : vector<32x32xf32>
    %294 = math.exp %293 : vector<32x32xf32>
    %cst_140 = arith.constant 1.000000e+00 : f32
    %295 = vector.broadcast %cst_140 : f32 to vector<32x32xf32>
    %296 = arith.addf %295, %294 : vector<32x32xf32>
    %297 = arith.divf %295, %296 : vector<32x32xf32>
    %298 = arith.negf %286 : vector<32x32xf32>
    %299 = math.exp %298 : vector<32x32xf32>
    %cst_141 = arith.constant 1.000000e+00 : f32
    %300 = vector.broadcast %cst_141 : f32 to vector<32x32xf32>
    %301 = arith.addf %300, %299 : vector<32x32xf32>
    %302 = arith.divf %300, %301 : vector<32x32xf32>
    %303 = math.tanh %289 : vector<32x32xf32>
    %304 = arith.negf %292 : vector<32x32xf32>
    %305 = math.exp %304 : vector<32x32xf32>
    %cst_142 = arith.constant 1.000000e+00 : f32
    %306 = vector.broadcast %cst_142 : f32 to vector<32x32xf32>
    %307 = arith.addf %306, %305 : vector<32x32xf32>
    %308 = arith.divf %306, %307 : vector<32x32xf32>
    %309 = arith.mulf %302, %280 : vector<32x32xf32>
    %310 = arith.mulf %297, %303 : vector<32x32xf32>
    %311 = arith.addf %309, %310 : vector<32x32xf32>
    %312 = math.tanh %311 : vector<32x32xf32>
    %313 = arith.mulf %308, %312 : vector<32x32xf32>
    %314 = vector.extract_strided_slice %249 {offsets = [32, 0], sizes = [32, 32], strides = [1, 1]} : vector<128x32xf32> to vector<32x32xf32>
    %cst_143 = arith.constant dense<0.000000e+00> : vector<32x32xf32>
    %315 = tpu.matmul %313, %272, %cst_143 {dimension_numbers = #tpu.dot_dimension_numbers<[1], [0], [0], [1], [0, 0, 1, 1], [], []>} : vector<32x32xf32>, vector<32x32xf32>, vector<32x32xf32> -> vector<32x32xf32>
    %316 = arith.addf %314, %315 : vector<32x32xf32>
    %317 = vector.extract_strided_slice %256 {offsets = [32, 0], sizes = [32, 32], strides = [1, 1]} : vector<128x32xf32> to vector<32x32xf32>
    %cst_144 = arith.constant dense<0.000000e+00> : vector<32x32xf32>
    %318 = tpu.matmul %313, %274, %cst_144 {dimension_numbers = #tpu.dot_dimension_numbers<[1], [0], [0], [1], [0, 0, 1, 1], [], []>} : vector<32x32xf32>, vector<32x32xf32>, vector<32x32xf32> -> vector<32x32xf32>
    %319 = arith.addf %317, %318 : vector<32x32xf32>
    %320 = vector.extract_strided_slice %263 {offsets = [32, 0], sizes = [32, 32], strides = [1, 1]} : vector<128x32xf32> to vector<32x32xf32>
    %cst_145 = arith.constant dense<0.000000e+00> : vector<32x32xf32>
    %321 = tpu.matmul %313, %276, %cst_145 {dimension_numbers = #tpu.dot_dimension_numbers<[1], [0], [0], [1], [0, 0, 1, 1], [], []>} : vector<32x32xf32>, vector<32x32xf32>, vector<32x32xf32> -> vector<32x32xf32>
    %322 = arith.addf %320, %321 : vector<32x32xf32>
    %323 = vector.extract_strided_slice %270 {offsets = [32, 0], sizes = [32, 32], strides = [1, 1]} : vector<128x32xf32> to vector<32x32xf32>
    %cst_146 = arith.constant dense<0.000000e+00> : vector<32x32xf32>
    %324 = tpu.matmul %313, %278, %cst_146 {dimension_numbers = #tpu.dot_dimension_numbers<[1], [0], [0], [1], [0, 0, 1, 1], [], []>} : vector<32x32xf32>, vector<32x32xf32>, vector<32x32xf32> -> vector<32x32xf32>
    %325 = arith.addf %323, %324 : vector<32x32xf32>
    %326 = arith.negf %316 : vector<32x32xf32>
    %327 = math.exp %326 : vector<32x32xf32>
    %cst_147 = arith.constant 1.000000e+00 : f32
    %328 = vector.broadcast %cst_147 : f32 to vector<32x32xf32>
    %329 = arith.addf %328, %327 : vector<32x32xf32>
    %330 = arith.divf %328, %329 : vector<32x32xf32>
    %331 = arith.negf %319 : vector<32x32xf32>
    %332 = math.exp %331 : vector<32x32xf32>
    %cst_148 = arith.constant 1.000000e+00 : f32
    %333 = vector.broadcast %cst_148 : f32 to vector<32x32xf32>
    %334 = arith.addf %333, %332 : vector<32x32xf32>
    %335 = arith.divf %333, %334 : vector<32x32xf32>
    %336 = math.tanh %322 : vector<32x32xf32>
    %337 = arith.negf %325 : vector<32x32xf32>
    %338 = math.exp %337 : vector<32x32xf32>
    %cst_149 = arith.constant 1.000000e+00 : f32
    %339 = vector.broadcast %cst_149 : f32 to vector<32x32xf32>
    %340 = arith.addf %339, %338 : vector<32x32xf32>
    %341 = arith.divf %339, %340 : vector<32x32xf32>
    %342 = arith.mulf %335, %311 : vector<32x32xf32>
    %343 = arith.mulf %330, %336 : vector<32x32xf32>
    %344 = arith.addf %342, %343 : vector<32x32xf32>
    %345 = math.tanh %344 : vector<32x32xf32>
    %346 = arith.mulf %341, %345 : vector<32x32xf32>
    %347 = vector.extract_strided_slice %249 {offsets = [64, 0], sizes = [32, 32], strides = [1, 1]} : vector<128x32xf32> to vector<32x32xf32>
    %cst_150 = arith.constant dense<0.000000e+00> : vector<32x32xf32>
    %348 = tpu.matmul %346, %272, %cst_150 {dimension_numbers = #tpu.dot_dimension_numbers<[1], [0], [0], [1], [0, 0, 1, 1], [], []>} : vector<32x32xf32>, vector<32x32xf32>, vector<32x32xf32> -> vector<32x32xf32>
    %349 = arith.addf %347, %348 : vector<32x32xf32>
    %350 = vector.extract_strided_slice %256 {offsets = [64, 0], sizes = [32, 32], strides = [1, 1]} : vector<128x32xf32> to vector<32x32xf32>
    %cst_151 = arith.constant dense<0.000000e+00> : vector<32x32xf32>
    %351 = tpu.matmul %346, %274, %cst_151 {dimension_numbers = #tpu.dot_dimension_numbers<[1], [0], [0], [1], [0, 0, 1, 1], [], []>} : vector<32x32xf32>, vector<32x32xf32>, vector<32x32xf32> -> vector<32x32xf32>
    %352 = arith.addf %350, %351 : vector<32x32xf32>
    %353 = vector.extract_strided_slice %263 {offsets = [64, 0], sizes = [32, 32], strides = [1, 1]} : vector<128x32xf32> to vector<32x32xf32>
    %cst_152 = arith.constant dense<0.000000e+00> : vector<32x32xf32>
    %354 = tpu.matmul %346, %276, %cst_152 {dimension_numbers = #tpu.dot_dimension_numbers<[1], [0], [0], [1], [0, 0, 1, 1], [], []>} : vector<32x32xf32>, vector<32x32xf32>, vector<32x32xf32> -> vector<32x32xf32>
    %355 = arith.addf %353, %354 : vector<32x32xf32>
    %356 = vector.extract_strided_slice %270 {offsets = [64, 0], sizes = [32, 32], strides = [1, 1]} : vector<128x32xf32> to vector<32x32xf32>
    %cst_153 = arith.constant dense<0.000000e+00> : vector<32x32xf32>
    %357 = tpu.matmul %346, %278, %cst_153 {dimension_numbers = #tpu.dot_dimension_numbers<[1], [0], [0], [1], [0, 0, 1, 1], [], []>} : vector<32x32xf32>, vector<32x32xf32>, vector<32x32xf32> -> vector<32x32xf32>
    %358 = arith.addf %356, %357 : vector<32x32xf32>
    %359 = arith.negf %349 : vector<32x32xf32>
    %360 = math.exp %359 : vector<32x32xf32>
    %cst_154 = arith.constant 1.000000e+00 : f32
    %361 = vector.broadcast %cst_154 : f32 to vector<32x32xf32>
    %362 = arith.addf %361, %360 : vector<32x32xf32>
    %363 = arith.divf %361, %362 : vector<32x32xf32>
    %364 = arith.negf %352 : vector<32x32xf32>
    %365 = math.exp %364 : vector<32x32xf32>
    %cst_155 = arith.constant 1.000000e+00 : f32
    %366 = vector.broadcast %cst_155 : f32 to vector<32x32xf32>
    %367 = arith.addf %366, %365 : vector<32x32xf32>
    %368 = arith.divf %366, %367 : vector<32x32xf32>
    %369 = math.tanh %355 : vector<32x32xf32>
    %370 = arith.negf %358 : vector<32x32xf32>
    %371 = math.exp %370 : vector<32x32xf32>
    %cst_156 = arith.constant 1.000000e+00 : f32
    %372 = vector.broadcast %cst_156 : f32 to vector<32x32xf32>
    %373 = arith.addf %372, %371 : vector<32x32xf32>
    %374 = arith.divf %372, %373 : vector<32x32xf32>
    %375 = arith.mulf %368, %344 : vector<32x32xf32>
    %376 = arith.mulf %363, %369 : vector<32x32xf32>
    %377 = arith.addf %375, %376 : vector<32x32xf32>
    %378 = math.tanh %377 : vector<32x32xf32>
    %379 = arith.mulf %374, %378 : vector<32x32xf32>
    %380 = vector.extract_strided_slice %249 {offsets = [96, 0], sizes = [32, 32], strides = [1, 1]} : vector<128x32xf32> to vector<32x32xf32>
    %cst_157 = arith.constant dense<0.000000e+00> : vector<32x32xf32>
    %381 = tpu.matmul %379, %272, %cst_157 {dimension_numbers = #tpu.dot_dimension_numbers<[1], [0], [0], [1], [0, 0, 1, 1], [], []>} : vector<32x32xf32>, vector<32x32xf32>, vector<32x32xf32> -> vector<32x32xf32>
    %382 = arith.addf %380, %381 : vector<32x32xf32>
    %383 = vector.extract_strided_slice %256 {offsets = [96, 0], sizes = [32, 32], strides = [1, 1]} : vector<128x32xf32> to vector<32x32xf32>
    %cst_158 = arith.constant dense<0.000000e+00> : vector<32x32xf32>
    %384 = tpu.matmul %379, %274, %cst_158 {dimension_numbers = #tpu.dot_dimension_numbers<[1], [0], [0], [1], [0, 0, 1, 1], [], []>} : vector<32x32xf32>, vector<32x32xf32>, vector<32x32xf32> -> vector<32x32xf32>
    %385 = arith.addf %383, %384 : vector<32x32xf32>
    %386 = vector.extract_strided_slice %263 {offsets = [96, 0], sizes = [32, 32], strides = [1, 1]} : vector<128x32xf32> to vector<32x32xf32>
    %cst_159 = arith.constant dense<0.000000e+00> : vector<32x32xf32>
    %387 = tpu.matmul %379, %276, %cst_159 {dimension_numbers = #tpu.dot_dimension_numbers<[1], [0], [0], [1], [0, 0, 1, 1], [], []>} : vector<32x32xf32>, vector<32x32xf32>, vector<32x32xf32> -> vector<32x32xf32>
    %388 = arith.addf %386, %387 : vector<32x32xf32>
    %389 = vector.extract_strided_slice %270 {offsets = [96, 0], sizes = [32, 32], strides = [1, 1]} : vector<128x32xf32> to vector<32x32xf32>
    %cst_160 = arith.constant dense<0.000000e+00> : vector<32x32xf32>
    %390 = tpu.matmul %379, %278, %cst_160 {dimension_numbers = #tpu.dot_dimension_numbers<[1], [0], [0], [1], [0, 0, 1, 1], [], []>} : vector<32x32xf32>, vector<32x32xf32>, vector<32x32xf32> -> vector<32x32xf32>
    %391 = arith.addf %389, %390 : vector<32x32xf32>
    %392 = arith.negf %382 : vector<32x32xf32>
    %393 = math.exp %392 : vector<32x32xf32>
    %cst_161 = arith.constant 1.000000e+00 : f32
    %394 = vector.broadcast %cst_161 : f32 to vector<32x32xf32>
    %395 = arith.addf %394, %393 : vector<32x32xf32>
    %396 = arith.divf %394, %395 : vector<32x32xf32>
    %397 = arith.negf %385 : vector<32x32xf32>
    %398 = math.exp %397 : vector<32x32xf32>
    %cst_162 = arith.constant 1.000000e+00 : f32
    %399 = vector.broadcast %cst_162 : f32 to vector<32x32xf32>
    %400 = arith.addf %399, %398 : vector<32x32xf32>
    %401 = arith.divf %399, %400 : vector<32x32xf32>
    %402 = math.tanh %388 : vector<32x32xf32>
    %403 = arith.negf %391 : vector<32x32xf32>
    %404 = math.exp %403 : vector<32x32xf32>
    %cst_163 = arith.constant 1.000000e+00 : f32
    %405 = vector.broadcast %cst_163 : f32 to vector<32x32xf32>
    %406 = arith.addf %405, %404 : vector<32x32xf32>
    %407 = arith.divf %405, %406 : vector<32x32xf32>
    %408 = arith.mulf %401, %377 : vector<32x32xf32>
    %409 = arith.mulf %396, %402 : vector<32x32xf32>
    %410 = arith.addf %408, %409 : vector<32x32xf32>
    %411 = math.tanh %410 : vector<32x32xf32>
    %412 = arith.mulf %407, %411 : vector<32x32xf32>
    %c0_164 = arith.constant 0 : index
    %c0_165 = arith.constant 0 : index
    %413 = vector.load %arg14[%c0_164, %c0_165] : memref<64x8xf32, #tpu.memory_space<vmem>>, vector<64x8xf32>
    %414 = vector.extract_strided_slice %412 {offsets = [0, 0], sizes = [16, 32], strides = [1, 1]} : vector<32x32xf32> to vector<16x32xf32>
    %415 = vector.extract_strided_slice %413 {offsets = [0, 0], sizes = [32, 8], strides = [1, 1]} : vector<64x8xf32> to vector<32x8xf32>
    %cst_166 = arith.constant dense<0.000000e+00> : vector<16x8xf32>
    %416 = tpu.matmul %414, %415, %cst_166 {dimension_numbers = #tpu.dot_dimension_numbers<[1], [0], [0], [1], [0, 0, 1, 1], [], []>} : vector<16x32xf32>, vector<32x8xf32>, vector<16x8xf32> -> vector<16x8xf32>
    %417 = vector.extract_strided_slice %412 {offsets = [16, 0], sizes = [16, 32], strides = [1, 1]} : vector<32x32xf32> to vector<16x32xf32>
    %418 = vector.extract_strided_slice %413 {offsets = [32, 0], sizes = [32, 8], strides = [1, 1]} : vector<64x8xf32> to vector<32x8xf32>
    %cst_167 = arith.constant dense<0.000000e+00> : vector<16x8xf32>
    %419 = tpu.matmul %417, %418, %cst_167 {dimension_numbers = #tpu.dot_dimension_numbers<[1], [0], [0], [1], [0, 0, 1, 1], [], []>} : vector<16x32xf32>, vector<32x8xf32>, vector<16x8xf32> -> vector<16x8xf32>
    %420 = arith.addf %416, %419 : vector<16x8xf32>
    %c0_168 = arith.constant 0 : index
    %c0_169 = arith.constant 0 : index
    %421 = vector.load %arg15[%c0_168, %c0_169] : memref<1x8xf32, #tpu.memory_space<vmem>>, vector<1x8xf32>
    %422 = vector.broadcast %421 : vector<1x8xf32> to vector<16x8xf32>
    %423 = arith.addf %420, %422 : vector<16x8xf32>
    %c0_170 = arith.constant 0 : index
    %c0_171 = arith.constant 0 : index
    %424 = vector.load %arg16[%c0_170, %c0_171] : memref<16x8xf32, #tpu.memory_space<vmem>>, vector<16x8xf32>
    tpu.vector_store %arg16[%c0_170, %c0_171], %423 {strides = array<i32>} : memref<16x8xf32, #tpu.memory_space<vmem>>, vector<16x8xf32>,
    return
  }
}

</mosaic_0001>

<llo_original>
// kernel: _lambda_.1
$region0: #{_lambda_.1}
  #allocation0 [shape = 'u32[]', space=smem, size = 0x4, offset = 0x4, fixed_abs, tag = 'smem constant byte address 0x4 - core index']
  #allocation1 [shape = 'u32[72,128]{1,0:T(1,128)}', space=vmem, size = 0x9000, scoped, tag = 'internal scratch']
  %s0 = inlined_call_operand.vmem [shape: f32[4,16,16], index: 0, kind: input, shape index: {}]
  %s1 = inlined_call_operand.vmem [shape: f32[4,16,8], index: 1, kind: input, shape index: {}]
  %s2 = inlined_call_operand.hbm [shape: f32[4,16,16], index: 2, kind: input, shape index: {}]
  %s3 = inlined_call_operand.vmem [shape: f32[4,16,8], index: 3, kind: input, shape index: {}]
  %s4 = inlined_call_operand.vmem [shape: f32[8,16], index: 4, kind: input, shape index: {}]
  %s5 = inlined_call_operand.vmem [shape: f32[1,16], index: 5, kind: input, shape index: {}]
  %s6 = inlined_call_operand.vmem [shape: f32[16,16], index: 6, kind: input, shape index: {}]
  %s7 = inlined_call_operand.vmem [shape: f32[1,16], index: 7, kind: input, shape index: {}]
  %s8 = inlined_call_operand.hbm [shape: f32[4,16,32], index: 8, kind: input, shape index: {}]
  %s9 = inlined_call_operand.vmem [shape: f32[4,32,32], index: 9, kind: input, shape index: {}]
  %s10 = inlined_call_operand.vmem [shape: f32[4,1,32], index: 10, kind: input, shape index: {}]
  %s11 = inlined_call_operand.hbm [shape: f32[4,32,32], index: 11, kind: input, shape index: {}]
  %s12 = inlined_call_operand.hbm [shape: f32[4,32,32], index: 12, kind: input, shape index: {}]
  %s13 = inlined_call_operand.vmem [shape: f32[4,1,32], index: 13, kind: input, shape index: {}]
  %s14 = inlined_call_operand.vmem [shape: f32[64,8], index: 14, kind: input, shape index: {}]
  %s15 = inlined_call_operand.vmem [shape: f32[1,8], index: 15, kind: input, shape index: {}]
  %s16 = inlined_call_operand.vmem [shape: f32[16,8], index: 16, kind: output, shape index: {}]
  %s17 = sld [smem:[#allocation0]]
  $region90: #{_lambda_.1} parent=0
    _
  %s19 = ssub.s32 1, %s17
  %s20 = scalar_select 0, %s19, %s17
  $region1: #{_lambda_.1} parent=0
    #allocation2 [shape = 'u8[32768]{0}', space=vmem, size = 0x8000, scoped, tag = 'input window, operand 2, single buffered']
    #allocation3 [shape = 's32[1]{0}', space=sflag, size = 0x4, scoped, tag = 'scoped memory for _lambda_.1']
    #allocation4 [shape = 'u8[32768]{0}', space=vmem, size = 0x8000, scoped, tag = 'input window, operand 8, single buffered']
    #allocation5 [shape = 's32[1]{0}', space=sflag, size = 0x4, scoped, tag = 'scoped memory for _lambda_.1']
    #allocation6 [shape = 'u8[65536]{0}', space=vmem, size = 0x10000, scoped, tag = 'input window, operand 11, single buffered']
    #allocation7 [shape = 'u8[65536]{0}', space=vmem, size = 0x10000, scoped, tag = 'input window, operand 12, single buffered']
    #allocation8 [shape = 's32[1]{0}', space=sflag, size = 0x4, scoped, tag = 'scoped memory for _lambda_.1']
    %21 = vsyncpa [#allocation3], 0
    %22 = vsyncpa [#allocation5], 0
    %23 = vsyncpa [#allocation8], 0
    // Predicated region
    $region2: #{_lambda_.1} parent=1 // pred_check
      _
    $region3: #{_lambda_.1} parent=1 // pred_check_branch
      %25 = sbr.rel (0) target = $region5
    $region4: #{_lambda_.1} parent=1 // pred_region
      _
    $region5: #{_lambda_.1} parent=1 // pred_fallthru
      _
    // Predicated region
    $region6: #{_lambda_.1} parent=1 // pred_check
      _
    $region7: #{_lambda_.1} parent=1 // pred_check_branch
      %27 = sbr.rel (0) target = $region9
    $region8: #{_lambda_.1} parent=1 // pred_region
      _
    $region9: #{_lambda_.1} parent=1 // pred_fallthru
      _
    // Predicated region
    $region10: #{_lambda_.1} parent=1 // pred_check
      _
    $region11: #{_lambda_.1} parent=1 // pred_check_branch
      %29 = sbr.rel (0) target = $region13
    $region12: #{_lambda_.1} parent=1 // pred_region
      %31 = vsyncadd [#allocation3], 0
      %s32 = sshll.u32 %s2, 4
      %s33 = int_to_ptr.hbm [resolvable:$true] %s32
      %s34 = sshll.u32 [#allocation2], 4
      %s35 = int_to_ptr.vmem [resolvable:$true] %s34
      %40 = dma.hbm_to_vmem [thread:$0]  %s33, 1024, %s35, [#allocation3], 128, 128, 8
    $region13: #{_lambda_.1} parent=1 // pred_fallthru
      _
    // Predicated region
    $region14: #{_lambda_.1} parent=1 // pred_check
      _
    $region15: #{_lambda_.1} parent=1 // pred_check_branch
      %42 = sbr.rel (0) target = $region17
    $region16: #{_lambda_.1} parent=1 // pred_region
      _
    $region17: #{_lambda_.1} parent=1 // pred_fallthru
      _
    // Predicated region
    $region18: #{_lambda_.1} parent=1 // pred_check
      _
    $region19: #{_lambda_.1} parent=1 // pred_check_branch
      %44 = sbr.rel (0) target = $region21
    $region20: #{_lambda_.1} parent=1 // pred_region
      _
    $region21: #{_lambda_.1} parent=1 // pred_fallthru
      _
    // Predicated region
    $region22: #{_lambda_.1} parent=1 // pred_check
      _
    $region23: #{_lambda_.1} parent=1 // pred_check_branch
      %46 = sbr.rel (0) target = $region25
    $region24: #{_lambda_.1} parent=1 // pred_region
      _
    $region25: #{_lambda_.1} parent=1 // pred_fallthru
      _
    // Predicated region
    $region26: #{_lambda_.1} parent=1 // pred_check
      _
    $region27: #{_lambda_.1} parent=1 // pred_check_branch
      %48 = sbr.rel (0) target = $region29
    $region28: #{_lambda_.1} parent=1 // pred_region
      _
    $region29: #{_lambda_.1} parent=1 // pred_fallthru
      _
    // Predicated region
    $region30: #{_lambda_.1} parent=1 // pred_check
      _
    $region31: #{_lambda_.1} parent=1 // pred_check_branch
      %50 = sbr.rel (0) target = $region33
    $region32: #{_lambda_.1} parent=1 // pred_region
      _
    $region33: #{_lambda_.1} parent=1 // pred_fallthru
      _
    // Predicated region
    $region34: #{_lambda_.1} parent=1 // pred_check
      _
    $region35: #{_lambda_.1} parent=1 // pred_check_branch
      %52 = sbr.rel (0) target = $region37
    $region36: #{_lambda_.1} parent=1 // pred_region
      %54 = vsyncadd [#allocation5], 0
      %s55 = sshll.u32 %s8, 4
      %s56 = int_to_ptr.hbm [resolvable:$true] %s55
      %s57 = sshll.u32 [#allocation4], 4
      %s58 = int_to_ptr.vmem [resolvable:$true] %s57
      %63 = dma.hbm_to_vmem [thread:$0]  %s56, 1024, %s58, [#allocation5], 128, 128, 8
    $region37: #{_lambda_.1} parent=1 // pred_fallthru
      _
    // Predicated region
    $region38: #{_lambda_.1} parent=1 // pred_check
      _
    $region39: #{_lambda_.1} parent=1 // pred_check_branch
      %65 = sbr.rel (0) target = $region41
    $region40: #{_lambda_.1} parent=1 // pred_region
      _
    $region41: #{_lambda_.1} parent=1 // pred_fallthru
      _
    // Predicated region
    $region42: #{_lambda_.1} parent=1 // pred_check
      _
    $region43: #{_lambda_.1} parent=1 // pred_check_branch
      %67 = sbr.rel (0) target = $region45
    $region44: #{_lambda_.1} parent=1 // pred_region
      _
    $region45: #{_lambda_.1} parent=1 // pred_fallthru
      _
    // Predicated region
    $region46: #{_lambda_.1} parent=1 // pred_check
      _
    $region47: #{_lambda_.1} parent=1 // pred_check_branch
      %69 = sbr.rel (0) target = $region49
    $region48: #{_lambda_.1} parent=1 // pred_region
      %71 = vsyncadd [#allocation5], 0
      %s72 = sshll.u32 %s11, 4
      %s73 = int_to_ptr.hbm [resolvable:$true] %s72
      %s74 = sshll.u32 [#allocation6], 4
      %s75 = int_to_ptr.vmem [resolvable:$true] %s74
      %80 = dma.hbm_to_vmem [thread:$0]  %s73, 2048, %s75, [#allocation5], 128, 128, 8
    $region49: #{_lambda_.1} parent=1 // pred_fallthru
      _
    // Predicated region
    $region50: #{_lambda_.1} parent=1 // pred_check
      _
    $region51: #{_lambda_.1} parent=1 // pred_check_branch
      %82 = sbr.rel (0) target = $region53
    $region52: #{_lambda_.1} parent=1 // pred_region
      %84 = vsyncadd [#allocation8], 0
      %s85 = sshll.u32 %s12, 4
      %s86 = int_to_ptr.hbm [resolvable:$true] %s85
      %s87 = sshll.u32 [#allocation7], 4
      %s88 = int_to_ptr.vmem [resolvable:$true] %s87
      %93 = dma.hbm_to_vmem [thread:$0]  %s86, 2048, %s88, [#allocation8], 128, 128, 8
    $region53: #{_lambda_.1} parent=1 // pred_fallthru
      _
    // Predicated region
    $region54: #{_lambda_.1} parent=1 // pred_check
      _
    $region55: #{_lambda_.1} parent=1 // pred_check_branch
      %95 = sbr.rel (0) target = $region57
    $region56: #{_lambda_.1} parent=1 // pred_region
      _
    $region57: #{_lambda_.1} parent=1 // pred_fallthru
      _
    // Predicated region
    $region58: #{_lambda_.1} parent=1 // pred_check
      _
    $region59: #{_lambda_.1} parent=1 // pred_check_branch
      %97 = sbr.rel (0) target = $region61
    $region60: #{_lambda_.1} parent=1 // pred_region
      _
    $region61: #{_lambda_.1} parent=1 // pred_fallthru
      _
    // Predicated region
    $region62: #{_lambda_.1} parent=1 // pred_check
      _
    $region63: #{_lambda_.1} parent=1 // pred_check_branch
      %99 = sbr.rel (0) target = $region65
    $region64: #{_lambda_.1} parent=1 // pred_region
      _
    $region65: #{_lambda_.1} parent=1 // pred_fallthru
      _
    // Predicated region
    $region66: #{_lambda_.1} parent=1 // pred_check
      _
    $region67: #{_lambda_.1} parent=1 // pred_check_branch
      %101 = sbr.rel (0) target = $region69
    $region68: #{_lambda_.1} parent=1 // pred_region
      %103 = dma.done [#allocation3], 1024
    $region69: #{_lambda_.1} parent=1 // pred_fallthru
      _
    // Predicated region
    $region70: #{_lambda_.1} parent=1 // pred_check
      _
    $region71: #{_lambda_.1} parent=1 // pred_check_branch
      %105 = sbr.rel (0) target = $region73
    $region72: #{_lambda_.1} parent=1 // pred_region
      %107 = dma.done [#allocation5], 1024
    $region73: #{_lambda_.1} parent=1 // pred_fallthru
      _
    // Predicated region
    $region74: #{_lambda_.1} parent=1 // pred_check
      _
    $region75: #{_lambda_.1} parent=1 // pred_check_branch
      %109 = sbr.rel (0) target = $region77
    $region76: #{_lambda_.1} parent=1 // pred_region
      %111 = dma.done [#allocation5], 2048
    $region77: #{_lambda_.1} parent=1 // pred_fallthru
      _
    // Predicated region
    $region78: #{_lambda_.1} parent=1 // pred_check
      _
    $region79: #{_lambda_.1} parent=1 // pred_check_branch
      %113 = sbr.rel (0) target = $region81
    $region80: #{_lambda_.1} parent=1 // pred_region
      %115 = dma.done [#allocation8], 2048
    $region81: #{_lambda_.1} parent=1 // pred_fallthru
      _
    %v116 = vlaneseq
    %v117 = vshrl.u32 %v116, 7
    %v118 = vadd.s32 %v117, 8
    %v119 = vlaneseq
    %v120 = vand.u32 %v119, 127
    %vm121 = vcmp.eq.s32.totalorder %v117, %v120
    %vm122 = vcmp.eq.s32.totalorder %v118, %v120
    %v123 = vsel %vm121, 1, 0
    %v124 = vsel %vm122, 1, 0
    %v125 = vcvt.s32.f32 %v123
    %v126 = vcvt.s32.f32 %v124
    %v127 = vld [vmem:[%s0] sm:$0xff]
    %v128 = vld [vmem:[%s0 + $0x8] sm:$0xff]
    %v129 = vld [vmem:[%s0 + $0x10] sm:$0xff]
    %v130 = vld [vmem:[%s0 + $0x18] sm:$0xff]
    %v131 = vld [vmem:[%s0 + $0x20] sm:$0xff]
    %v132 = vld [vmem:[%s0 + $0x28] sm:$0xff]
    %v133 = vld [vmem:[%s0 + $0x30] sm:$0xff]
    %v134 = vld [vmem:[%s0 + $0x38] sm:$0xff]
    %v135 = vadd.f32 %v127, %v125
    %v136 = vadd.f32 %v128, %v126
    %v137 = vadd.f32 %v129, %v125
    %v138 = vadd.f32 %v130, %v126
    %v139 = vadd.f32 %v131, %v125
    %v140 = vadd.f32 %v132, %v126
    %v141 = vadd.f32 %v133, %v125
    %v142 = vadd.f32 %v134, %v126
    %v143 = vld [vmem:[#allocation2] sm:$0xff]
    %v144 = vld [vmem:[#allocation2 + $0x8] sm:$0xff]
    %v145 = vld [vmem:[#allocation2 + $0x10] sm:$0xff]
    %v146 = vld [vmem:[#allocation2 + $0x18] sm:$0xff]
    %v147 = vld [vmem:[#allocation2 + $0x20] sm:$0xff]
    %v148 = vld [vmem:[#allocation2 + $0x28] sm:$0xff]
    %v149 = vld [vmem:[#allocation2 + $0x30] sm:$0xff]
    %v150 = vld [vmem:[#allocation2 + $0x38] sm:$0xff]
    %v151 = vadd.f32 %v143, %v125
    %v152 = vadd.f32 %v144, %v126
    %v153 = vadd.f32 %v145, %v125
    %v154 = vadd.f32 %v146, %v126
    %v155 = vadd.f32 %v147, %v125
    %v156 = vadd.f32 %v148, %v126
    %v157 = vadd.f32 %v149, %v125
    %v158 = vadd.f32 %v150, %v126
    %vm159 = vcmask 130048
    %v160 = vsel %vm159, %v135, 0.0
    %161 = vadd.xlane.f32.xlu0 %v160
    %v162 = vpop.xlane.xlu0 %161
    %v163 = vsel %vm159, %v136, 0.0
    %164 = vadd.xlane.f32.xlu0 %v163
    %v165 = vpop.xlane.xlu0 %164
    %v166 = vsel %vm159, %v137, 0.0
    %167 = vadd.xlane.f32.xlu0 %v166
    %v168 = vpop.xlane.xlu0 %167
    %v169 = vsel %vm159, %v138, 0.0
    %170 = vadd.xlane.f32.xlu0 %v169
    %v171 = vpop.xlane.xlu0 %170
    %v172 = vsel %vm159, %v139, 0.0
    %173 = vadd.xlane.f32.xlu0 %v172
    %v174 = vpop.xlane.xlu0 %173
    %v175 = vsel %vm159, %v140, 0.0
    %176 = vadd.xlane.f32.xlu0 %v175
    %v177 = vpop.xlane.xlu0 %176
    %v178 = vsel %vm159, %v141, 0.0
    %179 = vadd.xlane.f32.xlu0 %v178
    %v180 = vpop.xlane.xlu0 %179
    %v181 = vsel %vm159, %v142, 0.0
    %182 = vadd.xlane.f32.xlu0 %v181
    %v183 = vpop.xlane.xlu0 %182
    %v184 = vrsqrt.pop %v162
    %v185 = vmul.f32 %v184, %v162
    %v186 = vmul.f32 %v185, %v184
    %v187 = vmul.f32 0.5, %v186
    %v188 = vsub.f32 1.5, %v187
    %v189 = vmul.f32 %v184, %v188
    %vm190 = vweird.f32 %v162
    %vm191 = vweird.f32 %v184
    %vm192 = vmor %vm190, %vm191
    %v193 = vsel %vm192, %v184, %v189
    %v194 = vrsqrt.pop %v165
    %v195 = vmul.f32 %v194, %v165
    %v196 = vmul.f32 %v195, %v194
    %v197 = vmul.f32 0.5, %v196
    %v198 = vsub.f32 1.5, %v197
    %v199 = vmul.f32 %v194, %v198
    %vm200 = vweird.f32 %v165
    %vm201 = vweird.f32 %v194
    %vm202 = vmor %vm200, %vm201
    %v203 = vsel %vm202, %v194, %v199
    %v204 = vrsqrt.pop %v168
    %v205 = vmul.f32 %v204, %v168
    %v206 = vmul.f32 %v205, %v204
    %v207 = vmul.f32 0.5, %v206
    %v208 = vsub.f32 1.5, %v207
    %v209 = vmul.f32 %v204, %v208
    %vm210 = vweird.f32 %v168
    %vm211 = vweird.f32 %v204
    %vm212 = vmor %vm210, %vm211
    %v213 = vsel %vm212, %v204, %v209
    %v214 = vrsqrt.pop %v171
    %v215 = vmul.f32 %v214, %v171
    %v216 = vmul.f32 %v215, %v214
    %v217 = vmul.f32 0.5, %v216
    %v218 = vsub.f32 1.5, %v217
    %v219 = vmul.f32 %v214, %v218
    %vm220 = vweird.f32 %v171
    %vm221 = vweird.f32 %v214
    %vm222 = vmor %vm220, %vm221
    %v223 = vsel %vm222, %v214, %v219
    %v224 = vrsqrt.pop %v174
    %v225 = vmul.f32 %v224, %v174
    %v226 = vmul.f32 %v225, %v224
    %v227 = vmul.f32 0.5, %v226
    %v228 = vsub.f32 1.5, %v227
    %v229 = vmul.f32 %v224, %v228
    %vm230 = vweird.f32 %v174
    %vm231 = vweird.f32 %v224
    %vm232 = vmor %vm230, %vm231
    %v233 = vsel %vm232, %v224, %v229
    %v234 = vrsqrt.pop %v177
    %v235 = vmul.f32 %v234, %v177
    %v236 = vmul.f32 %v235, %v234
    %v237 = vmul.f32 0.5, %v236
    %v238 = vsub.f32 1.5, %v237
    %v239 = vmul.f32 %v234, %v238
    %vm240 = vweird.f32 %v177
    %vm241 = vweird.f32 %v234
    %vm242 = vmor %vm240, %vm241
    %v243 = vsel %vm242, %v234, %v239
    %v244 = vrsqrt.pop %v180
    %v245 = vmul.f32 %v244, %v180
    %v246 = vmul.f32 %v245, %v244
    %v247 = vmul.f32 0.5, %v246
    %v248 = vsub.f32 1.5, %v247
    %v249 = vmul.f32 %v244, %v248
    %vm250 = vweird.f32 %v180
    %vm251 = vweird.f32 %v244
    %vm252 = vmor %vm250, %vm251
    %v253 = vsel %vm252, %v244, %v249
    %v254 = vrsqrt.pop %v183
    %v255 = vmul.f32 %v254, %v183
    %v256 = vmul.f32 %v255, %v254
    %v257 = vmul.f32 0.5, %v256
    %v258 = vsub.f32 1.5, %v257
    %v259 = vmul.f32 %v254, %v258
    %vm260 = vweird.f32 %v183
    %vm261 = vweird.f32 %v254
    %vm262 = vmor %vm260, %vm261
    %v263 = vsel %vm262, %v254, %v259
    %v264 = vsel %vm159, %v151, 0.0
    %265 = vadd.xlane.f32.xlu0 %v264
    %v266 = vpop.xlane.xlu0 %265
    %v267 = vsel %vm159, %v152, 0.0
    %268 = vadd.xlane.f32.xlu0 %v267
    %v269 = vpop.xlane.xlu0 %268
    %v270 = vsel %vm159, %v153, 0.0
    %271 = vadd.xlane.f32.xlu0 %v270
    %v272 = vpop.xlane.xlu0 %271
    %v273 = vsel %vm159, %v154, 0.0
    %274 = vadd.xlane.f32.xlu0 %v273
    %v275 = vpop.xlane.xlu0 %274
    %v276 = vsel %vm159, %v155, 0.0
    %277 = vadd.xlane.f32.xlu0 %v276
    %v278 = vpop.xlane.xlu0 %277
    %v279 = vsel %vm159, %v156, 0.0
    %280 = vadd.xlane.f32.xlu0 %v279
    %v281 = vpop.xlane.xlu0 %280
    %v282 = vsel %vm159, %v157, 0.0
    %283 = vadd.xlane.f32.xlu0 %v282
    %v284 = vpop.xlane.xlu0 %283
    %v285 = vsel %vm159, %v158, 0.0
    %286 = vadd.xlane.f32.xlu0 %v285
    %v287 = vpop.xlane.xlu0 %286
    %v288 = vrsqrt.pop %v266
    %v289 = vmul.f32 %v288, %v266
    %v290 = vmul.f32 %v289, %v288
    %v291 = vmul.f32 0.5, %v290
    %v292 = vsub.f32 1.5, %v291
    %v293 = vmul.f32 %v288, %v292
    %vm294 = vweird.f32 %v266
    %vm295 = vweird.f32 %v288
    %vm296 = vmor %vm294, %vm295
    %v297 = vsel %vm296, %v288, %v293
    %v298 = vrsqrt.pop %v269
    %v299 = vmul.f32 %v298, %v269
    %v300 = vmul.f32 %v299, %v298
    %v301 = vmul.f32 0.5, %v300
    %v302 = vsub.f32 1.5, %v301
    %v303 = vmul.f32 %v298, %v302
    %vm304 = vweird.f32 %v269
    %vm305 = vweird.f32 %v298
    %vm306 = vmor %vm304, %vm305
    %v307 = vsel %vm306, %v298, %v303
    %v308 = vrsqrt.pop %v272
    %v309 = vmul.f32 %v308, %v272
    %v310 = vmul.f32 %v309, %v308
    %v311 = vmul.f32 0.5, %v310
    %v312 = vsub.f32 1.5, %v311
    %v313 = vmul.f32 %v308, %v312
    %vm314 = vweird.f32 %v272
    %vm315 = vweird.f32 %v308
    %vm316 = vmor %vm314, %vm315
    %v317 = vsel %vm316, %v308, %v313
    %v318 = vrsqrt.pop %v275
    %v319 = vmul.f32 %v318, %v275
    %v320 = vmul.f32 %v319, %v318
    %v321 = vmul.f32 0.5, %v320
    %v322 = vsub.f32 1.5, %v321
    %v323 = vmul.f32 %v318, %v322
    %vm324 = vweird.f32 %v275
    %vm325 = vweird.f32 %v318
    %vm326 = vmor %vm324, %vm325
    %v327 = vsel %vm326, %v318, %v323
    %v328 = vrsqrt.pop %v278
    %v329 = vmul.f32 %v328, %v278
    %v330 = vmul.f32 %v329, %v328
    %v331 = vmul.f32 0.5, %v330
    %v332 = vsub.f32 1.5, %v331
    %v333 = vmul.f32 %v328, %v332
    %vm334 = vweird.f32 %v278
    %vm335 = vweird.f32 %v328
    %vm336 = vmor %vm334, %vm335
    %v337 = vsel %vm336, %v328, %v333
    %v338 = vrsqrt.pop %v281
    %v339 = vmul.f32 %v338, %v281
    %v340 = vmul.f32 %v339, %v338
    %v341 = vmul.f32 0.5, %v340
    %v342 = vsub.f32 1.5, %v341
    %v343 = vmul.f32 %v338, %v342
    %vm344 = vweird.f32 %v281
    %vm345 = vweird.f32 %v338
    %vm346 = vmor %vm344, %vm345
    %v347 = vsel %vm346, %v338, %v343
    %v348 = vrsqrt.pop %v284
    %v349 = vmul.f32 %v348, %v284
    %v350 = vmul.f32 %v349, %v348
    %v351 = vmul.f32 0.5, %v350
    %v352 = vsub.f32 1.5, %v351
    %v353 = vmul.f32 %v348, %v352
    %vm354 = vweird.f32 %v284
    %vm355 = vweird.f32 %v348
    %vm356 = vmor %vm354, %vm355
    %v357 = vsel %vm356, %v348, %v353
    %v358 = vrsqrt.pop %v287
    %v359 = vmul.f32 %v358, %v287
    %v360 = vmul.f32 %v359, %v358
    %v361 = vmul.f32 0.5, %v360
    %v362 = vsub.f32 1.5, %v361
    %v363 = vmul.f32 %v358, %v362
    %vm364 = vweird.f32 %v287
    %vm365 = vweird.f32 %v358
    %vm366 = vmor %vm364, %vm365
    %v367 = vsel %vm366, %v358, %v363
    %v368 = vld [vmem:[%s1] sm:$0xff]
    %v369 = vld [vmem:[%s1 + $0x8] sm:$0xff]
    %v370 = vld [vmem:[%s1 + $0x10] sm:$0xff]
    %v371 = vld [vmem:[%s1 + $0x18] sm:$0xff]
    %v372 = vld [vmem:[%s1 + $0x20] sm:$0xff]
    %v373 = vld [vmem:[%s1 + $0x28] sm:$0xff]
    %v374 = vld [vmem:[%s1 + $0x30] sm:$0xff]
    %v375 = vld [vmem:[%s1 + $0x38] sm:$0xff]
    %v376 = vld [vmem:[%s3] sm:$0xff]
    %v377 = vld [vmem:[%s3 + $0x8] sm:$0xff]
    %v378 = vld [vmem:[%s3 + $0x10] sm:$0xff]
    %v379 = vld [vmem:[%s3 + $0x18] sm:$0xff]
    %v380 = vld [vmem:[%s3 + $0x20] sm:$0xff]
    %v381 = vld [vmem:[%s3 + $0x28] sm:$0xff]
    %v382 = vld [vmem:[%s3 + $0x30] sm:$0xff]
    %v383 = vld [vmem:[%s3 + $0x38] sm:$0xff]
    %v384 = vld [vmem:[%s4] sm:$0xff]
    %v385 = vld [vmem:[%s5] sm:$0x1]
    %vm386 = vcmask 64512
    %v388 = vsel %vm386, %v368, 0
    %v391 = vsel %vm386, %v369, 0
    %v394 = vsel %vm386, %v376, 0
    %v397 = vsel %vm386, %v377, 0
    %v400 = vsel %vm386, %v370, 0
    %v403 = vsel %vm386, %v371, 0
    %v406 = vsel %vm386, %v378, 0
    %v409 = vsel %vm386, %v379, 0
    %v412 = vsel %vm386, %v372, 0
    %v415 = vsel %vm386, %v373, 0
    %v418 = vsel %vm386, %v380, 0
    %v421 = vsel %vm386, %v381, 0
    %v424 = vsel %vm386, %v374, 0
    %v427 = vsel %vm386, %v375, 0
    %v430 = vsel %vm386, %v382, 0
    %v433 = vsel %vm386, %v383, 0
    %435 = vmatpush.msra.mxu0 0.0
    %436 = vmatpush.msra.mxu0 0.0
    %437 = vmatpush.msra.mxu0 0.0
    %438 = vmatpush.msra.mxu0 0.0
    %439 = vmatpush.msra.mxu0 0.0
    %440 = vmatpush.msra.mxu0 0.0
    %441 = vmatpush.msra.mxu0 0.0
    %442 = vmatpush.msra.mxu0 0.0
    %443 = vmatpush.msra.mxu0 0.0
    %444 = vmatpush.msra.mxu0 0.0
    %445 = vmatpush.msra.mxu0 0.0
    %446 = vmatpush.msra.mxu0 0.0
    %447 = vmatpush.msra.mxu0 0.0
    %448 = vmatpush.msra.mxu0 0.0
    %449 = vmatpush.msra.mxu0 0.0
    %450 = vmatpush.msra.mxu0 %v384
    %451 = vmatmul.f32.gmra.mxu0 %v388
    %v452 = vpop.f32.mrf.mxu0
    %v453 = vadd.f32 0.0, %v452
    %454 = vmatmul.f32.gmra.mxu0 %v391
    %v455 = vpop.f32.mrf.mxu0
    %v456 = vadd.f32 0.0, %v455
    %457 = vmatmul.f32.gmra.mxu0 %v394
    %v458 = vpop.f32.mrf.mxu0
    %v459 = vadd.f32 0.0, %v458
    %460 = vmatmul.f32.gmra.mxu0 %v397
    %v461 = vpop.f32.mrf.mxu0
    %v462 = vadd.f32 0.0, %v461
    %463 = vmatmul.f32.gmra.mxu0 %v400
    %v464 = vpop.f32.mrf.mxu0
    %v465 = vadd.f32 0.0, %v464
    %466 = vmatmul.f32.gmra.mxu0 %v403
    %v467 = vpop.f32.mrf.mxu0
    %v468 = vadd.f32 0.0, %v467
    %469 = vmatmul.f32.gmra.mxu0 %v406
    %v470 = vpop.f32.mrf.mxu0
    %v471 = vadd.f32 0.0, %v470
    %472 = vmatmul.f32.gmra.mxu0 %v409
    %v473 = vpop.f32.mrf.mxu0
    %v474 = vadd.f32 0.0, %v473
    %475 = vmatmul.f32.gmra.mxu0 %v412
    %v476 = vpop.f32.mrf.mxu0
    %v477 = vadd.f32 0.0, %v476
    %478 = vmatmul.f32.gmra.mxu0 %v415
    %v479 = vpop.f32.mrf.mxu0
    %v480 = vadd.f32 0.0, %v479
    %481 = vmatmul.f32.gmra.mxu0 %v418
    %v482 = vpop.f32.mrf.mxu0
    %v483 = vadd.f32 0.0, %v482
    %484 = vmatmul.f32.gmra.mxu0 %v421
    %v485 = vpop.f32.mrf.mxu0
    %v486 = vadd.f32 0.0, %v485
    %487 = vmatmul.f32.gmra.mxu0 %v424
    %v488 = vpop.f32.mrf.mxu0
    %v489 = vadd.f32 0.0, %v488
    %490 = vmatmul.f32.gmra.mxu0 %v427
    %v491 = vpop.f32.mrf.mxu0
    %v492 = vadd.f32 0.0, %v491
    %493 = vmatmul.f32.gmra.mxu0 %v430
    %v494 = vpop.f32.mrf.mxu0
    %v495 = vadd.f32 0.0, %v494
    %496 = vmatmul.f32.gmra.mxu0 %v433
    %v497 = vpop.f32.mrf.mxu0
    %v498 = vadd.f32 0.0, %v497
    %499 = vdwg.mxu0
    %v500 = vmul.f32 %v193, %v453
    %v501 = vmul.f32 %v203, %v456
    %v502 = vmul.f32 %v213, %v465
    %v503 = vmul.f32 %v223, %v468
    %v504 = vmul.f32 %v233, %v477
    %v505 = vmul.f32 %v243, %v480
    %v506 = vmul.f32 %v253, %v489
    %v507 = vmul.f32 %v263, %v492
    %v509 = vsel %vm159, %v135, 0
    %v512 = vsel %vm159, %v136, 0
    %514 = vmatpush.msra.mxu0 0.0
    %515 = vmatpush.msra.mxu0 0.0
    %516 = vmatpush.msra.mxu0 0.0
    %517 = vmatpush.msra.mxu0 0.0
    %518 = vmatpush.msra.mxu0 0.0
    %519 = vmatpush.msra.mxu0 0.0
    %520 = vmatpush.msra.mxu0 0.0
    %521 = vmatpush.msra.mxu0 0.0
    %522 = vmatpush.msra.mxu0 0.0
    %523 = vmatpush.msra.mxu0 0.0
    %524 = vmatpush.msra.mxu0 0.0
    %525 = vmatpush.msra.mxu0 0.0
    %526 = vmatpush.msra.mxu0 0.0
    %527 = vmatpush.msra.mxu0 0.0
    %528 = vmatpush.msra.mxu0 %v501
    %529 = vmatpush.msra.mxu0 %v500
    %530 = vmatmul.f32.gmra.mxu0 %v509
    %v531 = vpop.f32.mrf.mxu0
    %v532 = vadd.f32 0.0, %v531
    %533 = vmatmul.f32.gmra.mxu0 %v512
    %v534 = vpop.f32.mrf.mxu0
    %v535 = vadd.f32 0.0, %v534
    %536 = vdwg.mxu0
    %v538 = vsel %vm159, %v137, 0
    %v541 = vsel %vm159, %v138, 0
    %543 = vmatpush.msra.mxu0 0.0
    %544 = vmatpush.msra.mxu0 0.0
    %545 = vmatpush.msra.mxu0 0.0
    %546 = vmatpush.msra.mxu0 0.0
    %547 = vmatpush.msra.mxu0 0.0
    %548 = vmatpush.msra.mxu0 0.0
    %549 = vmatpush.msra.mxu0 0.0
    %550 = vmatpush.msra.mxu0 0.0
    %551 = vmatpush.msra.mxu0 0.0
    %552 = vmatpush.msra.mxu0 0.0
    %553 = vmatpush.msra.mxu0 0.0
    %554 = vmatpush.msra.mxu0 0.0
    %555 = vmatpush.msra.mxu0 0.0
    %556 = vmatpush.msra.mxu0 0.0
    %557 = vmatpush.msra.mxu0 %v503
    %558 = vmatpush.msra.mxu0 %v502
    %559 = vmatmul.f32.gmra.mxu0 %v538
    %v560 = vpop.f32.mrf.mxu0
    %v561 = vadd.f32 0.0, %v560
    %562 = vmatmul.f32.gmra.mxu0 %v541
    %v563 = vpop.f32.mrf.mxu0
    %v564 = vadd.f32 0.0, %v563
    %565 = vdwg.mxu0
    %v567 = vsel %vm159, %v139, 0
    %v570 = vsel %vm159, %v140, 0
    %572 = vmatpush.msra.mxu0 0.0
    %573 = vmatpush.msra.mxu0 0.0
    %574 = vmatpush.msra.mxu0 0.0
    %575 = vmatpush.msra.mxu0 0.0
    %576 = vmatpush.msra.mxu0 0.0
    %577 = vmatpush.msra.mxu0 0.0
    %578 = vmatpush.msra.mxu0 0.0
    %579 = vmatpush.msra.mxu0 0.0
    %580 = vmatpush.msra.mxu0 0.0
    %581 = vmatpush.msra.mxu0 0.0
    %582 = vmatpush.msra.mxu0 0.0
    %583 = vmatpush.msra.mxu0 0.0
    %584 = vmatpush.msra.mxu0 0.0
    %585 = vmatpush.msra.mxu0 0.0
    %586 = vmatpush.msra.mxu0 %v505
    %587 = vmatpush.msra.mxu0 %v504
    %588 = vmatmul.f32.gmra.mxu0 %v567
    %v589 = vpop.f32.mrf.mxu0
    %v590 = vadd.f32 0.0, %v589
    %591 = vmatmul.f32.gmra.mxu0 %v570
    %v592 = vpop.f32.mrf.mxu0
    %v593 = vadd.f32 0.0, %v592
    %594 = vdwg.mxu0
    %v596 = vsel %vm159, %v141, 0
    %v599 = vsel %vm159, %v142, 0
    %601 = vmatpush.msra.mxu0 0.0
    %602 = vmatpush.msra.mxu0 0.0
    %603 = vmatpush.msra.mxu0 0.0
    %604 = vmatpush.msra.mxu0 0.0
    %605 = vmatpush.msra.mxu0 0.0
    %606 = vmatpush.msra.mxu0 0.0
    %607 = vmatpush.msra.mxu0 0.0
    %608 = vmatpush.msra.mxu0 0.0
    %609 = vmatpush.msra.mxu0 0.0
    %610 = vmatpush.msra.mxu0 0.0
    %611 = vmatpush.msra.mxu0 0.0
    %612 = vmatpush.msra.mxu0 0.0
    %613 = vmatpush.msra.mxu0 0.0
    %614 = vmatpush.msra.mxu0 0.0
    %615 = vmatpush.msra.mxu0 %v507
    %616 = vmatpush.msra.mxu0 %v506
    %617 = vmatmul.f32.gmra.mxu0 %v596
    %v618 = vpop.f32.mrf.mxu0
    %v619 = vadd.f32 0.0, %v618
    %620 = vmatmul.f32.gmra.mxu0 %v599
    %v621 = vpop.f32.mrf.mxu0
    %v622 = vadd.f32 0.0, %v621
    %623 = vdwg.mxu0
    %v624 = vmul.f32 %v193, %v532
    %v625 = vmul.f32 %v203, %v535
    %v626 = vmul.f32 %v213, %v561
    %v627 = vmul.f32 %v223, %v564
    %v628 = vmul.f32 %v233, %v590
    %v629 = vmul.f32 %v243, %v593
    %v630 = vmul.f32 %v253, %v619
    %v631 = vmul.f32 %v263, %v622
    %v632 = vmul.f32 %v297, %v459
    %v633 = vmul.f32 %v307, %v462
    %v634 = vmul.f32 %v317, %v471
    %v635 = vmul.f32 %v327, %v474
    %v636 = vmul.f32 %v337, %v483
    %v637 = vmul.f32 %v347, %v486
    %v638 = vmul.f32 %v357, %v495
    %v639 = vmul.f32 %v367, %v498
    %v641 = vsel %vm159, %v151, 0
    %v644 = vsel %vm159, %v152, 0
    %646 = vmatpush.msra.mxu0 0.0
    %647 = vmatpush.msra.mxu0 0.0
    %648 = vmatpush.msra.mxu0 0.0
    %649 = vmatpush.msra.mxu0 0.0
    %650 = vmatpush.msra.mxu0 0.0
    %651 = vmatpush.msra.mxu0 0.0
    %652 = vmatpush.msra.mxu0 0.0
    %653 = vmatpush.msra.mxu0 0.0
    %654 = vmatpush.msra.mxu0 0.0
    %655 = vmatpush.msra.mxu0 0.0
    %656 = vmatpush.msra.mxu0 0.0
    %657 = vmatpush.msra.mxu0 0.0
    %658 = vmatpush.msra.mxu0 0.0
    %659 = vmatpush.msra.mxu0 0.0
    %660 = vmatpush.msra.mxu0 %v633
    %661 = vmatpush.msra.mxu0 %v632
    %662 = vmatmul.f32.gmra.mxu0 %v641
    %v663 = vpop.f32.mrf.mxu0
    %v664 = vadd.f32 0.0, %v663
    %665 = vmatmul.f32.gmra.mxu0 %v644
    %v666 = vpop.f32.mrf.mxu0
    %v667 = vadd.f32 0.0, %v666
    %668 = vdwg.mxu0
    %v670 = vsel %vm159, %v153, 0
    %v673 = vsel %vm159, %v154, 0
    %675 = vmatpush.msra.mxu0 0.0
    %676 = vmatpush.msra.mxu0 0.0
    %677 = vmatpush.msra.mxu0 0.0
    %678 = vmatpush.msra.mxu0 0.0
    %679 = vmatpush.msra.mxu0 0.0
    %680 = vmatpush.msra.mxu0 0.0
    %681 = vmatpush.msra.mxu0 0.0
    %682 = vmatpush.msra.mxu0 0.0
    %683 = vmatpush.msra.mxu0 0.0
    %684 = vmatpush.msra.mxu0 0.0
    %685 = vmatpush.msra.mxu0 0.0
    %686 = vmatpush.msra.mxu0 0.0
    %687 = vmatpush.msra.mxu0 0.0
    %688 = vmatpush.msra.mxu0 0.0
    %689 = vmatpush.msra.mxu0 %v635
    %690 = vmatpush.msra.mxu0 %v634
    %691 = vmatmul.f32.gmra.mxu0 %v670
    %v692 = vpop.f32.mrf.mxu0
    %v693 = vadd.f32 0.0, %v692
    %694 = vmatmul.f32.gmra.mxu0 %v673
    %v695 = vpop.f32.mrf.mxu0
    %v696 = vadd.f32 0.0, %v695
    %697 = vdwg.mxu0
    %v699 = vsel %vm159, %v155, 0
    %v702 = vsel %vm159, %v156, 0
    %704 = vmatpush.msra.mxu0 0.0
    %705 = vmatpush.msra.mxu0 0.0
    %706 = vmatpush.msra.mxu0 0.0
    %707 = vmatpush.msra.mxu0 0.0
    %708 = vmatpush.msra.mxu0 0.0
    %709 = vmatpush.msra.mxu0 0.0
    %710 = vmatpush.msra.mxu0 0.0
    %711 = vmatpush.msra.mxu0 0.0
    %712 = vmatpush.msra.mxu0 0.0
    %713 = vmatpush.msra.mxu0 0.0
    %714 = vmatpush.msra.mxu0 0.0
    %715 = vmatpush.msra.mxu0 0.0
    %716 = vmatpush.msra.mxu0 0.0
    %717 = vmatpush.msra.mxu0 0.0
    %718 = vmatpush.msra.mxu0 %v637
    %719 = vmatpush.msra.mxu0 %v636
    %720 = vmatmul.f32.gmra.mxu0 %v699
    %v721 = vpop.f32.mrf.mxu0
    %v722 = vadd.f32 0.0, %v721
    %723 = vmatmul.f32.gmra.mxu0 %v702
    %v724 = vpop.f32.mrf.mxu0
    %v725 = vadd.f32 0.0, %v724
    %726 = vdwg.mxu0
    %v728 = vsel %vm159, %v157, 0
    %v731 = vsel %vm159, %v158, 0
    %733 = vmatpush.msra.mxu0 0.0
    %734 = vmatpush.msra.mxu0 0.0
    %735 = vmatpush.msra.mxu0 0.0
    %736 = vmatpush.msra.mxu0 0.0
    %737 = vmatpush.msra.mxu0 0.0
    %738 = vmatpush.msra.mxu0 0.0
    %739 = vmatpush.msra.mxu0 0.0
    %740 = vmatpush.msra.mxu0 0.0
    %741 = vmatpush.msra.mxu0 0.0
    %742 = vmatpush.msra.mxu0 0.0
    %743 = vmatpush.msra.mxu0 0.0
    %744 = vmatpush.msra.mxu0 0.0
    %745 = vmatpush.msra.mxu0 0.0
    %746 = vmatpush.msra.mxu0 0.0
    %747 = vmatpush.msra.mxu0 %v639
    %748 = vmatpush.msra.mxu0 %v638
    %749 = vmatmul.f32.gmra.mxu0 %v728
    %v750 = vpop.f32.mrf.mxu0
    %v751 = vadd.f32 0.0, %v750
    %752 = vmatmul.f32.gmra.mxu0 %v731
    %v753 = vpop.f32.mrf.mxu0
    %v754 = vadd.f32 0.0, %v753
    %755 = vdwg.mxu0
    %v756 = vmul.f32 %v297, %v664
    %v757 = vmul.f32 %v307, %v667
    %v758 = vmul.f32 %v317, %v693
    %v759 = vmul.f32 %v327, %v696
    %v760 = vmul.f32 %v337, %v722
    %v761 = vmul.f32 %v347, %v725
    %v762 = vmul.f32 %v357, %v751
    %v763 = vmul.f32 %v367, %v754
    %v765 = vperm.slane %v385, 0
    %v767 = vadd.f32 %v624, %v765
    %v768 = vadd.f32 %v625, %v765
    %v769 = vadd.f32 %v756, %v765
    %v770 = vadd.f32 %v757, %v765
    %v771 = vadd.f32 %v626, %v765
    %v772 = vadd.f32 %v627, %v765
    %v773 = vadd.f32 %v758, %v765
    %v774 = vadd.f32 %v759, %v765
    %v775 = vadd.f32 %v628, %v765
    %v776 = vadd.f32 %v629, %v765
    %v777 = vadd.f32 %v760, %v765
    %v778 = vadd.f32 %v761, %v765
    %v779 = vadd.f32 %v630, %v765
    %v780 = vadd.f32 %v631, %v765
    %v781 = vadd.f32 %v762, %v765
    %v782 = vadd.f32 %v763, %v765
    %v783 = vmax.f32 %v767, 0.0
    %v784 = vmax.f32 %v768, 0.0
    %v785 = vmax.f32 %v769, 0.0
    %v786 = vmax.f32 %v770, 0.0
    %v787 = vmax.f32 %v771, 0.0
    %v788 = vmax.f32 %v772, 0.0
    %v789 = vmax.f32 %v773, 0.0
    %v790 = vmax.f32 %v774, 0.0
    %v791 = vmax.f32 %v775, 0.0
    %v792 = vmax.f32 %v776, 0.0
    %v793 = vmax.f32 %v777, 0.0
    %v794 = vmax.f32 %v778, 0.0
    %v795 = vmax.f32 %v779, 0.0
    %v796 = vmax.f32 %v780, 0.0
    %v797 = vmax.f32 %v781, 0.0
    %v798 = vmax.f32 %v782, 0.0
    %v799 = vld [vmem:[%s6] sm:$0xff]
    %v800 = vld [vmem:[%s6 + $0x8] sm:$0xff]
    %v801 = vld [vmem:[%s7] sm:$0x1]
    %v803 = vsel %vm159, %v783, 0
    %v806 = vsel %vm159, %v784, 0
    %v809 = vsel %vm159, %v785, 0
    %v812 = vsel %vm159, %v786, 0
    %v815 = vsel %vm159, %v787, 0
    %v818 = vsel %vm159, %v788, 0
    %v821 = vsel %vm159, %v789, 0
    %v824 = vsel %vm159, %v790, 0
    %v827 = vsel %vm159, %v791, 0
    %v830 = vsel %vm159, %v792, 0
    %v833 = vsel %vm159, %v793, 0
    %v836 = vsel %vm159, %v794, 0
    %v839 = vsel %vm159, %v795, 0
    %v842 = vsel %vm159, %v796, 0
    %v845 = vsel %vm159, %v797, 0
    %v848 = vsel %vm159, %v798, 0
    %850 = vmatpush.msra.mxu0 0.0
    %851 = vmatpush.msra.mxu0 0.0
    %852 = vmatpush.msra.mxu0 0.0
    %853 = vmatpush.msra.mxu0 0.0
    %854 = vmatpush.msra.mxu0 0.0
    %855 = vmatpush.msra.mxu0 0.0
    %856 = vmatpush.msra.mxu0 0.0
    %857 = vmatpush.msra.mxu0 0.0
    %858 = vmatpush.msra.mxu0 0.0
    %859 = vmatpush.msra.mxu0 0.0
    %860 = vmatpush.msra.mxu0 0.0
    %861 = vmatpush.msra.mxu0 0.0
    %862 = vmatpush.msra.mxu0 0.0
    %863 = vmatpush.msra.mxu0 0.0
    %864 = vmatpush.msra.mxu0 %v800
    %865 = vmatpush.msra.mxu0 %v799
    %866 = vmatmul.f32.gmra.mxu0 %v803
    %v867 = vpop.f32.mrf.mxu0
    %v868 = vadd.f32 0.0, %v867
    %869 = vmatmul.f32.gmra.mxu0 %v806
    %v870 = vpop.f32.mrf.mxu0
    %v871 = vadd.f32 0.0, %v870
    %872 = vmatmul.f32.gmra.mxu0 %v809
    %v873 = vpop.f32.mrf.mxu0
    %v874 = vadd.f32 0.0, %v873
    %875 = vmatmul.f32.gmra.mxu0 %v812
    %v876 = vpop.f32.mrf.mxu0
    %v877 = vadd.f32 0.0, %v876
    %878 = vmatmul.f32.gmra.mxu0 %v815
    %v879 = vpop.f32.mrf.mxu0
    %v880 = vadd.f32 0.0, %v879
    %881 = vmatmul.f32.gmra.mxu0 %v818
    %v882 = vpop.f32.mrf.mxu0
    %v883 = vadd.f32 0.0, %v882
    %884 = vmatmul.f32.gmra.mxu0 %v821
    %v885 = vpop.f32.mrf.mxu0
    %v886 = vadd.f32 0.0, %v885
    %887 = vmatmul.f32.gmra.mxu0 %v824
    %v888 = vpop.f32.mrf.mxu0
    %v889 = vadd.f32 0.0, %v888
    %890 = vmatmul.f32.gmra.mxu0 %v827
    %v891 = vpop.f32.mrf.mxu0
    %v892 = vadd.f32 0.0, %v891
    %893 = vmatmul.f32.gmra.mxu0 %v830
    %v894 = vpop.f32.mrf.mxu0
    %v895 = vadd.f32 0.0, %v894
    %896 = vmatmul.f32.gmra.mxu0 %v833
    %v897 = vpop.f32.mrf.mxu0
    %v898 = vadd.f32 0.0, %v897
    %899 = vmatmul.f32.gmra.mxu0 %v836
    %v900 = vpop.f32.mrf.mxu0
    %v901 = vadd.f32 0.0, %v900
    %902 = vmatmul.f32.gmra.mxu0 %v839
    %v903 = vpop.f32.mrf.mxu0
    %v904 = vadd.f32 0.0, %v903
    %905 = vmatmul.f32.gmra.mxu0 %v842
    %v906 = vpop.f32.mrf.mxu0
    %v907 = vadd.f32 0.0, %v906
    %908 = vmatmul.f32.gmra.mxu0 %v845
    %v909 = vpop.f32.mrf.mxu0
    %v910 = vadd.f32 0.0, %v909
    %911 = vmatmul.f32.gmra.mxu0 %v848
    %v912 = vpop.f32.mrf.mxu0
    %v913 = vadd.f32 0.0, %v912
    %914 = vdwg.mxu0
    %v915 = vmul.f32 %v193, %v868
    %v916 = vmul.f32 %v203, %v871
    %v917 = vmul.f32 %v213, %v880
    %v918 = vmul.f32 %v223, %v883
    %v919 = vmul.f32 %v233, %v892
    %v920 = vmul.f32 %v243, %v895
    %v921 = vmul.f32 %v253, %v904
    %v922 = vmul.f32 %v263, %v907
    %923 = vmatpush.msra.mxu0 0.0
    %924 = vmatpush.msra.mxu0 0.0
    %925 = vmatpush.msra.mxu0 0.0
    %926 = vmatpush.msra.mxu0 0.0
    %927 = vmatpush.msra.mxu0 0.0
    %928 = vmatpush.msra.mxu0 0.0
    %929 = vmatpush.msra.mxu0 0.0
    %930 = vmatpush.msra.mxu0 0.0
    %931 = vmatpush.msra.mxu0 0.0
    %932 = vmatpush.msra.mxu0 0.0
    %933 = vmatpush.msra.mxu0 0.0
    %934 = vmatpush.msra.mxu0 0.0
    %935 = vmatpush.msra.mxu0 0.0
    %936 = vmatpush.msra.mxu0 0.0
    %937 = vmatpush.msra.mxu0 %v916
    %938 = vmatpush.msra.mxu0 %v915
    %939 = vmatmul.f32.gmra.mxu0 %v509
    %v940 = vpop.f32.mrf.mxu0
    %v941 = vadd.f32 0.0, %v940
    %942 = vmatmul.f32.gmra.mxu0 %v512
    %v943 = vpop.f32.mrf.mxu0
    %v944 = vadd.f32 0.0, %v943
    %945 = vdwg.mxu0
    %946 = vmatpush.msra.mxu0 0.0
    %947 = vmatpush.msra.mxu0 0.0
    %948 = vmatpush.msra.mxu0 0.0
    %949 = vmatpush.msra.mxu0 0.0
    %950 = vmatpush.msra.mxu0 0.0
    %951 = vmatpush.msra.mxu0 0.0
    %952 = vmatpush.msra.mxu0 0.0
    %953 = vmatpush.msra.mxu0 0.0
    %954 = vmatpush.msra.mxu0 0.0
    %955 = vmatpush.msra.mxu0 0.0
    %956 = vmatpush.msra.mxu0 0.0
    %957 = vmatpush.msra.mxu0 0.0
    %958 = vmatpush.msra.mxu0 0.0
    %959 = vmatpush.msra.mxu0 0.0
    %960 = vmatpush.msra.mxu0 %v918
    %961 = vmatpush.msra.mxu0 %v917
    %962 = vmatmul.f32.gmra.mxu0 %v538
    %v963 = vpop.f32.mrf.mxu0
    %v964 = vadd.f32 0.0, %v963
    %965 = vmatmul.f32.gmra.mxu0 %v541
    %v966 = vpop.f32.mrf.mxu0
    %v967 = vadd.f32 0.0, %v966
    %968 = vdwg.mxu0
    %969 = vmatpush.msra.mxu0 0.0
    %970 = vmatpush.msra.mxu0 0.0
    %971 = vmatpush.msra.mxu0 0.0
    %972 = vmatpush.msra.mxu0 0.0
    %973 = vmatpush.msra.mxu0 0.0
    %974 = vmatpush.msra.mxu0 0.0
    %975 = vmatpush.msra.mxu0 0.0
    %976 = vmatpush.msra.mxu0 0.0
    %977 = vmatpush.msra.mxu0 0.0
    %978 = vmatpush.msra.mxu0 0.0
    %979 = vmatpush.msra.mxu0 0.0
    %980 = vmatpush.msra.mxu0 0.0
    %981 = vmatpush.msra.mxu0 0.0
    %982 = vmatpush.msra.mxu0 0.0
    %983 = vmatpush.msra.mxu0 %v920
    %984 = vmatpush.msra.mxu0 %v919
    %985 = vmatmul.f32.gmra.mxu0 %v567
    %v986 = vpop.f32.mrf.mxu0
    %v987 = vadd.f32 0.0, %v986
    %988 = vmatmul.f32.gmra.mxu0 %v570
    %v989 = vpop.f32.mrf.mxu0
    %v990 = vadd.f32 0.0, %v989
    %991 = vdwg.mxu0
    %992 = vmatpush.msra.mxu0 0.0
    %993 = vmatpush.msra.mxu0 0.0
    %994 = vmatpush.msra.mxu0 0.0
    %995 = vmatpush.msra.mxu0 0.0
    %996 = vmatpush.msra.mxu0 0.0
    %997 = vmatpush.msra.mxu0 0.0
    %998 = vmatpush.msra.mxu0 0.0
    %999 = vmatpush.msra.mxu0 0.0
    %1000 = vmatpush.msra.mxu0 0.0
    %1001 = vmatpush.msra.mxu0 0.0
    %1002 = vmatpush.msra.mxu0 0.0
    %1003 = vmatpush.msra.mxu0 0.0
    %1004 = vmatpush.msra.mxu0 0.0
    %1005 = vmatpush.msra.mxu0 0.0
    %1006 = vmatpush.msra.mxu0 %v922
    %1007 = vmatpush.msra.mxu0 %v921
    %1008 = vmatmul.f32.gmra.mxu0 %v596
    %v1009 = vpop.f32.mrf.mxu0
    %v1010 = vadd.f32 0.0, %v1009
    %1011 = vmatmul.f32.gmra.mxu0 %v599
    %v1012 = vpop.f32.mrf.mxu0
    %v1013 = vadd.f32 0.0, %v1012
    %1014 = vdwg.mxu0
    %v1015 = vmul.f32 %v193, %v941
    %v1016 = vmul.f32 %v203, %v944
    %v1017 = vmul.f32 %v213, %v964
    %v1018 = vmul.f32 %v223, %v967
    %v1019 = vmul.f32 %v233, %v987
    %v1020 = vmul.f32 %v243, %v990
    %v1021 = vmul.f32 %v253, %v1010
    %v1022 = vmul.f32 %v263, %v1013
    %v1023 = vmul.f32 %v297, %v874
    %v1024 = vmul.f32 %v307, %v877
    %v1025 = vmul.f32 %v317, %v886
    %v1026 = vmul.f32 %v327, %v889
    %v1027 = vmul.f32 %v337, %v898
    %v1028 = vmul.f32 %v347, %v901
    %v1029 = vmul.f32 %v357, %v910
    %v1030 = vmul.f32 %v367, %v913
    %1031 = vmatpush.msra.mxu0 0.0
    %1032 = vmatpush.msra.mxu0 0.0
    %1033 = vmatpush.msra.mxu0 0.0
    %1034 = vmatpush.msra.mxu0 0.0
    %1035 = vmatpush.msra.mxu0 0.0
    %1036 = vmatpush.msra.mxu0 0.0
    %1037 = vmatpush.msra.mxu0 0.0
    %1038 = vmatpush.msra.mxu0 0.0
    %1039 = vmatpush.msra.mxu0 0.0
    %1040 = vmatpush.msra.mxu0 0.0
    %1041 = vmatpush.msra.mxu0 0.0
    %1042 = vmatpush.msra.mxu0 0.0
    %1043 = vmatpush.msra.mxu0 0.0
    %1044 = vmatpush.msra.mxu0 0.0
    %1045 = vmatpush.msra.mxu0 %v1024
    %1046 = vmatpush.msra.mxu0 %v1023
    %1047 = vmatmul.f32.gmra.mxu0 %v641
    %v1048 = vpop.f32.mrf.mxu0
    %v1049 = vadd.f32 0.0, %v1048
    %1050 = vmatmul.f32.gmra.mxu0 %v644
    %v1051 = vpop.f32.mrf.mxu0
    %v1052 = vadd.f32 0.0, %v1051
    %1053 = vdwg.mxu0
    %1054 = vmatpush.msra.mxu0 0.0
    %1055 = vmatpush.msra.mxu0 0.0
    %1056 = vmatpush.msra.mxu0 0.0
    %1057 = vmatpush.msra.mxu0 0.0
    %1058 = vmatpush.msra.mxu0 0.0
    %1059 = vmatpush.msra.mxu0 0.0
    %1060 = vmatpush.msra.mxu0 0.0
    %1061 = vmatpush.msra.mxu0 0.0
    %1062 = vmatpush.msra.mxu0 0.0
    %1063 = vmatpush.msra.mxu0 0.0
    %1064 = vmatpush.msra.mxu0 0.0
    %1065 = vmatpush.msra.mxu0 0.0
    %1066 = vmatpush.msra.mxu0 0.0
    %1067 = vmatpush.msra.mxu0 0.0
    %1068 = vmatpush.msra.mxu0 %v1026
    %1069 = vmatpush.msra.mxu0 %v1025
    %1070 = vmatmul.f32.gmra.mxu0 %v670
    %v1071 = vpop.f32.mrf.mxu0
    %v1072 = vadd.f32 0.0, %v1071
    %1073 = vmatmul.f32.gmra.mxu0 %v673
    %v1074 = vpop.f32.mrf.mxu0
    %v1075 = vadd.f32 0.0, %v1074
    %1076 = vdwg.mxu0
    %1077 = vmatpush.msra.mxu0 0.0
    %1078 = vmatpush.msra.mxu0 0.0
    %1079 = vmatpush.msra.mxu0 0.0
    %1080 = vmatpush.msra.mxu0 0.0
    %1081 = vmatpush.msra.mxu0 0.0
    %1082 = vmatpush.msra.mxu0 0.0
    %1083 = vmatpush.msra.mxu0 0.0
    %1084 = vmatpush.msra.mxu0 0.0
    %1085 = vmatpush.msra.mxu0 0.0
    %1086 = vmatpush.msra.mxu0 0.0
    %1087 = vmatpush.msra.mxu0 0.0
    %1088 = vmatpush.msra.mxu0 0.0
    %1089 = vmatpush.msra.mxu0 0.0
    %1090 = vmatpush.msra.mxu0 0.0
    %1091 = vmatpush.msra.mxu0 %v1028
    %1092 = vmatpush.msra.mxu0 %v1027
    %1093 = vmatmul.f32.gmra.mxu0 %v699
    %v1094 = vpop.f32.mrf.mxu0
    %v1095 = vadd.f32 0.0, %v1094
    %1096 = vmatmul.f32.gmra.mxu0 %v702
    %v1097 = vpop.f32.mrf.mxu0
    %v1098 = vadd.f32 0.0, %v1097
    %1099 = vdwg.mxu0
    %1100 = vmatpush.msra.mxu0 0.0
    %1101 = vmatpush.msra.mxu0 0.0
    %1102 = vmatpush.msra.mxu0 0.0
    %1103 = vmatpush.msra.mxu0 0.0
    %1104 = vmatpush.msra.mxu0 0.0
    %1105 = vmatpush.msra.mxu0 0.0
    %1106 = vmatpush.msra.mxu0 0.0
    %1107 = vmatpush.msra.mxu0 0.0
    %1108 = vmatpush.msra.mxu0 0.0
    %1109 = vmatpush.msra.mxu0 0.0
    %1110 = vmatpush.msra.mxu0 0.0
    %1111 = vmatpush.msra.mxu0 0.0
    %1112 = vmatpush.msra.mxu0 0.0
    %1113 = vmatpush.msra.mxu0 0.0
    %1114 = vmatpush.msra.mxu0 %v1030
    %1115 = vmatpush.msra.mxu0 %v1029
    %1116 = vmatmul.f32.gmra.mxu0 %v728
    %v1117 = vpop.f32.mrf.mxu0
    %v1118 = vadd.f32 0.0, %v1117
    %1119 = vmatmul.f32.gmra.mxu0 %v731
    %v1120 = vpop.f32.mrf.mxu0
    %v1121 = vadd.f32 0.0, %v1120
    %1122 = vdwg.mxu0
    %v1123 = vmul.f32 %v297, %v1049
    %v1124 = vmul.f32 %v307, %v1052
    %v1125 = vmul.f32 %v317, %v1072
    %v1126 = vmul.f32 %v327, %v1075
    %v1127 = vmul.f32 %v337, %v1095
    %v1128 = vmul.f32 %v347, %v1098
    %v1129 = vmul.f32 %v357, %v1118
    %v1130 = vmul.f32 %v367, %v1121
    %v1132 = vperm.slane %v801, 0
    %v1134 = vadd.f32 %v1015, %v1132
    %v1135 = vadd.f32 %v1016, %v1132
    %v1136 = vadd.f32 %v1123, %v1132
    %v1137 = vadd.f32 %v1124, %v1132
    %v1138 = vadd.f32 %v1017, %v1132
    %v1139 = vadd.f32 %v1018, %v1132
    %v1140 = vadd.f32 %v1125, %v1132
    %v1141 = vadd.f32 %v1126, %v1132
    %v1142 = vadd.f32 %v1019, %v1132
    %v1143 = vadd.f32 %v1020, %v1132
    %v1144 = vadd.f32 %v1127, %v1132
    %v1145 = vadd.f32 %v1128, %v1132
    %v1146 = vadd.f32 %v1021, %v1132
    %v1147 = vadd.f32 %v1022, %v1132
    %v1148 = vadd.f32 %v1129, %v1132
    %v1149 = vadd.f32 %v1130, %v1132
    %v1150 = vld [vmem:[#allocation4] sm:$0xff]
    %v1151 = vld [vmem:[#allocation4 + $0x8] sm:$0xff]
    %v1152 = vld [vmem:[%s10] sm:$0x1]
    %v1154 = vperm.slane %v1152, 0
    %v1157 = vsel %vm159, %v1134, 0
    %v1160 = vsel %vm159, %v1135, 0
    %v1163 = vsel %vm159, %v1136, 0
    %v1166 = vsel %vm159, %v1137, 0
    %v1169 = vsel %vm159, %v1138, 0
    %v1172 = vsel %vm159, %v1139, 0
    %v1175 = vsel %vm159, %v1140, 0
    %v1178 = vsel %vm159, %v1141, 0
    %v1181 = vsel %vm159, %v1142, 0
    %v1184 = vsel %vm159, %v1143, 0
    %v1187 = vsel %vm159, %v1144, 0
    %v1190 = vsel %vm159, %v1145, 0
    %v1193 = vsel %vm159, %v1146, 0
    %v1196 = vsel %vm159, %v1147, 0
    %v1199 = vsel %vm159, %v1148, 0
    %v1202 = vsel %vm159, %v1149, 0
    %1204 = vmatpush.msra.mxu0 0.0
    %1205 = vmatpush.msra.mxu0 0.0
    %1206 = vmatpush.msra.mxu0 0.0
    %1207 = vmatpush.msra.mxu0 0.0
    %1208 = vmatpush.msra.mxu0 0.0
    %1209 = vmatpush.msra.mxu0 0.0
    %1210 = vmatpush.msra.mxu0 0.0
    %1211 = vmatpush.msra.mxu0 0.0
    %1212 = vmatpush.msra.mxu0 0.0
    %1213 = vmatpush.msra.mxu0 0.0
    %1214 = vmatpush.msra.mxu0 0.0
    %1215 = vmatpush.msra.mxu0 0.0
    %1216 = vmatpush.msra.mxu0 0.0
    %1217 = vmatpush.msra.mxu0 0.0
    %1218 = vmatpush.msra.mxu0 %v1151
    %1219 = vmatpush.msra.mxu0 %v1150
    %1220 = vmatmul.f32.gmra.mxu0 %v1157
    %v1221 = vpop.f32.mrf.mxu0
    %v1222 = vadd.f32 %v1154, %v1221
    %1223 = vmatmul.f32.gmra.mxu0 %v1160
    %v1224 = vpop.f32.mrf.mxu0
    %v1225 = vadd.f32 %v1154, %v1224
    %1226 = vmatmul.f32.gmra.mxu0 %v1163
    %v1227 = vpop.f32.mrf.mxu0
    %v1228 = vadd.f32 %v1154, %v1227
    %1229 = vmatmul.f32.gmra.mxu0 %v1166
    %v1230 = vpop.f32.mrf.mxu0
    %v1231 = vadd.f32 %v1154, %v1230
    %1232 = vmatmul.f32.gmra.mxu0 %v1169
    %v1233 = vpop.f32.mrf.mxu0
    %v1234 = vadd.f32 %v1154, %v1233
    %1235 = vmatmul.f32.gmra.mxu0 %v1172
    %v1236 = vpop.f32.mrf.mxu0
    %v1237 = vadd.f32 %v1154, %v1236
    %1238 = vmatmul.f32.gmra.mxu0 %v1175
    %v1239 = vpop.f32.mrf.mxu0
    %v1240 = vadd.f32 %v1154, %v1239
    %1241 = vmatmul.f32.gmra.mxu0 %v1178
    %v1242 = vpop.f32.mrf.mxu0
    %v1243 = vadd.f32 %v1154, %v1242
    %1244 = vmatmul.f32.gmra.mxu0 %v1181
    %v1245 = vpop.f32.mrf.mxu0
    %v1246 = vadd.f32 %v1154, %v1245
    %1247 = vmatmul.f32.gmra.mxu0 %v1184
    %v1248 = vpop.f32.mrf.mxu0
    %v1249 = vadd.f32 %v1154, %v1248
    %1250 = vmatmul.f32.gmra.mxu0 %v1187
    %v1251 = vpop.f32.mrf.mxu0
    %v1252 = vadd.f32 %v1154, %v1251
    %1253 = vmatmul.f32.gmra.mxu0 %v1190
    %v1254 = vpop.f32.mrf.mxu0
    %v1255 = vadd.f32 %v1154, %v1254
    %1256 = vmatmul.f32.gmra.mxu0 %v1193
    %v1257 = vpop.f32.mrf.mxu0
    %v1258 = vadd.f32 %v1154, %v1257
    %1259 = vmatmul.f32.gmra.mxu0 %v1196
    %v1260 = vpop.f32.mrf.mxu0
    %v1261 = vadd.f32 %v1154, %v1260
    %1262 = vmatmul.f32.gmra.mxu0 %v1199
    %v1263 = vpop.f32.mrf.mxu0
    %v1264 = vadd.f32 %v1154, %v1263
    %1265 = vmatmul.f32.gmra.mxu0 %v1202
    %v1266 = vpop.f32.mrf.mxu0
    %v1267 = vadd.f32 %v1154, %v1266
    %1268 = vdwg.mxu0
    %s1269 = scalar_lea.vmem [#allocation4], 16
    %v1270 = vld [vmem:[%s1269] sm:$0xff]
    %v1271 = vld [vmem:[%s1269 + $0x8] sm:$0xff]
    %s1272 = scalar_lea.vmem %s10, 1
    %v1273 = vld [vmem:[%s1272] sm:$0x1]
    %v1275 = vperm.slane %v1273, 0
    %1277 = vmatpush.msra.mxu0 0.0
    %1278 = vmatpush.msra.mxu0 0.0
    %1279 = vmatpush.msra.mxu0 0.0
    %1280 = vmatpush.msra.mxu0 0.0
    %1281 = vmatpush.msra.mxu0 0.0
    %1282 = vmatpush.msra.mxu0 0.0
    %1283 = vmatpush.msra.mxu0 0.0
    %1284 = vmatpush.msra.mxu0 0.0
    %1285 = vmatpush.msra.mxu0 0.0
    %1286 = vmatpush.msra.mxu0 0.0
    %1287 = vmatpush.msra.mxu0 0.0
    %1288 = vmatpush.msra.mxu0 0.0
    %1289 = vmatpush.msra.mxu0 0.0
    %1290 = vmatpush.msra.mxu0 0.0
    %1291 = vmatpush.msra.mxu0 %v1271
    %1292 = vmatpush.msra.mxu0 %v1270
    %1293 = vmatmul.f32.gmra.mxu0 %v1157
    %v1294 = vpop.f32.mrf.mxu0
    %v1295 = vadd.f32 %v1275, %v1294
    %1296 = vmatmul.f32.gmra.mxu0 %v1160
    %v1297 = vpop.f32.mrf.mxu0
    %v1298 = vadd.f32 %v1275, %v1297
    %1299 = vmatmul.f32.gmra.mxu0 %v1163
    %v1300 = vpop.f32.mrf.mxu0
    %v1301 = vadd.f32 %v1275, %v1300
    %1302 = vmatmul.f32.gmra.mxu0 %v1166
    %v1303 = vpop.f32.mrf.mxu0
    %v1304 = vadd.f32 %v1275, %v1303
    %1305 = vmatmul.f32.gmra.mxu0 %v1169
    %v1306 = vpop.f32.mrf.mxu0
    %v1307 = vadd.f32 %v1275, %v1306
    %1308 = vmatmul.f32.gmra.mxu0 %v1172
    %v1309 = vpop.f32.mrf.mxu0
    %v1310 = vadd.f32 %v1275, %v1309
    %1311 = vmatmul.f32.gmra.mxu0 %v1175
    %v1312 = vpop.f32.mrf.mxu0
    %v1313 = vadd.f32 %v1275, %v1312
    %1314 = vmatmul.f32.gmra.mxu0 %v1178
    %v1315 = vpop.f32.mrf.mxu0
    %v1316 = vadd.f32 %v1275, %v1315
    %1317 = vmatmul.f32.gmra.mxu0 %v1181
    %v1318 = vpop.f32.mrf.mxu0
    %v1319 = vadd.f32 %v1275, %v1318
    %1320 = vmatmul.f32.gmra.mxu0 %v1184
    %v1321 = vpop.f32.mrf.mxu0
    %v1322 = vadd.f32 %v1275, %v1321
    %1323 = vmatmul.f32.gmra.mxu0 %v1187
    %v1324 = vpop.f32.mrf.mxu0
    %v1325 = vadd.f32 %v1275, %v1324
    %1326 = vmatmul.f32.gmra.mxu0 %v1190
    %v1327 = vpop.f32.mrf.mxu0
    %v1328 = vadd.f32 %v1275, %v1327
    %1329 = vmatmul.f32.gmra.mxu0 %v1193
    %v1330 = vpop.f32.mrf.mxu0
    %v1331 = vadd.f32 %v1275, %v1330
    %1332 = vmatmul.f32.gmra.mxu0 %v1196
    %v1333 = vpop.f32.mrf.mxu0
    %v1334 = vadd.f32 %v1275, %v1333
    %1335 = vmatmul.f32.gmra.mxu0 %v1199
    %v1336 = vpop.f32.mrf.mxu0
    %v1337 = vadd.f32 %v1275, %v1336
    %1338 = vmatmul.f32.gmra.mxu0 %v1202
    %v1339 = vpop.f32.mrf.mxu0
    %v1340 = vadd.f32 %v1275, %v1339
    %1341 = vdwg.mxu0
    %s1342 = scalar_lea.vmem [#allocation4], 32
    %v1343 = vld [vmem:[%s1342] sm:$0xff]
    %v1344 = vld [vmem:[%s1342 + $0x8] sm:$0xff]
    %s1345 = scalar_lea.vmem %s10, 2
    %v1346 = vld [vmem:[%s1345] sm:$0x1]
    %v1348 = vperm.slane %v1346, 0
    %1350 = vmatpush.msra.mxu0 0.0
    %1351 = vmatpush.msra.mxu0 0.0
    %1352 = vmatpush.msra.mxu0 0.0
    %1353 = vmatpush.msra.mxu0 0.0
    %1354 = vmatpush.msra.mxu0 0.0
    %1355 = vmatpush.msra.mxu0 0.0
    %1356 = vmatpush.msra.mxu0 0.0
    %1357 = vmatpush.msra.mxu0 0.0
    %1358 = vmatpush.msra.mxu0 0.0
    %1359 = vmatpush.msra.mxu0 0.0
    %1360 = vmatpush.msra.mxu0 0.0
    %1361 = vmatpush.msra.mxu0 0.0
    %1362 = vmatpush.msra.mxu0 0.0
    %1363 = vmatpush.msra.mxu0 0.0
    %1364 = vmatpush.msra.mxu0 %v1344
    %1365 = vmatpush.msra.mxu0 %v1343
    %1366 = vmatmul.f32.gmra.mxu0 %v1157
    %v1367 = vpop.f32.mrf.mxu0
    %v1368 = vadd.f32 %v1348, %v1367
    %1369 = vmatmul.f32.gmra.mxu0 %v1160
    %v1370 = vpop.f32.mrf.mxu0
    %v1371 = vadd.f32 %v1348, %v1370
    %1372 = vmatmul.f32.gmra.mxu0 %v1163
    %v1373 = vpop.f32.mrf.mxu0
    %v1374 = vadd.f32 %v1348, %v1373
    %1375 = vmatmul.f32.gmra.mxu0 %v1166
    %v1376 = vpop.f32.mrf.mxu0
    %v1377 = vadd.f32 %v1348, %v1376
    %1378 = vmatmul.f32.gmra.mxu0 %v1169
    %v1379 = vpop.f32.mrf.mxu0
    %v1380 = vadd.f32 %v1348, %v1379
    %1381 = vmatmul.f32.gmra.mxu0 %v1172
    %v1382 = vpop.f32.mrf.mxu0
    %v1383 = vadd.f32 %v1348, %v1382
    %1384 = vmatmul.f32.gmra.mxu0 %v1175
    %v1385 = vpop.f32.mrf.mxu0
    %v1386 = vadd.f32 %v1348, %v1385
    %1387 = vmatmul.f32.gmra.mxu0 %v1178
    %v1388 = vpop.f32.mrf.mxu0
    %v1389 = vadd.f32 %v1348, %v1388
    %1390 = vmatmul.f32.gmra.mxu0 %v1181
    %v1391 = vpop.f32.mrf.mxu0
    %v1392 = vadd.f32 %v1348, %v1391
    %1393 = vmatmul.f32.gmra.mxu0 %v1184
    %v1394 = vpop.f32.mrf.mxu0
    %v1395 = vadd.f32 %v1348, %v1394
    %1396 = vmatmul.f32.gmra.mxu0 %v1187
    %v1397 = vpop.f32.mrf.mxu0
    %v1398 = vadd.f32 %v1348, %v1397
    %1399 = vmatmul.f32.gmra.mxu0 %v1190
    %v1400 = vpop.f32.mrf.mxu0
    %v1401 = vadd.f32 %v1348, %v1400
    %1402 = vmatmul.f32.gmra.mxu0 %v1193
    %v1403 = vpop.f32.mrf.mxu0
    %v1404 = vadd.f32 %v1348, %v1403
    %1405 = vmatmul.f32.gmra.mxu0 %v1196
    %v1406 = vpop.f32.mrf.mxu0
    %v1407 = vadd.f32 %v1348, %v1406
    %1408 = vmatmul.f32.gmra.mxu0 %v1199
    %v1409 = vpop.f32.mrf.mxu0
    %v1410 = vadd.f32 %v1348, %v1409
    %1411 = vmatmul.f32.gmra.mxu0 %v1202
    %v1412 = vpop.f32.mrf.mxu0
    %v1413 = vadd.f32 %v1348, %v1412
    %1414 = vdwg.mxu0
    %s1415 = scalar_lea.vmem [#allocation4], 48
    %v1416 = vld [vmem:[%s1415] sm:$0xff]
    %v1417 = vld [vmem:[%s1415 + $0x8] sm:$0xff]
    %s1418 = scalar_lea.vmem %s10, 3
    %v1419 = vld [vmem:[%s1418] sm:$0x1]
    %v1421 = vperm.slane %v1419, 0
    %1423 = vmatpush.msra.mxu0 0.0
    %1424 = vmatpush.msra.mxu0 0.0
    %1425 = vmatpush.msra.mxu0 0.0
    %1426 = vmatpush.msra.mxu0 0.0
    %1427 = vmatpush.msra.mxu0 0.0
    %1428 = vmatpush.msra.mxu0 0.0
    %1429 = vmatpush.msra.mxu0 0.0
    %1430 = vmatpush.msra.mxu0 0.0
    %1431 = vmatpush.msra.mxu0 0.0
    %1432 = vmatpush.msra.mxu0 0.0
    %1433 = vmatpush.msra.mxu0 0.0
    %1434 = vmatpush.msra.mxu0 0.0
    %1435 = vmatpush.msra.mxu0 0.0
    %1436 = vmatpush.msra.mxu0 0.0
    %1437 = vmatpush.msra.mxu0 %v1417
    %1438 = vmatpush.msra.mxu0 %v1416
    %1439 = vmatmul.f32.gmra.mxu0 %v1157
    %v1440 = vpop.f32.mrf.mxu0
    %v1441 = vadd.f32 %v1421, %v1440
    %1442 = vmatmul.f32.gmra.mxu0 %v1160
    %v1443 = vpop.f32.mrf.mxu0
    %v1444 = vadd.f32 %v1421, %v1443
    %1445 = vmatmul.f32.gmra.mxu0 %v1163
    %v1446 = vpop.f32.mrf.mxu0
    %v1447 = vadd.f32 %v1421, %v1446
    %1448 = vmatmul.f32.gmra.mxu0 %v1166
    %v1449 = vpop.f32.mrf.mxu0
    %v1450 = vadd.f32 %v1421, %v1449
    %1451 = vmatmul.f32.gmra.mxu0 %v1169
    %v1452 = vpop.f32.mrf.mxu0
    %v1453 = vadd.f32 %v1421, %v1452
    %1454 = vmatmul.f32.gmra.mxu0 %v1172
    %v1455 = vpop.f32.mrf.mxu0
    %v1456 = vadd.f32 %v1421, %v1455
    %1457 = vmatmul.f32.gmra.mxu0 %v1175
    %v1458 = vpop.f32.mrf.mxu0
    %v1459 = vadd.f32 %v1421, %v1458
    %1460 = vmatmul.f32.gmra.mxu0 %v1178
    %v1461 = vpop.f32.mrf.mxu0
    %v1462 = vadd.f32 %v1421, %v1461
    %1463 = vmatmul.f32.gmra.mxu0 %v1181
    %v1464 = vpop.f32.mrf.mxu0
    %v1465 = vadd.f32 %v1421, %v1464
    %1466 = vmatmul.f32.gmra.mxu0 %v1184
    %v1467 = vpop.f32.mrf.mxu0
    %v1468 = vadd.f32 %v1421, %v1467
    %1469 = vmatmul.f32.gmra.mxu0 %v1187
    %v1470 = vpop.f32.mrf.mxu0
    %v1471 = vadd.f32 %v1421, %v1470
    %1472 = vmatmul.f32.gmra.mxu0 %v1190
    %v1473 = vpop.f32.mrf.mxu0
    %v1474 = vadd.f32 %v1421, %v1473
    %1475 = vmatmul.f32.gmra.mxu0 %v1193
    %v1476 = vpop.f32.mrf.mxu0
    %v1477 = vadd.f32 %v1421, %v1476
    %1478 = vmatmul.f32.gmra.mxu0 %v1196
    %v1479 = vpop.f32.mrf.mxu0
    %v1480 = vadd.f32 %v1421, %v1479
    %1481 = vmatmul.f32.gmra.mxu0 %v1199
    %v1482 = vpop.f32.mrf.mxu0
    %v1483 = vadd.f32 %v1421, %v1482
    %1484 = vmatmul.f32.gmra.mxu0 %v1202
    %v1485 = vpop.f32.mrf.mxu0
    %v1486 = vadd.f32 %v1421, %v1485
    %1487 = vdwg.mxu0
    %v1488 = vld [vmem:[%s9] sm:$0xff]
    %v1489 = vld [vmem:[%s9 + $0x8] sm:$0xff]
    %v1490 = vld [vmem:[%s9 + $0x10] sm:$0xff]
    %v1491 = vld [vmem:[%s9 + $0x18] sm:$0xff]
    %s1492 = scalar_lea.vmem %s9, 32
    %v1493 = vld [vmem:[%s1492] sm:$0xff]
    %v1494 = vld [vmem:[%s1492 + $0x8] sm:$0xff]
    %v1495 = vld [vmem:[%s1492 + $0x10] sm:$0xff]
    %v1496 = vld [vmem:[%s1492 + $0x18] sm:$0xff]
    %s1497 = scalar_lea.vmem %s9, 64
    %v1498 = vld [vmem:[%s1497] sm:$0xff]
    %v1499 = vld [vmem:[%s1497 + $0x8] sm:$0xff]
    %v1500 = vld [vmem:[%s1497 + $0x10] sm:$0xff]
    %v1501 = vld [vmem:[%s1497 + $0x18] sm:$0xff]
    %s1502 = scalar_lea.vmem %s9, 96
    %v1503 = vld [vmem:[%s1502] sm:$0xff]
    %v1504 = vld [vmem:[%s1502 + $0x8] sm:$0xff]
    %v1505 = vld [vmem:[%s1502 + $0x10] sm:$0xff]
    %v1506 = vld [vmem:[%s1502 + $0x18] sm:$0xff]
    %vm1507 = vcmask 261120
    %v1509 = vsel %vm1507, 0.0, 0
    %1511 = vmatpush.msra.mxu0 0.0
    %1512 = vmatpush.msra.mxu0 0.0
    %1513 = vmatpush.msra.mxu0 0.0
    %1514 = vmatpush.msra.mxu0 0.0
    %1515 = vmatpush.msra.mxu0 0.0
    %1516 = vmatpush.msra.mxu0 0.0
    %1517 = vmatpush.msra.mxu0 0.0
    %1518 = vmatpush.msra.mxu0 0.0
    %1519 = vmatpush.msra.mxu0 0.0
    %1520 = vmatpush.msra.mxu0 0.0
    %1521 = vmatpush.msra.mxu0 0.0
    %1522 = vmatpush.msra.mxu0 0.0
    %1523 = vmatpush.msra.mxu0 %v1491
    %1524 = vmatpush.msra.mxu0 %v1490
    %1525 = vmatpush.msra.mxu0 %v1489
    %1526 = vmatpush.msra.mxu0 %v1488
    %1527 = vmatmul.f32.gmra.mxu0 %v1509
    %v1528 = vpop.f32.mrf.mxu0
    %v1529 = vadd.f32 0.0, %v1528
    %1530 = vmatmul.f32.gmra.mxu0 %v1509
    %v1531 = vpop.f32.mrf.mxu0
    %v1532 = vadd.f32 0.0, %v1531
    %1533 = vmatmul.f32.gmra.mxu0 %v1509
    %v1534 = vpop.f32.mrf.mxu0
    %v1535 = vadd.f32 0.0, %v1534
    %1536 = vmatmul.f32.gmra.mxu0 %v1509
    %v1537 = vpop.f32.mrf.mxu0
    %v1538 = vadd.f32 0.0, %v1537
    %1539 = vdwg.mxu0
    %v1540 = vadd.f32 %v1222, %v1529
    %v1541 = vadd.f32 %v1225, %v1532
    %v1542 = vadd.f32 %v1228, %v1535
    %v1543 = vadd.f32 %v1231, %v1538
    %1544 = vmatpush.msra.mxu0 0.0
    %1545 = vmatpush.msra.mxu0 0.0
    %1546 = vmatpush.msra.mxu0 0.0
    %1547 = vmatpush.msra.mxu0 0.0
    %1548 = vmatpush.msra.mxu0 0.0
    %1549 = vmatpush.msra.mxu0 0.0
    %1550 = vmatpush.msra.mxu0 0.0
    %1551 = vmatpush.msra.mxu0 0.0
    %1552 = vmatpush.msra.mxu0 0.0
    %1553 = vmatpush.msra.mxu0 0.0
    %1554 = vmatpush.msra.mxu0 0.0
    %1555 = vmatpush.msra.mxu0 0.0
    %1556 = vmatpush.msra.mxu0 %v1496
    %1557 = vmatpush.msra.mxu0 %v1495
    %1558 = vmatpush.msra.mxu0 %v1494
    %1559 = vmatpush.msra.mxu0 %v1493
    %1560 = vmatmul.f32.gmra.mxu0 %v1509
    %v1561 = vpop.f32.mrf.mxu0
    %v1562 = vadd.f32 0.0, %v1561
    %1563 = vmatmul.f32.gmra.mxu0 %v1509
    %v1564 = vpop.f32.mrf.mxu0
    %v1565 = vadd.f32 0.0, %v1564
    %1566 = vmatmul.f32.gmra.mxu0 %v1509
    %v1567 = vpop.f32.mrf.mxu0
    %v1568 = vadd.f32 0.0, %v1567
    %1569 = vmatmul.f32.gmra.mxu0 %v1509
    %v1570 = vpop.f32.mrf.mxu0
    %v1571 = vadd.f32 0.0, %v1570
    %1572 = vdwg.mxu0
    %v1573 = vadd.f32 %v1295, %v1562
    %v1574 = vadd.f32 %v1298, %v1565
    %v1575 = vadd.f32 %v1301, %v1568
    %v1576 = vadd.f32 %v1304, %v1571
    %1577 = vmatpush.msra.mxu0 0.0
    %1578 = vmatpush.msra.mxu0 0.0
    %1579 = vmatpush.msra.mxu0 0.0
    %1580 = vmatpush.msra.mxu0 0.0
    %1581 = vmatpush.msra.mxu0 0.0
    %1582 = vmatpush.msra.mxu0 0.0
    %1583 = vmatpush.msra.mxu0 0.0
    %1584 = vmatpush.msra.mxu0 0.0
    %1585 = vmatpush.msra.mxu0 0.0
    %1586 = vmatpush.msra.mxu0 0.0
    %1587 = vmatpush.msra.mxu0 0.0
    %1588 = vmatpush.msra.mxu0 0.0
    %1589 = vmatpush.msra.mxu0 %v1501
    %1590 = vmatpush.msra.mxu0 %v1500
    %1591 = vmatpush.msra.mxu0 %v1499
    %1592 = vmatpush.msra.mxu0 %v1498
    %1593 = vmatmul.f32.gmra.mxu0 %v1509
    %v1594 = vpop.f32.mrf.mxu0
    %v1595 = vadd.f32 0.0, %v1594
    %1596 = vmatmul.f32.gmra.mxu0 %v1509
    %v1597 = vpop.f32.mrf.mxu0
    %v1598 = vadd.f32 0.0, %v1597
    %1599 = vmatmul.f32.gmra.mxu0 %v1509
    %v1600 = vpop.f32.mrf.mxu0
    %v1601 = vadd.f32 0.0, %v1600
    %1602 = vmatmul.f32.gmra.mxu0 %v1509
    %v1603 = vpop.f32.mrf.mxu0
    %v1604 = vadd.f32 0.0, %v1603
    %1605 = vdwg.mxu0
    %v1606 = vadd.f32 %v1368, %v1595
    %v1607 = vadd.f32 %v1371, %v1598
    %v1608 = vadd.f32 %v1374, %v1601
    %v1609 = vadd.f32 %v1377, %v1604
    %1610 = vmatpush.msra.mxu0 0.0
    %1611 = vmatpush.msra.mxu0 0.0
    %1612 = vmatpush.msra.mxu0 0.0
    %1613 = vmatpush.msra.mxu0 0.0
    %1614 = vmatpush.msra.mxu0 0.0
    %1615 = vmatpush.msra.mxu0 0.0
    %1616 = vmatpush.msra.mxu0 0.0
    %1617 = vmatpush.msra.mxu0 0.0
    %1618 = vmatpush.msra.mxu0 0.0
    %1619 = vmatpush.msra.mxu0 0.0
    %1620 = vmatpush.msra.mxu0 0.0
    %1621 = vmatpush.msra.mxu0 0.0
    %1622 = vmatpush.msra.mxu0 %v1506
    %1623 = vmatpush.msra.mxu0 %v1505
    %1624 = vmatpush.msra.mxu0 %v1504
    %1625 = vmatpush.msra.mxu0 %v1503
    %1626 = vmatmul.f32.gmra.mxu0 %v1509
    %v1627 = vpop.f32.mrf.mxu0
    %v1628 = vadd.f32 0.0, %v1627
    %1629 = vmatmul.f32.gmra.mxu0 %v1509
    %v1630 = vpop.f32.mrf.mxu0
    %v1631 = vadd.f32 0.0, %v1630
    %1632 = vmatmul.f32.gmra.mxu0 %v1509
    %v1633 = vpop.f32.mrf.mxu0
    %v1634 = vadd.f32 0.0, %v1633
    %1635 = vmatmul.f32.gmra.mxu0 %v1509
    %v1636 = vpop.f32.mrf.mxu0
    %v1637 = vadd.f32 0.0, %v1636
    %1638 = vdwg.mxu0
    %v1639 = vadd.f32 %v1441, %v1628
    %v1640 = vadd.f32 %v1444, %v1631
    %v1641 = vadd.f32 %v1447, %v1634
    %v1642 = vadd.f32 %v1450, %v1637
    %v1643 = vxor.u32 %v1540, 2147483648
    %v1644 = vxor.u32 %v1541, 2147483648
    %v1645 = vxor.u32 %v1542, 2147483648
    %v1646 = vxor.u32 %v1543, 2147483648
    %v1647 = vmul.f32 %v1643, 1.442695
    %v1648 = vpow.pop %v1647
    %v1649 = vmul.f32 %v1644, 1.442695
    %v1650 = vpow.pop %v1649
    %v1651 = vmul.f32 %v1645, 1.442695
    %v1652 = vpow.pop %v1651
    %v1653 = vmul.f32 %v1646, 1.442695
    %v1654 = vpow.pop %v1653
    %v1655 = vadd.f32 %v1648, 1.0
    %v1656 = vadd.f32 %v1650, 1.0
    %v1657 = vadd.f32 %v1652, 1.0
    %v1658 = vadd.f32 %v1654, 1.0
    %v1659 = vrcp.pop %v1655
    %v1660 = vmul.f32 %v1655, %v1659
    %v1661 = vsub.f32 1.0, %v1660
    %v1662 = vmul.f32 %v1659, %v1661
    %v1663 = vadd.f32 %v1659, %v1662
    %vm1664 = vweird.f32 %v1655
    %vm1665 = vweird.f32 %v1659
    %vm1666 = vmor %vm1664, %vm1665
    %v1667 = vsel %vm1666, %v1659, %v1663
    %v1668 = vand.u32 2147483647, %v1655
    %vm1669 = vcmp.eq.f32.partialorder %v1668, 8.507059e+37
    %v1670 = vand.u32 %v1655, 2147483648
    %v1671 = vor.u32 1.1754944e-38, %v1670
    %v1672 = vsel %vm1669, %v1671, %v1667
    %v1673 = vmul.f32 1.0, %v1672
    %v1674 = vrcp.pop %v1656
    %v1675 = vmul.f32 %v1656, %v1674
    %v1676 = vsub.f32 1.0, %v1675
    %v1677 = vmul.f32 %v1674, %v1676
    %v1678 = vadd.f32 %v1674, %v1677
    %vm1679 = vweird.f32 %v1656
    %vm1680 = vweird.f32 %v1674
    %vm1681 = vmor %vm1679, %vm1680
    %v1682 = vsel %vm1681, %v1674, %v1678
    %v1683 = vand.u32 2147483647, %v1656
    %vm1684 = vcmp.eq.f32.partialorder %v1683, 8.507059e+37
    %v1685 = vand.u32 %v1656, 2147483648
    %v1686 = vor.u32 1.1754944e-38, %v1685
    %v1687 = vsel %vm1684, %v1686, %v1682
    %v1688 = vmul.f32 1.0, %v1687
    %v1689 = vrcp.pop %v1657
    %v1690 = vmul.f32 %v1657, %v1689
    %v1691 = vsub.f32 1.0, %v1690
    %v1692 = vmul.f32 %v1689, %v1691
    %v1693 = vadd.f32 %v1689, %v1692
    %vm1694 = vweird.f32 %v1657
    %vm1695 = vweird.f32 %v1689
    %vm1696 = vmor %vm1694, %vm1695
    %v1697 = vsel %vm1696, %v1689, %v1693
    %v1698 = vand.u32 2147483647, %v1657
    %vm1699 = vcmp.eq.f32.partialorder %v1698, 8.507059e+37
    %v1700 = vand.u32 %v1657, 2147483648
    %v1701 = vor.u32 1.1754944e-38, %v1700
    %v1702 = vsel %vm1699, %v1701, %v1697
    %v1703 = vmul.f32 1.0, %v1702
    %v1704 = vrcp.pop %v1658
    %v1705 = vmul.f32 %v1658, %v1704
    %v1706 = vsub.f32 1.0, %v1705
    %v1707 = vmul.f32 %v1704, %v1706
    %v1708 = vadd.f32 %v1704, %v1707
    %vm1709 = vweird.f32 %v1658
    %vm1710 = vweird.f32 %v1704
    %vm1711 = vmor %vm1709, %vm1710
    %v1712 = vsel %vm1711, %v1704, %v1708
    %v1713 = vand.u32 2147483647, %v1658
    %vm1714 = vcmp.eq.f32.partialorder %v1713, 8.507059e+37
    %v1715 = vand.u32 %v1658, 2147483648
    %v1716 = vor.u32 1.1754944e-38, %v1715
    %v1717 = vsel %vm1714, %v1716, %v1712
    %v1718 = vmul.f32 1.0, %v1717
    %v1719 = vxor.u32 %v1573, 2147483648
    %v1720 = vxor.u32 %v1574, 2147483648
    %v1721 = vxor.u32 %v1575, 2147483648
    %v1722 = vxor.u32 %v1576, 2147483648
    %v1723 = vmul.f32 %v1719, 1.442695
    %v1724 = vpow.pop %v1723
    %v1725 = vmul.f32 %v1720, 1.442695
    %v1726 = vpow.pop %v1725
    %v1727 = vmul.f32 %v1721, 1.442695
    %v1728 = vpow.pop %v1727
    %v1729 = vmul.f32 %v1722, 1.442695
    %v1730 = vpow.pop %v1729
    %v1731 = vadd.f32 %v1724, 1.0
    %v1732 = vadd.f32 %v1726, 1.0
    %v1733 = vadd.f32 %v1728, 1.0
    %v1734 = vadd.f32 %v1730, 1.0
    %v1735 = vrcp.pop %v1731
    %v1736 = vmul.f32 %v1731, %v1735
    %v1737 = vsub.f32 1.0, %v1736
    %v1738 = vmul.f32 %v1735, %v1737
    %v1739 = vadd.f32 %v1735, %v1738
    %vm1740 = vweird.f32 %v1731
    %vm1741 = vweird.f32 %v1735
    %vm1742 = vmor %vm1740, %vm1741
    %v1743 = vsel %vm1742, %v1735, %v1739
    %v1744 = vand.u32 2147483647, %v1731
    %vm1745 = vcmp.eq.f32.partialorder %v1744, 8.507059e+37
    %v1746 = vand.u32 %v1731, 2147483648
    %v1747 = vor.u32 1.1754944e-38, %v1746
    %v1748 = vsel %vm1745, %v1747, %v1743
    %v1749 = vmul.f32 1.0, %v1748
    %v1750 = vrcp.pop %v1732
    %v1751 = vmul.f32 %v1732, %v1750
    %v1752 = vsub.f32 1.0, %v1751
    %v1753 = vmul.f32 %v1750, %v1752
    %v1754 = vadd.f32 %v1750, %v1753
    %vm1755 = vweird.f32 %v1732
    %vm1756 = vweird.f32 %v1750
    %vm1757 = vmor %vm1755, %vm1756
    %v1758 = vsel %vm1757, %v1750, %v1754
    %v1759 = vand.u32 2147483647, %v1732
    %vm1760 = vcmp.eq.f32.partialorder %v1759, 8.507059e+37
    %v1761 = vand.u32 %v1732, 2147483648
    %v1762 = vor.u32 1.1754944e-38, %v1761
    %v1763 = vsel %vm1760, %v1762, %v1758
    %v1764 = vmul.f32 1.0, %v1763
    %v1765 = vrcp.pop %v1733
    %v1766 = vmul.f32 %v1733, %v1765
    %v1767 = vsub.f32 1.0, %v1766
    %v1768 = vmul.f32 %v1765, %v1767
    %v1769 = vadd.f32 %v1765, %v1768
    %vm1770 = vweird.f32 %v1733
    %vm1771 = vweird.f32 %v1765
    %vm1772 = vmor %vm1770, %vm1771
    %v1773 = vsel %vm1772, %v1765, %v1769
    %v1774 = vand.u32 2147483647, %v1733
    %vm1775 = vcmp.eq.f32.partialorder %v1774, 8.507059e+37
    %v1776 = vand.u32 %v1733, 2147483648
    %v1777 = vor.u32 1.1754944e-38, %v1776
    %v1778 = vsel %vm1775, %v1777, %v1773
    %v1779 = vmul.f32 1.0, %v1778
    %v1780 = vrcp.pop %v1734
    %v1781 = vmul.f32 %v1734, %v1780
    %v1782 = vsub.f32 1.0, %v1781
    %v1783 = vmul.f32 %v1780, %v1782
    %v1784 = vadd.f32 %v1780, %v1783
    %vm1785 = vweird.f32 %v1734
    %vm1786 = vweird.f32 %v1780
    %vm1787 = vmor %vm1785, %vm1786
    %v1788 = vsel %vm1787, %v1780, %v1784
    %v1789 = vand.u32 2147483647, %v1734
    %vm1790 = vcmp.eq.f32.partialorder %v1789, 8.507059e+37
    %v1791 = vand.u32 %v1734, 2147483648
    %v1792 = vor.u32 1.1754944e-38, %v1791
    %v1793 = vsel %vm1790, %v1792, %v1788
    %v1794 = vmul.f32 1.0, %v1793
    %v1795 = vtanh.pop %v1606
    %v1796 = vtanh.pop %v1607
    %v1797 = vtanh.pop %v1608
    %v1798 = vtanh.pop %v1609
    %v1799 = vxor.u32 %v1639, 2147483648
    %v1800 = vxor.u32 %v1640, 2147483648
    %v1801 = vxor.u32 %v1641, 2147483648
    %v1802 = vxor.u32 %v1642, 2147483648
    %v1803 = vmul.f32 %v1799, 1.442695
    %v1804 = vpow.pop %v1803
    %v1805 = vmul.f32 %v1800, 1.442695
    %v1806 = vpow.pop %v1805
    %v1807 = vmul.f32 %v1801, 1.442695
    %v1808 = vpow.pop %v1807
    %v1809 = vmul.f32 %v1802, 1.442695
    %v1810 = vpow.pop %v1809
    %v1811 = vadd.f32 %v1804, 1.0
    %v1812 = vadd.f32 %v1806, 1.0
    %v1813 = vadd.f32 %v1808, 1.0
    %v1814 = vadd.f32 %v1810, 1.0
    %v1815 = vrcp.pop %v1811
    %v1816 = vmul.f32 %v1811, %v1815
    %v1817 = vsub.f32 1.0, %v1816
    %v1818 = vmul.f32 %v1815, %v1817
    %v1819 = vadd.f32 %v1815, %v1818
    %vm1820 = vweird.f32 %v1811
    %vm1821 = vweird.f32 %v1815
    %vm1822 = vmor %vm1820, %vm1821
    %v1823 = vsel %vm1822, %v1815, %v1819
    %v1824 = vand.u32 2147483647, %v1811
    %vm1825 = vcmp.eq.f32.partialorder %v1824, 8.507059e+37
    %v1826 = vand.u32 %v1811, 2147483648
    %v1827 = vor.u32 1.1754944e-38, %v1826
    %v1828 = vsel %vm1825, %v1827, %v1823
    %v1829 = vmul.f32 1.0, %v1828
    %v1830 = vrcp.pop %v1812
    %v1831 = vmul.f32 %v1812, %v1830
    %v1832 = vsub.f32 1.0, %v1831
    %v1833 = vmul.f32 %v1830, %v1832
    %v1834 = vadd.f32 %v1830, %v1833
    %vm1835 = vweird.f32 %v1812
    %vm1836 = vweird.f32 %v1830
    %vm1837 = vmor %vm1835, %vm1836
    %v1838 = vsel %vm1837, %v1830, %v1834
    %v1839 = vand.u32 2147483647, %v1812
    %vm1840 = vcmp.eq.f32.partialorder %v1839, 8.507059e+37
    %v1841 = vand.u32 %v1812, 2147483648
    %v1842 = vor.u32 1.1754944e-38, %v1841
    %v1843 = vsel %vm1840, %v1842, %v1838
    %v1844 = vmul.f32 1.0, %v1843
    %v1845 = vrcp.pop %v1813
    %v1846 = vmul.f32 %v1813, %v1845
    %v1847 = vsub.f32 1.0, %v1846
    %v1848 = vmul.f32 %v1845, %v1847
    %v1849 = vadd.f32 %v1845, %v1848
    %vm1850 = vweird.f32 %v1813
    %vm1851 = vweird.f32 %v1845
    %vm1852 = vmor %vm1850, %vm1851
    %v1853 = vsel %vm1852, %v1845, %v1849
    %v1854 = vand.u32 2147483647, %v1813
    %vm1855 = vcmp.eq.f32.partialorder %v1854, 8.507059e+37
    %v1856 = vand.u32 %v1813, 2147483648
    %v1857 = vor.u32 1.1754944e-38, %v1856
    %v1858 = vsel %vm1855, %v1857, %v1853
    %v1859 = vmul.f32 1.0, %v1858
    %v1860 = vrcp.pop %v1814
    %v1861 = vmul.f32 %v1814, %v1860
    %v1862 = vsub.f32 1.0, %v1861
    %v1863 = vmul.f32 %v1860, %v1862
    %v1864 = vadd.f32 %v1860, %v1863
    %vm1865 = vweird.f32 %v1814
    %vm1866 = vweird.f32 %v1860
    %vm1867 = vmor %vm1865, %vm1866
    %v1868 = vsel %vm1867, %v1860, %v1864
    %v1869 = vand.u32 2147483647, %v1814
    %vm1870 = vcmp.eq.f32.partialorder %v1869, 8.507059e+37
    %v1871 = vand.u32 %v1814, 2147483648
    %v1872 = vor.u32 1.1754944e-38, %v1871
    %v1873 = vsel %vm1870, %v1872, %v1868
    %v1874 = vmul.f32 1.0, %v1873
    %v1875 = vmul.f32 %v1749, 0.0
    %v1876 = vmul.f32 %v1764, 0.0
    %v1877 = vmul.f32 %v1779, 0.0
    %v1878 = vmul.f32 %v1794, 0.0
    %v1879 = vmul.f32 %v1673, %v1795
    %v1880 = vmul.f32 %v1688, %v1796
    %v1881 = vmul.f32 %v1703, %v1797
    %v1882 = vmul.f32 %v1718, %v1798
    %v1883 = vadd.f32 %v1875, %v1879
    %v1884 = vadd.f32 %v1876, %v1880
    %v1885 = vadd.f32 %v1877, %v1881
    %v1886 = vadd.f32 %v1878, %v1882
    %v1887 = vtanh.pop %v1883
    %v1888 = vtanh.pop %v1884
    %v1889 = vtanh.pop %v1885
    %v1890 = vtanh.pop %v1886
    %v1891 = vmul.f32 %v1829, %v1887
    %v1892 = vmul.f32 %v1844, %v1888
    %v1893 = vmul.f32 %v1859, %v1889
    %v1894 = vmul.f32 %v1874, %v1890
    %v1896 = vsel %vm1507, %v1891, 0
    %v1899 = vsel %vm1507, %v1892, 0
    %v1902 = vsel %vm1507, %v1893, 0
    %v1905 = vsel %vm1507, %v1894, 0
    %1907 = vmatpush.msra.mxu0 0.0
    %1908 = vmatpush.msra.mxu0 0.0
    %1909 = vmatpush.msra.mxu0 0.0
    %1910 = vmatpush.msra.mxu0 0.0
    %1911 = vmatpush.msra.mxu0 0.0
    %1912 = vmatpush.msra.mxu0 0.0
    %1913 = vmatpush.msra.mxu0 0.0
    %1914 = vmatpush.msra.mxu0 0.0
    %1915 = vmatpush.msra.mxu0 0.0
    %1916 = vmatpush.msra.mxu0 0.0
    %1917 = vmatpush.msra.mxu0 0.0
    %1918 = vmatpush.msra.mxu0 0.0
    %1919 = vmatpush.msra.mxu0 %v1491
    %1920 = vmatpush.msra.mxu0 %v1490
    %1921 = vmatpush.msra.mxu0 %v1489
    %1922 = vmatpush.msra.mxu0 %v1488
    %1923 = vmatmul.f32.gmra.mxu0 %v1896
    %v1924 = vpop.f32.mrf.mxu0
    %v1925 = vadd.f32 0.0, %v1924
    %1926 = vmatmul.f32.gmra.mxu0 %v1899
    %v1927 = vpop.f32.mrf.mxu0
    %v1928 = vadd.f32 0.0, %v1927
    %1929 = vmatmul.f32.gmra.mxu0 %v1902
    %v1930 = vpop.f32.mrf.mxu0
    %v1931 = vadd.f32 0.0, %v1930
    %1932 = vmatmul.f32.gmra.mxu0 %v1905
    %v1933 = vpop.f32.mrf.mxu0
    %v1934 = vadd.f32 0.0, %v1933
    %1935 = vdwg.mxu0
    %v1936 = vadd.f32 %v1234, %v1925
    %v1937 = vadd.f32 %v1237, %v1928
    %v1938 = vadd.f32 %v1240, %v1931
    %v1939 = vadd.f32 %v1243, %v1934
    %1940 = vmatpush.msra.mxu0 0.0
    %1941 = vmatpush.msra.mxu0 0.0
    %1942 = vmatpush.msra.mxu0 0.0
    %1943 = vmatpush.msra.mxu0 0.0
    %1944 = vmatpush.msra.mxu0 0.0
    %1945 = vmatpush.msra.mxu0 0.0
    %1946 = vmatpush.msra.mxu0 0.0
    %1947 = vmatpush.msra.mxu0 0.0
    %1948 = vmatpush.msra.mxu0 0.0
    %1949 = vmatpush.msra.mxu0 0.0
    %1950 = vmatpush.msra.mxu0 0.0
    %1951 = vmatpush.msra.mxu0 0.0
    %1952 = vmatpush.msra.mxu0 %v1496
    %1953 = vmatpush.msra.mxu0 %v1495
    %1954 = vmatpush.msra.mxu0 %v1494
    %1955 = vmatpush.msra.mxu0 %v1493
    %1956 = vmatmul.f32.gmra.mxu0 %v1896
    %v1957 = vpop.f32.mrf.mxu0
    %v1958 = vadd.f32 0.0, %v1957
    %1959 = vmatmul.f32.gmra.mxu0 %v1899
    %v1960 = vpop.f32.mrf.mxu0
    %v1961 = vadd.f32 0.0, %v1960
    %1962 = vmatmul.f32.gmra.mxu0 %v1902
    %v1963 = vpop.f32.mrf.mxu0
    %v1964 = vadd.f32 0.0, %v1963
    %1965 = vmatmul.f32.gmra.mxu0 %v1905
    %v1966 = vpop.f32.mrf.mxu0
    %v1967 = vadd.f32 0.0, %v1966
    %1968 = vdwg.mxu0
    %v1969 = vadd.f32 %v1307, %v1958
    %v1970 = vadd.f32 %v1310, %v1961
    %v1971 = vadd.f32 %v1313, %v1964
    %v1972 = vadd.f32 %v1316, %v1967
    %1973 = vmatpush.msra.mxu0 0.0
    %1974 = vmatpush.msra.mxu0 0.0
    %1975 = vmatpush.msra.mxu0 0.0
    %1976 = vmatpush.msra.mxu0 0.0
    %1977 = vmatpush.msra.mxu0 0.0
    %1978 = vmatpush.msra.mxu0 0.0
    %1979 = vmatpush.msra.mxu0 0.0
    %1980 = vmatpush.msra.mxu0 0.0
    %1981 = vmatpush.msra.mxu0 0.0
    %1982 = vmatpush.msra.mxu0 0.0
    %1983 = vmatpush.msra.mxu0 0.0
    %1984 = vmatpush.msra.mxu0 0.0
    %1985 = vmatpush.msra.mxu0 %v1501
    %1986 = vmatpush.msra.mxu0 %v1500
    %1987 = vmatpush.msra.mxu0 %v1499
    %1988 = vmatpush.msra.mxu0 %v1498
    %1989 = vmatmul.f32.gmra.mxu0 %v1896
    %v1990 = vpop.f32.mrf.mxu0
    %v1991 = vadd.f32 0.0, %v1990
    %1992 = vmatmul.f32.gmra.mxu0 %v1899
    %v1993 = vpop.f32.mrf.mxu0
    %v1994 = vadd.f32 0.0, %v1993
    %1995 = vmatmul.f32.gmra.mxu0 %v1902
    %v1996 = vpop.f32.mrf.mxu0
    %v1997 = vadd.f32 0.0, %v1996
    %1998 = vmatmul.f32.gmra.mxu0 %v1905
    %v1999 = vpop.f32.mrf.mxu0
    %v2000 = vadd.f32 0.0, %v1999
    %2001 = vdwg.mxu0
    %v2002 = vadd.f32 %v1380, %v1991
    %v2003 = vadd.f32 %v1383, %v1994
    %v2004 = vadd.f32 %v1386, %v1997
    %v2005 = vadd.f32 %v1389, %v2000
    %2006 = vmatpush.msra.mxu0 0.0
    %2007 = vmatpush.msra.mxu0 0.0
    %2008 = vmatpush.msra.mxu0 0.0
    %2009 = vmatpush.msra.mxu0 0.0
    %2010 = vmatpush.msra.mxu0 0.0
    %2011 = vmatpush.msra.mxu0 0.0
    %2012 = vmatpush.msra.mxu0 0.0
    %2013 = vmatpush.msra.mxu0 0.0
    %2014 = vmatpush.msra.mxu0 0.0
    %2015 = vmatpush.msra.mxu0 0.0
    %2016 = vmatpush.msra.mxu0 0.0
    %2017 = vmatpush.msra.mxu0 0.0
    %2018 = vmatpush.msra.mxu0 %v1506
    %2019 = vmatpush.msra.mxu0 %v1505
    %2020 = vmatpush.msra.mxu0 %v1504
    %2021 = vmatpush.msra.mxu0 %v1503
    %2022 = vmatmul.f32.gmra.mxu0 %v1896
    %v2023 = vpop.f32.mrf.mxu0
    %v2024 = vadd.f32 0.0, %v2023
    %2025 = vmatmul.f32.gmra.mxu0 %v1899
    %v2026 = vpop.f32.mrf.mxu0
    %v2027 = vadd.f32 0.0, %v2026
    %2028 = vmatmul.f32.gmra.mxu0 %v1902
    %v2029 = vpop.f32.mrf.mxu0
    %v2030 = vadd.f32 0.0, %v2029
    %2031 = vmatmul.f32.gmra.mxu0 %v1905
    %v2032 = vpop.f32.mrf.mxu0
    %v2033 = vadd.f32 0.0, %v2032
    %2034 = vdwg.mxu0
    %v2035 = vadd.f32 %v1453, %v2024
    %v2036 = vadd.f32 %v1456, %v2027
    %v2037 = vadd.f32 %v1459, %v2030
    %v2038 = vadd.f32 %v1462, %v2033
    %v2039 = vxor.u32 %v1936, 2147483648
    %v2040 = vxor.u32 %v1937, 2147483648
    %v2041 = vxor.u32 %v1938, 2147483648
    %v2042 = vxor.u32 %v1939, 2147483648
    %v2043 = vmul.f32 %v2039, 1.442695
    %v2044 = vpow.pop %v2043
    %v2045 = vmul.f32 %v2040, 1.442695
    %v2046 = vpow.pop %v2045
    %v2047 = vmul.f32 %v2041, 1.442695
    %v2048 = vpow.pop %v2047
    %v2049 = vmul.f32 %v2042, 1.442695
    %v2050 = vpow.pop %v2049
    %v2051 = vadd.f32 %v2044, 1.0
    %v2052 = vadd.f32 %v2046, 1.0
    %v2053 = vadd.f32 %v2048, 1.0
    %v2054 = vadd.f32 %v2050, 1.0
    %v2055 = vrcp.pop %v2051
    %v2056 = vmul.f32 %v2051, %v2055
    %v2057 = vsub.f32 1.0, %v2056
    %v2058 = vmul.f32 %v2055, %v2057
    %v2059 = vadd.f32 %v2055, %v2058
    %vm2060 = vweird.f32 %v2051
    %vm2061 = vweird.f32 %v2055
    %vm2062 = vmor %vm2060, %vm2061
    %v2063 = vsel %vm2062, %v2055, %v2059
    %v2064 = vand.u32 2147483647, %v2051
    %vm2065 = vcmp.eq.f32.partialorder %v2064, 8.507059e+37
    %v2066 = vand.u32 %v2051, 2147483648
    %v2067 = vor.u32 1.1754944e-38, %v2066
    %v2068 = vsel %vm2065, %v2067, %v2063
    %v2069 = vmul.f32 1.0, %v2068
    %v2070 = vrcp.pop %v2052
    %v2071 = vmul.f32 %v2052, %v2070
    %v2072 = vsub.f32 1.0, %v2071
    %v2073 = vmul.f32 %v2070, %v2072
    %v2074 = vadd.f32 %v2070, %v2073
    %vm2075 = vweird.f32 %v2052
    %vm2076 = vweird.f32 %v2070
    %vm2077 = vmor %vm2075, %vm2076
    %v2078 = vsel %vm2077, %v2070, %v2074
    %v2079 = vand.u32 2147483647, %v2052
    %vm2080 = vcmp.eq.f32.partialorder %v2079, 8.507059e+37
    %v2081 = vand.u32 %v2052, 2147483648
    %v2082 = vor.u32 1.1754944e-38, %v2081
    %v2083 = vsel %vm2080, %v2082, %v2078
    %v2084 = vmul.f32 1.0, %v2083
    %v2085 = vrcp.pop %v2053
    %v2086 = vmul.f32 %v2053, %v2085
    %v2087 = vsub.f32 1.0, %v2086
    %v2088 = vmul.f32 %v2085, %v2087
    %v2089 = vadd.f32 %v2085, %v2088
    %vm2090 = vweird.f32 %v2053
    %vm2091 = vweird.f32 %v2085
    %vm2092 = vmor %vm2090, %vm2091
    %v2093 = vsel %vm2092, %v2085, %v2089
    %v2094 = vand.u32 2147483647, %v2053
    %vm2095 = vcmp.eq.f32.partialorder %v2094, 8.507059e+37
    %v2096 = vand.u32 %v2053, 2147483648
    %v2097 = vor.u32 1.1754944e-38, %v2096
    %v2098 = vsel %vm2095, %v2097, %v2093
    %v2099 = vmul.f32 1.0, %v2098
    %v2100 = vrcp.pop %v2054
    %v2101 = vmul.f32 %v2054, %v2100
    %v2102 = vsub.f32 1.0, %v2101
    %v2103 = vmul.f32 %v2100, %v2102
    %v2104 = vadd.f32 %v2100, %v2103
    %vm2105 = vweird.f32 %v2054
    %vm2106 = vweird.f32 %v2100
    %vm2107 = vmor %vm2105, %vm2106
    %v2108 = vsel %vm2107, %v2100, %v2104
    %v2109 = vand.u32 2147483647, %v2054
    %vm2110 = vcmp.eq.f32.partialorder %v2109, 8.507059e+37
    %v2111 = vand.u32 %v2054, 2147483648
    %v2112 = vor.u32 1.1754944e-38, %v2111
    %v2113 = vsel %vm2110, %v2112, %v2108
    %v2114 = vmul.f32 1.0, %v2113
    %v2115 = vxor.u32 %v1969, 2147483648
    %v2116 = vxor.u32 %v1970, 2147483648
    %v2117 = vxor.u32 %v1971, 2147483648
    %v2118 = vxor.u32 %v1972, 2147483648
    %v2119 = vmul.f32 %v2115, 1.442695
    %v2120 = vpow.pop %v2119
    %v2121 = vmul.f32 %v2116, 1.442695
    %v2122 = vpow.pop %v2121
    %v2123 = vmul.f32 %v2117, 1.442695
    %v2124 = vpow.pop %v2123
    %v2125 = vmul.f32 %v2118, 1.442695
    %v2126 = vpow.pop %v2125
    %v2127 = vadd.f32 %v2120, 1.0
    %v2128 = vadd.f32 %v2122, 1.0
    %v2129 = vadd.f32 %v2124, 1.0
    %v2130 = vadd.f32 %v2126, 1.0
    %v2131 = vrcp.pop %v2127
    %v2132 = vmul.f32 %v2127, %v2131
    %v2133 = vsub.f32 1.0, %v2132
    %v2134 = vmul.f32 %v2131, %v2133
    %v2135 = vadd.f32 %v2131, %v2134
    %vm2136 = vweird.f32 %v2127
    %vm2137 = vweird.f32 %v2131
    %vm2138 = vmor %vm2136, %vm2137
    %v2139 = vsel %vm2138, %v2131, %v2135
    %v2140 = vand.u32 2147483647, %v2127
    %vm2141 = vcmp.eq.f32.partialorder %v2140, 8.507059e+37
    %v2142 = vand.u32 %v2127, 2147483648
    %v2143 = vor.u32 1.1754944e-38, %v2142
    %v2144 = vsel %vm2141, %v2143, %v2139
    %v2145 = vmul.f32 1.0, %v2144
    %v2146 = vrcp.pop %v2128
    %v2147 = vmul.f32 %v2128, %v2146
    %v2148 = vsub.f32 1.0, %v2147
    %v2149 = vmul.f32 %v2146, %v2148
    %v2150 = vadd.f32 %v2146, %v2149
    %vm2151 = vweird.f32 %v2128
    %vm2152 = vweird.f32 %v2146
    %vm2153 = vmor %vm2151, %vm2152
    %v2154 = vsel %vm2153, %v2146, %v2150
    %v2155 = vand.u32 2147483647, %v2128
    %vm2156 = vcmp.eq.f32.partialorder %v2155, 8.507059e+37
    %v2157 = vand.u32 %v2128, 2147483648
    %v2158 = vor.u32 1.1754944e-38, %v2157
    %v2159 = vsel %vm2156, %v2158, %v2154
    %v2160 = vmul.f32 1.0, %v2159
    %v2161 = vrcp.pop %v2129
    %v2162 = vmul.f32 %v2129, %v2161
    %v2163 = vsub.f32 1.0, %v2162
    %v2164 = vmul.f32 %v2161, %v2163
    %v2165 = vadd.f32 %v2161, %v2164
    %vm2166 = vweird.f32 %v2129
    %vm2167 = vweird.f32 %v2161
    %vm2168 = vmor %vm2166, %vm2167
    %v2169 = vsel %vm2168, %v2161, %v2165
    %v2170 = vand.u32 2147483647, %v2129
    %vm2171 = vcmp.eq.f32.partialorder %v2170, 8.507059e+37
    %v2172 = vand.u32 %v2129, 2147483648
    %v2173 = vor.u32 1.1754944e-38, %v2172
    %v2174 = vsel %vm2171, %v2173, %v2169
    %v2175 = vmul.f32 1.0, %v2174
    %v2176 = vrcp.pop %v2130
    %v2177 = vmul.f32 %v2130, %v2176
    %v2178 = vsub.f32 1.0, %v2177
    %v2179 = vmul.f32 %v2176, %v2178
    %v2180 = vadd.f32 %v2176, %v2179
    %vm2181 = vweird.f32 %v2130
    %vm2182 = vweird.f32 %v2176
    %vm2183 = vmor %vm2181, %vm2182
    %v2184 = vsel %vm2183, %v2176, %v2180
    %v2185 = vand.u32 2147483647, %v2130
    %vm2186 = vcmp.eq.f32.partialorder %v2185, 8.507059e+37
    %v2187 = vand.u32 %v2130, 2147483648
    %v2188 = vor.u32 1.1754944e-38, %v2187
    %v2189 = vsel %vm2186, %v2188, %v2184
    %v2190 = vmul.f32 1.0, %v2189
    %v2191 = vtanh.pop %v2002
    %v2192 = vtanh.pop %v2003
    %v2193 = vtanh.pop %v2004
    %v2194 = vtanh.pop %v2005
    %v2195 = vxor.u32 %v2035, 2147483648
    %v2196 = vxor.u32 %v2036, 2147483648
    %v2197 = vxor.u32 %v2037, 2147483648
    %v2198 = vxor.u32 %v2038, 2147483648
    %v2199 = vmul.f32 %v2195, 1.442695
    %v2200 = vpow.pop %v2199
    %v2201 = vmul.f32 %v2196, 1.442695
    %v2202 = vpow.pop %v2201
    %v2203 = vmul.f32 %v2197, 1.442695
    %v2204 = vpow.pop %v2203
    %v2205 = vmul.f32 %v2198, 1.442695
    %v2206 = vpow.pop %v2205
    %v2207 = vadd.f32 %v2200, 1.0
    %v2208 = vadd.f32 %v2202, 1.0
    %v2209 = vadd.f32 %v2204, 1.0
    %v2210 = vadd.f32 %v2206, 1.0
    %v2211 = vrcp.pop %v2207
    %v2212 = vmul.f32 %v2207, %v2211
    %v2213 = vsub.f32 1.0, %v2212
    %v2214 = vmul.f32 %v2211, %v2213
    %v2215 = vadd.f32 %v2211, %v2214
    %vm2216 = vweird.f32 %v2207
    %vm2217 = vweird.f32 %v2211
    %vm2218 = vmor %vm2216, %vm2217
    %v2219 = vsel %vm2218, %v2211, %v2215
    %v2220 = vand.u32 2147483647, %v2207
    %vm2221 = vcmp.eq.f32.partialorder %v2220, 8.507059e+37
    %v2222 = vand.u32 %v2207, 2147483648
    %v2223 = vor.u32 1.1754944e-38, %v2222
    %v2224 = vsel %vm2221, %v2223, %v2219
    %v2225 = vmul.f32 1.0, %v2224
    %v2226 = vrcp.pop %v2208
    %v2227 = vmul.f32 %v2208, %v2226
    %v2228 = vsub.f32 1.0, %v2227
    %v2229 = vmul.f32 %v2226, %v2228
    %v2230 = vadd.f32 %v2226, %v2229
    %vm2231 = vweird.f32 %v2208
    %vm2232 = vweird.f32 %v2226
    %vm2233 = vmor %vm2231, %vm2232
    %v2234 = vsel %vm2233, %v2226, %v2230
    %v2235 = vand.u32 2147483647, %v2208
    %vm2236 = vcmp.eq.f32.partialorder %v2235, 8.507059e+37
    %v2237 = vand.u32 %v2208, 2147483648
    %v2238 = vor.u32 1.1754944e-38, %v2237
    %v2239 = vsel %vm2236, %v2238, %v2234
    %v2240 = vmul.f32 1.0, %v2239
    %v2241 = vrcp.pop %v2209
    %v2242 = vmul.f32 %v2209, %v2241
    %v2243 = vsub.f32 1.0, %v2242
    %v2244 = vmul.f32 %v2241, %v2243
    %v2245 = vadd.f32 %v2241, %v2244
    %vm2246 = vweird.f32 %v2209
    %vm2247 = vweird.f32 %v2241
    %vm2248 = vmor %vm2246, %vm2247
    %v2249 = vsel %vm2248, %v2241, %v2245
    %v2250 = vand.u32 2147483647, %v2209
    %vm2251 = vcmp.eq.f32.partialorder %v2250, 8.507059e+37
    %v2252 = vand.u32 %v2209, 2147483648
    %v2253 = vor.u32 1.1754944e-38, %v2252
    %v2254 = vsel %vm2251, %v2253, %v2249
    %v2255 = vmul.f32 1.0, %v2254
    %v2256 = vrcp.pop %v2210
    %v2257 = vmul.f32 %v2210, %v2256
    %v2258 = vsub.f32 1.0, %v2257
    %v2259 = vmul.f32 %v2256, %v2258
    %v2260 = vadd.f32 %v2256, %v2259
    %vm2261 = vweird.f32 %v2210
    %vm2262 = vweird.f32 %v2256
    %vm2263 = vmor %vm2261, %vm2262
    %v2264 = vsel %vm2263, %v2256, %v2260
    %v2265 = vand.u32 2147483647, %v2210
    %vm2266 = vcmp.eq.f32.partialorder %v2265, 8.507059e+37
    %v2267 = vand.u32 %v2210, 2147483648
    %v2268 = vor.u32 1.1754944e-38, %v2267
    %v2269 = vsel %vm2266, %v2268, %v2264
    %v2270 = vmul.f32 1.0, %v2269
    %v2271 = vmul.f32 %v2145, %v1883
    %v2272 = vmul.f32 %v2160, %v1884
    %v2273 = vmul.f32 %v2175, %v1885
    %v2274 = vmul.f32 %v2190, %v1886
    %v2275 = vmul.f32 %v2069, %v2191
    %v2276 = vmul.f32 %v2084, %v2192
    %v2277 = vmul.f32 %v2099, %v2193
    %v2278 = vmul.f32 %v2114, %v2194
    %v2279 = vadd.f32 %v2271, %v2275
    %v2280 = vadd.f32 %v2272, %v2276
    %v2281 = vadd.f32 %v2273, %v2277
    %v2282 = vadd.f32 %v2274, %v2278
    %v2283 = vtanh.pop %v2279
    %v2284 = vtanh.pop %v2280
    %v2285 = vtanh.pop %v2281
    %v2286 = vtanh.pop %v2282
    %v2287 = vmul.f32 %v2225, %v2283
    %v2288 = vmul.f32 %v2240, %v2284
    %v2289 = vmul.f32 %v2255, %v2285
    %v2290 = vmul.f32 %v2270, %v2286
    %v2292 = vsel %vm1507, %v2287, 0
    %v2295 = vsel %vm1507, %v2288, 0
    %v2298 = vsel %vm1507, %v2289, 0
    %v2301 = vsel %vm1507, %v2290, 0
    %2303 = vmatpush.msra.mxu0 0.0
    %2304 = vmatpush.msra.mxu0 0.0
    %2305 = vmatpush.msra.mxu0 0.0
    %2306 = vmatpush.msra.mxu0 0.0
    %2307 = vmatpush.msra.mxu0 0.0
    %2308 = vmatpush.msra.mxu0 0.0
    %2309 = vmatpush.msra.mxu0 0.0
    %2310 = vmatpush.msra.mxu0 0.0
    %2311 = vmatpush.msra.mxu0 0.0
    %2312 = vmatpush.msra.mxu0 0.0
    %2313 = vmatpush.msra.mxu0 0.0
    %2314 = vmatpush.msra.mxu0 0.0
    %2315 = vmatpush.msra.mxu0 %v1491
    %2316 = vmatpush.msra.mxu0 %v1490
    %2317 = vmatpush.msra.mxu0 %v1489
    %2318 = vmatpush.msra.mxu0 %v1488
    %2319 = vmatmul.f32.gmra.mxu0 %v2292
    %v2320 = vpop.f32.mrf.mxu0
    %v2321 = vadd.f32 0.0, %v2320
    %2322 = vmatmul.f32.gmra.mxu0 %v2295
    %v2323 = vpop.f32.mrf.mxu0
    %v2324 = vadd.f32 0.0, %v2323
    %2325 = vmatmul.f32.gmra.mxu0 %v2298
    %v2326 = vpop.f32.mrf.mxu0
    %v2327 = vadd.f32 0.0, %v2326
    %2328 = vmatmul.f32.gmra.mxu0 %v2301
    %v2329 = vpop.f32.mrf.mxu0
    %v2330 = vadd.f32 0.0, %v2329
    %2331 = vdwg.mxu0
    %v2332 = vadd.f32 %v1246, %v2321
    %v2333 = vadd.f32 %v1249, %v2324
    %v2334 = vadd.f32 %v1252, %v2327
    %v2335 = vadd.f32 %v1255, %v2330
    %2336 = vmatpush.msra.mxu0 0.0
    %2337 = vmatpush.msra.mxu0 0.0
    %2338 = vmatpush.msra.mxu0 0.0
    %2339 = vmatpush.msra.mxu0 0.0
    %2340 = vmatpush.msra.mxu0 0.0
    %2341 = vmatpush.msra.mxu0 0.0
    %2342 = vmatpush.msra.mxu0 0.0
    %2343 = vmatpush.msra.mxu0 0.0
    %2344 = vmatpush.msra.mxu0 0.0
    %2345 = vmatpush.msra.mxu0 0.0
    %2346 = vmatpush.msra.mxu0 0.0
    %2347 = vmatpush.msra.mxu0 0.0
    %2348 = vmatpush.msra.mxu0 %v1496
    %2349 = vmatpush.msra.mxu0 %v1495
    %2350 = vmatpush.msra.mxu0 %v1494
    %2351 = vmatpush.msra.mxu0 %v1493
    %2352 = vmatmul.f32.gmra.mxu0 %v2292
    %v2353 = vpop.f32.mrf.mxu0
    %v2354 = vadd.f32 0.0, %v2353
    %2355 = vmatmul.f32.gmra.mxu0 %v2295
    %v2356 = vpop.f32.mrf.mxu0
    %v2357 = vadd.f32 0.0, %v2356
    %2358 = vmatmul.f32.gmra.mxu0 %v2298
    %v2359 = vpop.f32.mrf.mxu0
    %v2360 = vadd.f32 0.0, %v2359
    %2361 = vmatmul.f32.gmra.mxu0 %v2301
    %v2362 = vpop.f32.mrf.mxu0
    %v2363 = vadd.f32 0.0, %v2362
    %2364 = vdwg.mxu0
    %v2365 = vadd.f32 %v1319, %v2354
    %v2366 = vadd.f32 %v1322, %v2357
    %v2367 = vadd.f32 %v1325, %v2360
    %v2368 = vadd.f32 %v1328, %v2363
    %2369 = vmatpush.msra.mxu0 0.0
    %2370 = vmatpush.msra.mxu0 0.0
    %2371 = vmatpush.msra.mxu0 0.0
    %2372 = vmatpush.msra.mxu0 0.0
    %2373 = vmatpush.msra.mxu0 0.0
    %2374 = vmatpush.msra.mxu0 0.0
    %2375 = vmatpush.msra.mxu0 0.0
    %2376 = vmatpush.msra.mxu0 0.0
    %2377 = vmatpush.msra.mxu0 0.0
    %2378 = vmatpush.msra.mxu0 0.0
    %2379 = vmatpush.msra.mxu0 0.0
    %2380 = vmatpush.msra.mxu0 0.0
    %2381 = vmatpush.msra.mxu0 %v1501
    %2382 = vmatpush.msra.mxu0 %v1500
    %2383 = vmatpush.msra.mxu0 %v1499
    %2384 = vmatpush.msra.mxu0 %v1498
    %2385 = vmatmul.f32.gmra.mxu0 %v2292
    %v2386 = vpop.f32.mrf.mxu0
    %v2387 = vadd.f32 0.0, %v2386
    %2388 = vmatmul.f32.gmra.mxu0 %v2295
    %v2389 = vpop.f32.mrf.mxu0
    %v2390 = vadd.f32 0.0, %v2389
    %2391 = vmatmul.f32.gmra.mxu0 %v2298
    %v2392 = vpop.f32.mrf.mxu0
    %v2393 = vadd.f32 0.0, %v2392
    %2394 = vmatmul.f32.gmra.mxu0 %v2301
    %v2395 = vpop.f32.mrf.mxu0
    %v2396 = vadd.f32 0.0, %v2395
    %2397 = vdwg.mxu0
    %v2398 = vadd.f32 %v1392, %v2387
    %v2399 = vadd.f32 %v1395, %v2390
    %v2400 = vadd.f32 %v1398, %v2393
    %v2401 = vadd.f32 %v1401, %v2396
    %2402 = vmatpush.msra.mxu0 0.0
    %2403 = vmatpush.msra.mxu0 0.0
    %2404 = vmatpush.msra.mxu0 0.0
    %2405 = vmatpush.msra.mxu0 0.0
    %2406 = vmatpush.msra.mxu0 0.0
    %2407 = vmatpush.msra.mxu0 0.0
    %2408 = vmatpush.msra.mxu0 0.0
    %2409 = vmatpush.msra.mxu0 0.0
    %2410 = vmatpush.msra.mxu0 0.0
    %2411 = vmatpush.msra.mxu0 0.0
    %2412 = vmatpush.msra.mxu0 0.0
    %2413 = vmatpush.msra.mxu0 0.0
    %2414 = vmatpush.msra.mxu0 %v1506
    %2415 = vmatpush.msra.mxu0 %v1505
    %2416 = vmatpush.msra.mxu0 %v1504
    %2417 = vmatpush.msra.mxu0 %v1503
    %2418 = vmatmul.f32.gmra.mxu0 %v2292
    %v2419 = vpop.f32.mrf.mxu0
    %v2420 = vadd.f32 0.0, %v2419
    %2421 = vmatmul.f32.gmra.mxu0 %v2295
    %v2422 = vpop.f32.mrf.mxu0
    %v2423 = vadd.f32 0.0, %v2422
    %2424 = vmatmul.f32.gmra.mxu0 %v2298
    %v2425 = vpop.f32.mrf.mxu0
    %v2426 = vadd.f32 0.0, %v2425
    %2427 = vmatmul.f32.gmra.mxu0 %v2301
    %v2428 = vpop.f32.mrf.mxu0
    %v2429 = vadd.f32 0.0, %v2428
    %2430 = vdwg.mxu0
    %v2431 = vadd.f32 %v1465, %v2420
    %v2432 = vadd.f32 %v1468, %v2423
    %v2433 = vadd.f32 %v1471, %v2426
    %v2434 = vadd.f32 %v1474, %v2429
    %v2435 = vxor.u32 %v2332, 2147483648
    %v2436 = vxor.u32 %v2333, 2147483648
    %v2437 = vxor.u32 %v2334, 2147483648
    %v2438 = vxor.u32 %v2335, 2147483648
    %v2439 = vmul.f32 %v2435, 1.442695
    %v2440 = vpow.pop %v2439
    %v2441 = vmul.f32 %v2436, 1.442695
    %v2442 = vpow.pop %v2441
    %v2443 = vmul.f32 %v2437, 1.442695
    %v2444 = vpow.pop %v2443
    %v2445 = vmul.f32 %v2438, 1.442695
    %v2446 = vpow.pop %v2445
    %v2447 = vadd.f32 %v2440, 1.0
    %v2448 = vadd.f32 %v2442, 1.0
    %v2449 = vadd.f32 %v2444, 1.0
    %v2450 = vadd.f32 %v2446, 1.0
    %v2451 = vrcp.pop %v2447
    %v2452 = vmul.f32 %v2447, %v2451
    %v2453 = vsub.f32 1.0, %v2452
    %v2454 = vmul.f32 %v2451, %v2453
    %v2455 = vadd.f32 %v2451, %v2454
    %vm2456 = vweird.f32 %v2447
    %vm2457 = vweird.f32 %v2451
    %vm2458 = vmor %vm2456, %vm2457
    %v2459 = vsel %vm2458, %v2451, %v2455
    %v2460 = vand.u32 2147483647, %v2447
    %vm2461 = vcmp.eq.f32.partialorder %v2460, 8.507059e+37
    %v2462 = vand.u32 %v2447, 2147483648
    %v2463 = vor.u32 1.1754944e-38, %v2462
    %v2464 = vsel %vm2461, %v2463, %v2459
    %v2465 = vmul.f32 1.0, %v2464
    %v2466 = vrcp.pop %v2448
    %v2467 = vmul.f32 %v2448, %v2466
    %v2468 = vsub.f32 1.0, %v2467
    %v2469 = vmul.f32 %v2466, %v2468
    %v2470 = vadd.f32 %v2466, %v2469
    %vm2471 = vweird.f32 %v2448
    %vm2472 = vweird.f32 %v2466
    %vm2473 = vmor %vm2471, %vm2472
    %v2474 = vsel %vm2473, %v2466, %v2470
    %v2475 = vand.u32 2147483647, %v2448
    %vm2476 = vcmp.eq.f32.partialorder %v2475, 8.507059e+37
    %v2477 = vand.u32 %v2448, 2147483648
    %v2478 = vor.u32 1.1754944e-38, %v2477
    %v2479 = vsel %vm2476, %v2478, %v2474
    %v2480 = vmul.f32 1.0, %v2479
    %v2481 = vrcp.pop %v2449
    %v2482 = vmul.f32 %v2449, %v2481
    %v2483 = vsub.f32 1.0, %v2482
    %v2484 = vmul.f32 %v2481, %v2483
    %v2485 = vadd.f32 %v2481, %v2484
    %vm2486 = vweird.f32 %v2449
    %vm2487 = vweird.f32 %v2481
    %vm2488 = vmor %vm2486, %vm2487
    %v2489 = vsel %vm2488, %v2481, %v2485
    %v2490 = vand.u32 2147483647, %v2449
    %vm2491 = vcmp.eq.f32.partialorder %v2490, 8.507059e+37
    %v2492 = vand.u32 %v2449, 2147483648
    %v2493 = vor.u32 1.1754944e-38, %v2492
    %v2494 = vsel %vm2491, %v2493, %v2489
    %v2495 = vmul.f32 1.0, %v2494
    %v2496 = vrcp.pop %v2450
    %v2497 = vmul.f32 %v2450, %v2496
    %v2498 = vsub.f32 1.0, %v2497
    %v2499 = vmul.f32 %v2496, %v2498
    %v2500 = vadd.f32 %v2496, %v2499
    %vm2501 = vweird.f32 %v2450
    %vm2502 = vweird.f32 %v2496
    %vm2503 = vmor %vm2501, %vm2502
    %v2504 = vsel %vm2503, %v2496, %v2500
    %v2505 = vand.u32 2147483647, %v2450
    %vm2506 = vcmp.eq.f32.partialorder %v2505, 8.507059e+37
    %v2507 = vand.u32 %v2450, 2147483648
    %v2508 = vor.u32 1.1754944e-38, %v2507
    %v2509 = vsel %vm2506, %v2508, %v2504
    %v2510 = vmul.f32 1.0, %v2509
    %v2511 = vxor.u32 %v2365, 2147483648
    %v2512 = vxor.u32 %v2366, 2147483648
    %v2513 = vxor.u32 %v2367, 2147483648
    %v2514 = vxor.u32 %v2368, 2147483648
    %v2515 = vmul.f32 %v2511, 1.442695
    %v2516 = vpow.pop %v2515
    %v2517 = vmul.f32 %v2512, 1.442695
    %v2518 = vpow.pop %v2517
    %v2519 = vmul.f32 %v2513, 1.442695
    %v2520 = vpow.pop %v2519
    %v2521 = vmul.f32 %v2514, 1.442695
    %v2522 = vpow.pop %v2521
    %v2523 = vadd.f32 %v2516, 1.0
    %v2524 = vadd.f32 %v2518, 1.0
    %v2525 = vadd.f32 %v2520, 1.0
    %v2526 = vadd.f32 %v2522, 1.0
    %v2527 = vrcp.pop %v2523
    %v2528 = vmul.f32 %v2523, %v2527
    %v2529 = vsub.f32 1.0, %v2528
    %v2530 = vmul.f32 %v2527, %v2529
    %v2531 = vadd.f32 %v2527, %v2530
    %vm2532 = vweird.f32 %v2523
    %vm2533 = vweird.f32 %v2527
    %vm2534 = vmor %vm2532, %vm2533
    %v2535 = vsel %vm2534, %v2527, %v2531
    %v2536 = vand.u32 2147483647, %v2523
    %vm2537 = vcmp.eq.f32.partialorder %v2536, 8.507059e+37
    %v2538 = vand.u32 %v2523, 2147483648
    %v2539 = vor.u32 1.1754944e-38, %v2538
    %v2540 = vsel %vm2537, %v2539, %v2535
    %v2541 = vmul.f32 1.0, %v2540
    %v2542 = vrcp.pop %v2524
    %v2543 = vmul.f32 %v2524, %v2542
    %v2544 = vsub.f32 1.0, %v2543
    %v2545 = vmul.f32 %v2542, %v2544
    %v2546 = vadd.f32 %v2542, %v2545
    %vm2547 = vweird.f32 %v2524
    %vm2548 = vweird.f32 %v2542
    %vm2549 = vmor %vm2547, %vm2548
    %v2550 = vsel %vm2549, %v2542, %v2546
    %v2551 = vand.u32 2147483647, %v2524
    %vm2552 = vcmp.eq.f32.partialorder %v2551, 8.507059e+37
    %v2553 = vand.u32 %v2524, 2147483648
    %v2554 = vor.u32 1.1754944e-38, %v2553
    %v2555 = vsel %vm2552, %v2554, %v2550
    %v2556 = vmul.f32 1.0, %v2555
    %v2557 = vrcp.pop %v2525
    %v2558 = vmul.f32 %v2525, %v2557
    %v2559 = vsub.f32 1.0, %v2558
    %v2560 = vmul.f32 %v2557, %v2559
    %v2561 = vadd.f32 %v2557, %v2560
    %vm2562 = vweird.f32 %v2525
    %vm2563 = vweird.f32 %v2557
    %vm2564 = vmor %vm2562, %vm2563
    %v2565 = vsel %vm2564, %v2557, %v2561
    %v2566 = vand.u32 2147483647, %v2525
    %vm2567 = vcmp.eq.f32.partialorder %v2566, 8.507059e+37
    %v2568 = vand.u32 %v2525, 2147483648
    %v2569 = vor.u32 1.1754944e-38, %v2568
    %v2570 = vsel %vm2567, %v2569, %v2565
    %v2571 = vmul.f32 1.0, %v2570
    %v2572 = vrcp.pop %v2526
    %v2573 = vmul.f32 %v2526, %v2572
    %v2574 = vsub.f32 1.0, %v2573
    %v2575 = vmul.f32 %v2572, %v2574
    %v2576 = vadd.f32 %v2572, %v2575
    %vm2577 = vweird.f32 %v2526
    %vm2578 = vweird.f32 %v2572
    %vm2579 = vmor %vm2577, %vm2578
    %v2580 = vsel %vm2579, %v2572, %v2576
    %v2581 = vand.u32 2147483647, %v2526
    %vm2582 = vcmp.eq.f32.partialorder %v2581, 8.507059e+37
    %v2583 = vand.u32 %v2526, 2147483648
    %v2584 = vor.u32 1.1754944e-38, %v2583
    %v2585 = vsel %vm2582, %v2584, %v2580
    %v2586 = vmul.f32 1.0, %v2585
    %v2587 = vtanh.pop %v2398
    %v2588 = vtanh.pop %v2399
    %v2589 = vtanh.pop %v2400
    %v2590 = vtanh.pop %v2401
    %v2591 = vxor.u32 %v2431, 2147483648
    %v2592 = vxor.u32 %v2432, 2147483648
    %v2593 = vxor.u32 %v2433, 2147483648
    %v2594 = vxor.u32 %v2434, 2147483648
    %v2595 = vmul.f32 %v2591, 1.442695
    %v2596 = vpow.pop %v2595
    %v2597 = vmul.f32 %v2592, 1.442695
    %v2598 = vpow.pop %v2597
    %v2599 = vmul.f32 %v2593, 1.442695
    %v2600 = vpow.pop %v2599
    %v2601 = vmul.f32 %v2594, 1.442695
    %v2602 = vpow.pop %v2601
    %v2603 = vadd.f32 %v2596, 1.0
    %v2604 = vadd.f32 %v2598, 1.0
    %v2605 = vadd.f32 %v2600, 1.0
    %v2606 = vadd.f32 %v2602, 1.0
    %v2607 = vrcp.pop %v2603
    %v2608 = vmul.f32 %v2603, %v2607
    %v2609 = vsub.f32 1.0, %v2608
    %v2610 = vmul.f32 %v2607, %v2609
    %v2611 = vadd.f32 %v2607, %v2610
    %vm2612 = vweird.f32 %v2603
    %vm2613 = vweird.f32 %v2607
    %vm2614 = vmor %vm2612, %vm2613
    %v2615 = vsel %vm2614, %v2607, %v2611
    %v2616 = vand.u32 2147483647, %v2603
    %vm2617 = vcmp.eq.f32.partialorder %v2616, 8.507059e+37
    %v2618 = vand.u32 %v2603, 2147483648
    %v2619 = vor.u32 1.1754944e-38, %v2618
    %v2620 = vsel %vm2617, %v2619, %v2615
    %v2621 = vmul.f32 1.0, %v2620
    %v2622 = vrcp.pop %v2604
    %v2623 = vmul.f32 %v2604, %v2622
    %v2624 = vsub.f32 1.0, %v2623
    %v2625 = vmul.f32 %v2622, %v2624
    %v2626 = vadd.f32 %v2622, %v2625
    %vm2627 = vweird.f32 %v2604
    %vm2628 = vweird.f32 %v2622
    %vm2629 = vmor %vm2627, %vm2628
    %v2630 = vsel %vm2629, %v2622, %v2626
    %v2631 = vand.u32 2147483647, %v2604
    %vm2632 = vcmp.eq.f32.partialorder %v2631, 8.507059e+37
    %v2633 = vand.u32 %v2604, 2147483648
    %v2634 = vor.u32 1.1754944e-38, %v2633
    %v2635 = vsel %vm2632, %v2634, %v2630
    %v2636 = vmul.f32 1.0, %v2635
    %v2637 = vrcp.pop %v2605
    %v2638 = vmul.f32 %v2605, %v2637
    %v2639 = vsub.f32 1.0, %v2638
    %v2640 = vmul.f32 %v2637, %v2639
    %v2641 = vadd.f32 %v2637, %v2640
    %vm2642 = vweird.f32 %v2605
    %vm2643 = vweird.f32 %v2637
    %vm2644 = vmor %vm2642, %vm2643
    %v2645 = vsel %vm2644, %v2637, %v2641
    %v2646 = vand.u32 2147483647, %v2605
    %vm2647 = vcmp.eq.f32.partialorder %v2646, 8.507059e+37
    %v2648 = vand.u32 %v2605, 2147483648
    %v2649 = vor.u32 1.1754944e-38, %v2648
    %v2650 = vsel %vm2647, %v2649, %v2645
    %v2651 = vmul.f32 1.0, %v2650
    %v2652 = vrcp.pop %v2606
    %v2653 = vmul.f32 %v2606, %v2652
    %v2654 = vsub.f32 1.0, %v2653
    %v2655 = vmul.f32 %v2652, %v2654
    %v2656 = vadd.f32 %v2652, %v2655
    %vm2657 = vweird.f32 %v2606
    %vm2658 = vweird.f32 %v2652
    %vm2659 = vmor %vm2657, %vm2658
    %v2660 = vsel %vm2659, %v2652, %v2656
    %v2661 = vand.u32 2147483647, %v2606
    %vm2662 = vcmp.eq.f32.partialorder %v2661, 8.507059e+37
    %v2663 = vand.u32 %v2606, 2147483648
    %v2664 = vor.u32 1.1754944e-38, %v2663
    %v2665 = vsel %vm2662, %v2664, %v2660
    %v2666 = vmul.f32 1.0, %v2665
    %v2667 = vmul.f32 %v2541, %v2279
    %v2668 = vmul.f32 %v2556, %v2280
    %v2669 = vmul.f32 %v2571, %v2281
    %v2670 = vmul.f32 %v2586, %v2282
    %v2671 = vmul.f32 %v2465, %v2587
    %v2672 = vmul.f32 %v2480, %v2588
    %v2673 = vmul.f32 %v2495, %v2589
    %v2674 = vmul.f32 %v2510, %v2590
    %v2675 = vadd.f32 %v2667, %v2671
    %v2676 = vadd.f32 %v2668, %v2672
    %v2677 = vadd.f32 %v2669, %v2673
    %v2678 = vadd.f32 %v2670, %v2674
    %v2679 = vtanh.pop %v2675
    %v2680 = vtanh.pop %v2676
    %v2681 = vtanh.pop %v2677
    %v2682 = vtanh.pop %v2678
    %v2683 = vmul.f32 %v2621, %v2679
    %v2684 = vmul.f32 %v2636, %v2680
    %v2685 = vmul.f32 %v2651, %v2681
    %v2686 = vmul.f32 %v2666, %v2682
    %v2688 = vsel %vm1507, %v2683, 0
    %v2691 = vsel %vm1507, %v2684, 0
    %v2694 = vsel %vm1507, %v2685, 0
    %v2697 = vsel %vm1507, %v2686, 0
    %2699 = vmatpush.msra.mxu0 0.0
    %2700 = vmatpush.msra.mxu0 0.0
    %2701 = vmatpush.msra.mxu0 0.0
    %2702 = vmatpush.msra.mxu0 0.0
    %2703 = vmatpush.msra.mxu0 0.0
    %2704 = vmatpush.msra.mxu0 0.0
    %2705 = vmatpush.msra.mxu0 0.0
    %2706 = vmatpush.msra.mxu0 0.0
    %2707 = vmatpush.msra.mxu0 0.0
    %2708 = vmatpush.msra.mxu0 0.0
    %2709 = vmatpush.msra.mxu0 0.0
    %2710 = vmatpush.msra.mxu0 0.0
    %2711 = vmatpush.msra.mxu0 %v1491
    %2712 = vmatpush.msra.mxu0 %v1490
    %2713 = vmatpush.msra.mxu0 %v1489
    %2714 = vmatpush.msra.mxu0 %v1488
    %2715 = vmatmul.f32.gmra.mxu0 %v2688
    %v2716 = vpop.f32.mrf.mxu0
    %v2717 = vadd.f32 0.0, %v2716
    %2718 = vmatmul.f32.gmra.mxu0 %v2691
    %v2719 = vpop.f32.mrf.mxu0
    %v2720 = vadd.f32 0.0, %v2719
    %2721 = vmatmul.f32.gmra.mxu0 %v2694
    %v2722 = vpop.f32.mrf.mxu0
    %v2723 = vadd.f32 0.0, %v2722
    %2724 = vmatmul.f32.gmra.mxu0 %v2697
    %v2725 = vpop.f32.mrf.mxu0
    %v2726 = vadd.f32 0.0, %v2725
    %2727 = vdwg.mxu0
    %v2728 = vadd.f32 %v1258, %v2717
    %v2729 = vadd.f32 %v1261, %v2720
    %v2730 = vadd.f32 %v1264, %v2723
    %v2731 = vadd.f32 %v1267, %v2726
    %2732 = vmatpush.msra.mxu0 0.0
    %2733 = vmatpush.msra.mxu0 0.0
    %2734 = vmatpush.msra.mxu0 0.0
    %2735 = vmatpush.msra.mxu0 0.0
    %2736 = vmatpush.msra.mxu0 0.0
    %2737 = vmatpush.msra.mxu0 0.0
    %2738 = vmatpush.msra.mxu0 0.0
    %2739 = vmatpush.msra.mxu0 0.0
    %2740 = vmatpush.msra.mxu0 0.0
    %2741 = vmatpush.msra.mxu0 0.0
    %2742 = vmatpush.msra.mxu0 0.0
    %2743 = vmatpush.msra.mxu0 0.0
    %2744 = vmatpush.msra.mxu0 %v1496
    %2745 = vmatpush.msra.mxu0 %v1495
    %2746 = vmatpush.msra.mxu0 %v1494
    %2747 = vmatpush.msra.mxu0 %v1493
    %2748 = vmatmul.f32.gmra.mxu0 %v2688
    %v2749 = vpop.f32.mrf.mxu0
    %v2750 = vadd.f32 0.0, %v2749
    %2751 = vmatmul.f32.gmra.mxu0 %v2691
    %v2752 = vpop.f32.mrf.mxu0
    %v2753 = vadd.f32 0.0, %v2752
    %2754 = vmatmul.f32.gmra.mxu0 %v2694
    %v2755 = vpop.f32.mrf.mxu0
    %v2756 = vadd.f32 0.0, %v2755
    %2757 = vmatmul.f32.gmra.mxu0 %v2697
    %v2758 = vpop.f32.mrf.mxu0
    %v2759 = vadd.f32 0.0, %v2758
    %2760 = vdwg.mxu0
    %v2761 = vadd.f32 %v1331, %v2750
    %v2762 = vadd.f32 %v1334, %v2753
    %v2763 = vadd.f32 %v1337, %v2756
    %v2764 = vadd.f32 %v1340, %v2759
    %2765 = vmatpush.msra.mxu0 0.0
    %2766 = vmatpush.msra.mxu0 0.0
    %2767 = vmatpush.msra.mxu0 0.0
    %2768 = vmatpush.msra.mxu0 0.0
    %2769 = vmatpush.msra.mxu0 0.0
    %2770 = vmatpush.msra.mxu0 0.0
    %2771 = vmatpush.msra.mxu0 0.0
    %2772 = vmatpush.msra.mxu0 0.0
    %2773 = vmatpush.msra.mxu0 0.0
    %2774 = vmatpush.msra.mxu0 0.0
    %2775 = vmatpush.msra.mxu0 0.0
    %2776 = vmatpush.msra.mxu0 0.0
    %2777 = vmatpush.msra.mxu0 %v1501
    %2778 = vmatpush.msra.mxu0 %v1500
    %2779 = vmatpush.msra.mxu0 %v1499
    %2780 = vmatpush.msra.mxu0 %v1498
    %2781 = vmatmul.f32.gmra.mxu0 %v2688
    %v2782 = vpop.f32.mrf.mxu0
    %v2783 = vadd.f32 0.0, %v2782
    %2784 = vmatmul.f32.gmra.mxu0 %v2691
    %v2785 = vpop.f32.mrf.mxu0
    %v2786 = vadd.f32 0.0, %v2785
    %2787 = vmatmul.f32.gmra.mxu0 %v2694
    %v2788 = vpop.f32.mrf.mxu0
    %v2789 = vadd.f32 0.0, %v2788
    %2790 = vmatmul.f32.gmra.mxu0 %v2697
    %v2791 = vpop.f32.mrf.mxu0
    %v2792 = vadd.f32 0.0, %v2791
    %2793 = vdwg.mxu0
    %v2794 = vadd.f32 %v1404, %v2783
    %v2795 = vadd.f32 %v1407, %v2786
    %v2796 = vadd.f32 %v1410, %v2789
    %v2797 = vadd.f32 %v1413, %v2792
    %2798 = vmatpush.msra.mxu0 0.0
    %2799 = vmatpush.msra.mxu0 0.0
    %2800 = vmatpush.msra.mxu0 0.0
    %2801 = vmatpush.msra.mxu0 0.0
    %2802 = vmatpush.msra.mxu0 0.0
    %2803 = vmatpush.msra.mxu0 0.0
    %2804 = vmatpush.msra.mxu0 0.0
    %2805 = vmatpush.msra.mxu0 0.0
    %2806 = vmatpush.msra.mxu0 0.0
    %2807 = vmatpush.msra.mxu0 0.0
    %2808 = vmatpush.msra.mxu0 0.0
    %2809 = vmatpush.msra.mxu0 0.0
    %2810 = vmatpush.msra.mxu0 %v1506
    %2811 = vmatpush.msra.mxu0 %v1505
    %2812 = vmatpush.msra.mxu0 %v1504
    %2813 = vmatpush.msra.mxu0 %v1503
    %2814 = vmatmul.f32.gmra.mxu0 %v2688
    %v2815 = vpop.f32.mrf.mxu0
    %v2816 = vadd.f32 0.0, %v2815
    %2817 = vmatmul.f32.gmra.mxu0 %v2691
    %v2818 = vpop.f32.mrf.mxu0
    %v2819 = vadd.f32 0.0, %v2818
    %2820 = vmatmul.f32.gmra.mxu0 %v2694
    %v2821 = vpop.f32.mrf.mxu0
    %v2822 = vadd.f32 0.0, %v2821
    %2823 = vmatmul.f32.gmra.mxu0 %v2697
    %v2824 = vpop.f32.mrf.mxu0
    %v2825 = vadd.f32 0.0, %v2824
    %2826 = vdwg.mxu0
    %v2827 = vadd.f32 %v1477, %v2816
    %v2828 = vadd.f32 %v1480, %v2819
    %v2829 = vadd.f32 %v1483, %v2822
    %v2830 = vadd.f32 %v1486, %v2825
    %v2831 = vxor.u32 %v2728, 2147483648
    %v2832 = vxor.u32 %v2729, 2147483648
    %v2833 = vxor.u32 %v2730, 2147483648
    %v2834 = vxor.u32 %v2731, 2147483648
    %v2835 = vmul.f32 %v2831, 1.442695
    %v2836 = vpow.pop %v2835
    %v2837 = vmul.f32 %v2832, 1.442695
    %v2838 = vpow.pop %v2837
    %v2839 = vmul.f32 %v2833, 1.442695
    %v2840 = vpow.pop %v2839
    %v2841 = vmul.f32 %v2834, 1.442695
    %v2842 = vpow.pop %v2841
    %v2843 = vadd.f32 %v2836, 1.0
    %v2844 = vadd.f32 %v2838, 1.0
    %v2845 = vadd.f32 %v2840, 1.0
    %v2846 = vadd.f32 %v2842, 1.0
    %v2847 = vrcp.pop %v2843
    %v2848 = vmul.f32 %v2843, %v2847
    %v2849 = vsub.f32 1.0, %v2848
    %v2850 = vmul.f32 %v2847, %v2849
    %v2851 = vadd.f32 %v2847, %v2850
    %vm2852 = vweird.f32 %v2843
    %vm2853 = vweird.f32 %v2847
    %vm2854 = vmor %vm2852, %vm2853
    %v2855 = vsel %vm2854, %v2847, %v2851
    %v2856 = vand.u32 2147483647, %v2843
    %vm2857 = vcmp.eq.f32.partialorder %v2856, 8.507059e+37
    %v2858 = vand.u32 %v2843, 2147483648
    %v2859 = vor.u32 1.1754944e-38, %v2858
    %v2860 = vsel %vm2857, %v2859, %v2855
    %v2861 = vmul.f32 1.0, %v2860
    %v2862 = vrcp.pop %v2844
    %v2863 = vmul.f32 %v2844, %v2862
    %v2864 = vsub.f32 1.0, %v2863
    %v2865 = vmul.f32 %v2862, %v2864
    %v2866 = vadd.f32 %v2862, %v2865
    %vm2867 = vweird.f32 %v2844
    %vm2868 = vweird.f32 %v2862
    %vm2869 = vmor %vm2867, %vm2868
    %v2870 = vsel %vm2869, %v2862, %v2866
    %v2871 = vand.u32 2147483647, %v2844
    %vm2872 = vcmp.eq.f32.partialorder %v2871, 8.507059e+37
    %v2873 = vand.u32 %v2844, 2147483648
    %v2874 = vor.u32 1.1754944e-38, %v2873
    %v2875 = vsel %vm2872, %v2874, %v2870
    %v2876 = vmul.f32 1.0, %v2875
    %v2877 = vrcp.pop %v2845
    %v2878 = vmul.f32 %v2845, %v2877
    %v2879 = vsub.f32 1.0, %v2878
    %v2880 = vmul.f32 %v2877, %v2879
    %v2881 = vadd.f32 %v2877, %v2880
    %vm2882 = vweird.f32 %v2845
    %vm2883 = vweird.f32 %v2877
    %vm2884 = vmor %vm2882, %vm2883
    %v2885 = vsel %vm2884, %v2877, %v2881
    %v2886 = vand.u32 2147483647, %v2845
    %vm2887 = vcmp.eq.f32.partialorder %v2886, 8.507059e+37
    %v2888 = vand.u32 %v2845, 2147483648
    %v2889 = vor.u32 1.1754944e-38, %v2888
    %v2890 = vsel %vm2887, %v2889, %v2885
    %v2891 = vmul.f32 1.0, %v2890
    %v2892 = vrcp.pop %v2846
    %v2893 = vmul.f32 %v2846, %v2892
    %v2894 = vsub.f32 1.0, %v2893
    %v2895 = vmul.f32 %v2892, %v2894
    %v2896 = vadd.f32 %v2892, %v2895
    %vm2897 = vweird.f32 %v2846
    %vm2898 = vweird.f32 %v2892
    %vm2899 = vmor %vm2897, %vm2898
    %v2900 = vsel %vm2899, %v2892, %v2896
    %v2901 = vand.u32 2147483647, %v2846
    %vm2902 = vcmp.eq.f32.partialorder %v2901, 8.507059e+37
    %v2903 = vand.u32 %v2846, 2147483648
    %v2904 = vor.u32 1.1754944e-38, %v2903
    %v2905 = vsel %vm2902, %v2904, %v2900
    %v2906 = vmul.f32 1.0, %v2905
    %v2907 = vxor.u32 %v2761, 2147483648
    %v2908 = vxor.u32 %v2762, 2147483648
    %v2909 = vxor.u32 %v2763, 2147483648
    %v2910 = vxor.u32 %v2764, 2147483648
    %v2911 = vmul.f32 %v2907, 1.442695
    %v2912 = vpow.pop %v2911
    %v2913 = vmul.f32 %v2908, 1.442695
    %v2914 = vpow.pop %v2913
    %v2915 = vmul.f32 %v2909, 1.442695
    %v2916 = vpow.pop %v2915
    %v2917 = vmul.f32 %v2910, 1.442695
    %v2918 = vpow.pop %v2917
    %v2919 = vadd.f32 %v2912, 1.0
    %v2920 = vadd.f32 %v2914, 1.0
    %v2921 = vadd.f32 %v2916, 1.0
    %v2922 = vadd.f32 %v2918, 1.0
    %v2923 = vrcp.pop %v2919
    %v2924 = vmul.f32 %v2919, %v2923
    %v2925 = vsub.f32 1.0, %v2924
    %v2926 = vmul.f32 %v2923, %v2925
    %v2927 = vadd.f32 %v2923, %v2926
    %vm2928 = vweird.f32 %v2919
    %vm2929 = vweird.f32 %v2923
    %vm2930 = vmor %vm2928, %vm2929
    %v2931 = vsel %vm2930, %v2923, %v2927
    %v2932 = vand.u32 2147483647, %v2919
    %vm2933 = vcmp.eq.f32.partialorder %v2932, 8.507059e+37
    %v2934 = vand.u32 %v2919, 2147483648
    %v2935 = vor.u32 1.1754944e-38, %v2934
    %v2936 = vsel %vm2933, %v2935, %v2931
    %v2937 = vmul.f32 1.0, %v2936
    %v2938 = vrcp.pop %v2920
    %v2939 = vmul.f32 %v2920, %v2938
    %v2940 = vsub.f32 1.0, %v2939
    %v2941 = vmul.f32 %v2938, %v2940
    %v2942 = vadd.f32 %v2938, %v2941
    %vm2943 = vweird.f32 %v2920
    %vm2944 = vweird.f32 %v2938
    %vm2945 = vmor %vm2943, %vm2944
    %v2946 = vsel %vm2945, %v2938, %v2942
    %v2947 = vand.u32 2147483647, %v2920
    %vm2948 = vcmp.eq.f32.partialorder %v2947, 8.507059e+37
    %v2949 = vand.u32 %v2920, 2147483648
    %v2950 = vor.u32 1.1754944e-38, %v2949
    %v2951 = vsel %vm2948, %v2950, %v2946
    %v2952 = vmul.f32 1.0, %v2951
    %v2953 = vrcp.pop %v2921
    %v2954 = vmul.f32 %v2921, %v2953
    %v2955 = vsub.f32 1.0, %v2954
    %v2956 = vmul.f32 %v2953, %v2955
    %v2957 = vadd.f32 %v2953, %v2956
    %vm2958 = vweird.f32 %v2921
    %vm2959 = vweird.f32 %v2953
    %vm2960 = vmor %vm2958, %vm2959
    %v2961 = vsel %vm2960, %v2953, %v2957
    %v2962 = vand.u32 2147483647, %v2921
    %vm2963 = vcmp.eq.f32.partialorder %v2962, 8.507059e+37
    %v2964 = vand.u32 %v2921, 2147483648
    %v2965 = vor.u32 1.1754944e-38, %v2964
    %v2966 = vsel %vm2963, %v2965, %v2961
    %v2967 = vmul.f32 1.0, %v2966
    %v2968 = vrcp.pop %v2922
    %v2969 = vmul.f32 %v2922, %v2968
    %v2970 = vsub.f32 1.0, %v2969
    %v2971 = vmul.f32 %v2968, %v2970
    %v2972 = vadd.f32 %v2968, %v2971
    %vm2973 = vweird.f32 %v2922
    %vm2974 = vweird.f32 %v2968
    %vm2975 = vmor %vm2973, %vm2974
    %v2976 = vsel %vm2975, %v2968, %v2972
    %v2977 = vand.u32 2147483647, %v2922
    %vm2978 = vcmp.eq.f32.partialorder %v2977, 8.507059e+37
    %v2979 = vand.u32 %v2922, 2147483648
    %v2980 = vor.u32 1.1754944e-38, %v2979
    %v2981 = vsel %vm2978, %v2980, %v2976
    %v2982 = vmul.f32 1.0, %v2981
    %v2983 = vtanh.pop %v2794
    %v2984 = vtanh.pop %v2795
    %v2985 = vtanh.pop %v2796
    %v2986 = vtanh.pop %v2797
    %v2987 = vxor.u32 %v2827, 2147483648
    %v2988 = vxor.u32 %v2828, 2147483648
    %v2989 = vxor.u32 %v2829, 2147483648
    %v2990 = vxor.u32 %v2830, 2147483648
    %v2991 = vmul.f32 %v2987, 1.442695
    %v2992 = vpow.pop %v2991
    %v2993 = vmul.f32 %v2988, 1.442695
    %v2994 = vpow.pop %v2993
    %v2995 = vmul.f32 %v2989, 1.442695
    %v2996 = vpow.pop %v2995
    %v2997 = vmul.f32 %v2990, 1.442695
    %v2998 = vpow.pop %v2997
    %v2999 = vadd.f32 %v2992, 1.0
    %v3000 = vadd.f32 %v2994, 1.0
    %v3001 = vadd.f32 %v2996, 1.0
    %v3002 = vadd.f32 %v2998, 1.0
    %v3003 = vrcp.pop %v2999
    %v3004 = vmul.f32 %v2999, %v3003
    %v3005 = vsub.f32 1.0, %v3004
    %v3006 = vmul.f32 %v3003, %v3005
    %v3007 = vadd.f32 %v3003, %v3006
    %vm3008 = vweird.f32 %v2999
    %vm3009 = vweird.f32 %v3003
    %vm3010 = vmor %vm3008, %vm3009
    %v3011 = vsel %vm3010, %v3003, %v3007
    %v3012 = vand.u32 2147483647, %v2999
    %vm3013 = vcmp.eq.f32.partialorder %v3012, 8.507059e+37
    %v3014 = vand.u32 %v2999, 2147483648
    %v3015 = vor.u32 1.1754944e-38, %v3014
    %v3016 = vsel %vm3013, %v3015, %v3011
    %v3017 = vmul.f32 1.0, %v3016
    %v3018 = vrcp.pop %v3000
    %v3019 = vmul.f32 %v3000, %v3018
    %v3020 = vsub.f32 1.0, %v3019
    %v3021 = vmul.f32 %v3018, %v3020
    %v3022 = vadd.f32 %v3018, %v3021
    %vm3023 = vweird.f32 %v3000
    %vm3024 = vweird.f32 %v3018
    %vm3025 = vmor %vm3023, %vm3024
    %v3026 = vsel %vm3025, %v3018, %v3022
    %v3027 = vand.u32 2147483647, %v3000
    %vm3028 = vcmp.eq.f32.partialorder %v3027, 8.507059e+37
    %v3029 = vand.u32 %v3000, 2147483648
    %v3030 = vor.u32 1.1754944e-38, %v3029
    %v3031 = vsel %vm3028, %v3030, %v3026
    %v3032 = vmul.f32 1.0, %v3031
    %v3033 = vrcp.pop %v3001
    %v3034 = vmul.f32 %v3001, %v3033
    %v3035 = vsub.f32 1.0, %v3034
    %v3036 = vmul.f32 %v3033, %v3035
    %v3037 = vadd.f32 %v3033, %v3036
    %vm3038 = vweird.f32 %v3001
    %vm3039 = vweird.f32 %v3033
    %vm3040 = vmor %vm3038, %vm3039
    %v3041 = vsel %vm3040, %v3033, %v3037
    %v3042 = vand.u32 2147483647, %v3001
    %vm3043 = vcmp.eq.f32.partialorder %v3042, 8.507059e+37
    %v3044 = vand.u32 %v3001, 2147483648
    %v3045 = vor.u32 1.1754944e-38, %v3044
    %v3046 = vsel %vm3043, %v3045, %v3041
    %v3047 = vmul.f32 1.0, %v3046
    %v3048 = vrcp.pop %v3002
    %v3049 = vmul.f32 %v3002, %v3048
    %v3050 = vsub.f32 1.0, %v3049
    %v3051 = vmul.f32 %v3048, %v3050
    %v3052 = vadd.f32 %v3048, %v3051
    %vm3053 = vweird.f32 %v3002
    %vm3054 = vweird.f32 %v3048
    %vm3055 = vmor %vm3053, %vm3054
    %v3056 = vsel %vm3055, %v3048, %v3052
    %v3057 = vand.u32 2147483647, %v3002
    %vm3058 = vcmp.eq.f32.partialorder %v3057, 8.507059e+37
    %v3059 = vand.u32 %v3002, 2147483648
    %v3060 = vor.u32 1.1754944e-38, %v3059
    %v3061 = vsel %vm3058, %v3060, %v3056
    %v3062 = vmul.f32 1.0, %v3061
    %v3063 = vmul.f32 %v2937, %v2675
    %v3064 = vmul.f32 %v2952, %v2676
    %v3065 = vmul.f32 %v2967, %v2677
    %v3066 = vmul.f32 %v2982, %v2678
    %v3067 = vmul.f32 %v2861, %v2983
    %v3068 = vmul.f32 %v2876, %v2984
    %v3069 = vmul.f32 %v2891, %v2985
    %v3070 = vmul.f32 %v2906, %v2986
    %v3071 = vadd.f32 %v3063, %v3067
    %v3072 = vadd.f32 %v3064, %v3068
    %v3073 = vadd.f32 %v3065, %v3069
    %v3074 = vadd.f32 %v3066, %v3070
    %v3075 = vtanh.pop %v3071
    %v3076 = vtanh.pop %v3072
    %v3077 = vtanh.pop %v3073
    %v3078 = vtanh.pop %v3074
    %v3079 = vmul.f32 %v3017, %v3075
    %v3080 = vmul.f32 %v3032, %v3076
    %v3081 = vmul.f32 %v3047, %v3077
    %v3082 = vmul.f32 %v3062, %v3078
    %v3083 = vld [vmem:[#allocation6] sm:$0xff]
    %v3084 = vld [vmem:[#allocation6 + $0x8] sm:$0xff]
    %v3085 = vld [vmem:[#allocation6 + $0x10] sm:$0xff]
    %v3086 = vld [vmem:[#allocation6 + $0x18] sm:$0xff]
    %v3087 = vld [vmem:[%s13] sm:$0x1]
    %v3089 = vperm.slane %v3087, 0
    %v3092 = vsel %vm1507, %v3079, 0
    %v3095 = vsel %vm1507, %v3080, 0
    %v3098 = vsel %vm1507, %v3081, 0
    %v3101 = vsel %vm1507, %v3082, 0
    %3103 = vmatpush.msra.mxu0 0.0
    %3104 = vmatpush.msra.mxu0 0.0
    %3105 = vmatpush.msra.mxu0 0.0
    %3106 = vmatpush.msra.mxu0 0.0
    %3107 = vmatpush.msra.mxu0 0.0
    %3108 = vmatpush.msra.mxu0 0.0
    %3109 = vmatpush.msra.mxu0 0.0
    %3110 = vmatpush.msra.mxu0 0.0
    %3111 = vmatpush.msra.mxu0 0.0
    %3112 = vmatpush.msra.mxu0 0.0
    %3113 = vmatpush.msra.mxu0 0.0
    %3114 = vmatpush.msra.mxu0 0.0
    %3115 = vmatpush.msra.mxu0 %v3086
    %3116 = vmatpush.msra.mxu0 %v3085
    %3117 = vmatpush.msra.mxu0 %v3084
    %3118 = vmatpush.msra.mxu0 %v3083
    %3119 = vmatmul.f32.gmra.mxu0 %v1896
    %v3120 = vpop.f32.mrf.mxu0
    %v3121 = vadd.f32 %v3089, %v3120
    %3122 = vmatmul.f32.gmra.mxu0 %v1899
    %v3123 = vpop.f32.mrf.mxu0
    %v3124 = vadd.f32 %v3089, %v3123
    %3125 = vmatmul.f32.gmra.mxu0 %v1902
    %v3126 = vpop.f32.mrf.mxu0
    %v3127 = vadd.f32 %v3089, %v3126
    %3128 = vmatmul.f32.gmra.mxu0 %v1905
    %v3129 = vpop.f32.mrf.mxu0
    %v3130 = vadd.f32 %v3089, %v3129
    %3131 = vmatmul.f32.gmra.mxu0 %v2292
    %v3132 = vpop.f32.mrf.mxu0
    %v3133 = vadd.f32 %v3089, %v3132
    %3134 = vmatmul.f32.gmra.mxu0 %v2295
    %v3135 = vpop.f32.mrf.mxu0
    %v3136 = vadd.f32 %v3089, %v3135
    %3137 = vmatmul.f32.gmra.mxu0 %v2298
    %v3138 = vpop.f32.mrf.mxu0
    %v3139 = vadd.f32 %v3089, %v3138
    %3140 = vmatmul.f32.gmra.mxu0 %v2301
    %v3141 = vpop.f32.mrf.mxu0
    %v3142 = vadd.f32 %v3089, %v3141
    %3143 = vmatmul.f32.gmra.mxu0 %v2688
    %v3144 = vpop.f32.mrf.mxu0
    %v3145 = vadd.f32 %v3089, %v3144
    %3146 = vmatmul.f32.gmra.mxu0 %v2691
    %v3147 = vpop.f32.mrf.mxu0
    %v3148 = vadd.f32 %v3089, %v3147
    %3149 = vmatmul.f32.gmra.mxu0 %v2694
    %v3150 = vpop.f32.mrf.mxu0
    %v3151 = vadd.f32 %v3089, %v3150
    %3152 = vmatmul.f32.gmra.mxu0 %v2697
    %v3153 = vpop.f32.mrf.mxu0
    %v3154 = vadd.f32 %v3089, %v3153
    %3155 = vmatmul.f32.gmra.mxu0 %v3092
    %v3156 = vpop.f32.mrf.mxu0
    %v3157 = vadd.f32 %v3089, %v3156
    %3158 = vmatmul.f32.gmra.mxu0 %v3095
    %v3159 = vpop.f32.mrf.mxu0
    %v3160 = vadd.f32 %v3089, %v3159
    %3161 = vmatmul.f32.gmra.mxu0 %v3098
    %v3162 = vpop.f32.mrf.mxu0
    %v3163 = vadd.f32 %v3089, %v3162
    %3164 = vmatmul.f32.gmra.mxu0 %v3101
    %v3165 = vpop.f32.mrf.mxu0
    %v3166 = vadd.f32 %v3089, %v3165
    %3167 = vdwg.mxu0
    %s3168 = scalar_lea.vmem [#allocation6], 32
    %v3169 = vld [vmem:[%s3168] sm:$0xff]
    %v3170 = vld [vmem:[%s3168 + $0x8] sm:$0xff]
    %v3171 = vld [vmem:[%s3168 + $0x10] sm:$0xff]
    %v3172 = vld [vmem:[%s3168 + $0x18] sm:$0xff]
    %s3173 = scalar_lea.vmem %s13, 1
    %v3174 = vld [vmem:[%s3173] sm:$0x1]
    %v3176 = vperm.slane %v3174, 0
    %3178 = vmatpush.msra.mxu0 0.0
    %3179 = vmatpush.msra.mxu0 0.0
    %3180 = vmatpush.msra.mxu0 0.0
    %3181 = vmatpush.msra.mxu0 0.0
    %3182 = vmatpush.msra.mxu0 0.0
    %3183 = vmatpush.msra.mxu0 0.0
    %3184 = vmatpush.msra.mxu0 0.0
    %3185 = vmatpush.msra.mxu0 0.0
    %3186 = vmatpush.msra.mxu0 0.0
    %3187 = vmatpush.msra.mxu0 0.0
    %3188 = vmatpush.msra.mxu0 0.0
    %3189 = vmatpush.msra.mxu0 0.0
    %3190 = vmatpush.msra.mxu0 %v3172
    %3191 = vmatpush.msra.mxu0 %v3171
    %3192 = vmatpush.msra.mxu0 %v3170
    %3193 = vmatpush.msra.mxu0 %v3169
    %3194 = vmatmul.f32.gmra.mxu0 %v1896
    %v3195 = vpop.f32.mrf.mxu0
    %v3196 = vadd.f32 %v3176, %v3195
    %3197 = vmatmul.f32.gmra.mxu0 %v1899
    %v3198 = vpop.f32.mrf.mxu0
    %v3199 = vadd.f32 %v3176, %v3198
    %3200 = vmatmul.f32.gmra.mxu0 %v1902
    %v3201 = vpop.f32.mrf.mxu0
    %v3202 = vadd.f32 %v3176, %v3201
    %3203 = vmatmul.f32.gmra.mxu0 %v1905
    %v3204 = vpop.f32.mrf.mxu0
    %v3205 = vadd.f32 %v3176, %v3204
    %3206 = vmatmul.f32.gmra.mxu0 %v2292
    %v3207 = vpop.f32.mrf.mxu0
    %v3208 = vadd.f32 %v3176, %v3207
    %3209 = vmatmul.f32.gmra.mxu0 %v2295
    %v3210 = vpop.f32.mrf.mxu0
    %v3211 = vadd.f32 %v3176, %v3210
    %3212 = vmatmul.f32.gmra.mxu0 %v2298
    %v3213 = vpop.f32.mrf.mxu0
    %v3214 = vadd.f32 %v3176, %v3213
    %3215 = vmatmul.f32.gmra.mxu0 %v2301
    %v3216 = vpop.f32.mrf.mxu0
    %v3217 = vadd.f32 %v3176, %v3216
    %3218 = vmatmul.f32.gmra.mxu0 %v2688
    %v3219 = vpop.f32.mrf.mxu0
    %v3220 = vadd.f32 %v3176, %v3219
    %3221 = vmatmul.f32.gmra.mxu0 %v2691
    %v3222 = vpop.f32.mrf.mxu0
    %v3223 = vadd.f32 %v3176, %v3222
    %3224 = vmatmul.f32.gmra.mxu0 %v2694
    %v3225 = vpop.f32.mrf.mxu0
    %v3226 = vadd.f32 %v3176, %v3225
    %3227 = vmatmul.f32.gmra.mxu0 %v2697
    %v3228 = vpop.f32.mrf.mxu0
    %v3229 = vadd.f32 %v3176, %v3228
    %3230 = vmatmul.f32.gmra.mxu0 %v3092
    %v3231 = vpop.f32.mrf.mxu0
    %v3232 = vadd.f32 %v3176, %v3231
    %3233 = vmatmul.f32.gmra.mxu0 %v3095
    %v3234 = vpop.f32.mrf.mxu0
    %v3235 = vadd.f32 %v3176, %v3234
    %3236 = vmatmul.f32.gmra.mxu0 %v3098
    %v3237 = vpop.f32.mrf.mxu0
    %v3238 = vadd.f32 %v3176, %v3237
    %3239 = vmatmul.f32.gmra.mxu0 %v3101
    %v3240 = vpop.f32.mrf.mxu0
    %v3241 = vadd.f32 %v3176, %v3240
    %3242 = vdwg.mxu0
    %s3243 = scalar_lea.vmem [#allocation6], 64
    %v3244 = vld [vmem:[%s3243] sm:$0xff]
    %v3245 = vld [vmem:[%s3243 + $0x8] sm:$0xff]
    %v3246 = vld [vmem:[%s3243 + $0x10] sm:$0xff]
    %v3247 = vld [vmem:[%s3243 + $0x18] sm:$0xff]
    %s3248 = scalar_lea.vmem %s13, 2
    %v3249 = vld [vmem:[%s3248] sm:$0x1]
    %v3251 = vperm.slane %v3249, 0
    %3253 = vmatpush.msra.mxu0 0.0
    %3254 = vmatpush.msra.mxu0 0.0
    %3255 = vmatpush.msra.mxu0 0.0
    %3256 = vmatpush.msra.mxu0 0.0
    %3257 = vmatpush.msra.mxu0 0.0
    %3258 = vmatpush.msra.mxu0 0.0
    %3259 = vmatpush.msra.mxu0 0.0
    %3260 = vmatpush.msra.mxu0 0.0
    %3261 = vmatpush.msra.mxu0 0.0
    %3262 = vmatpush.msra.mxu0 0.0
    %3263 = vmatpush.msra.mxu0 0.0
    %3264 = vmatpush.msra.mxu0 0.0
    %3265 = vmatpush.msra.mxu0 %v3247
    %3266 = vmatpush.msra.mxu0 %v3246
    %3267 = vmatpush.msra.mxu0 %v3245
    %3268 = vmatpush.msra.mxu0 %v3244
    %3269 = vmatmul.f32.gmra.mxu0 %v1896
    %v3270 = vpop.f32.mrf.mxu0
    %v3271 = vadd.f32 %v3251, %v3270
    %3272 = vmatmul.f32.gmra.mxu0 %v1899
    %v3273 = vpop.f32.mrf.mxu0
    %v3274 = vadd.f32 %v3251, %v3273
    %3275 = vmatmul.f32.gmra.mxu0 %v1902
    %v3276 = vpop.f32.mrf.mxu0
    %v3277 = vadd.f32 %v3251, %v3276
    %3278 = vmatmul.f32.gmra.mxu0 %v1905
    %v3279 = vpop.f32.mrf.mxu0
    %v3280 = vadd.f32 %v3251, %v3279
    %3281 = vmatmul.f32.gmra.mxu0 %v2292
    %v3282 = vpop.f32.mrf.mxu0
    %v3283 = vadd.f32 %v3251, %v3282
    %3284 = vmatmul.f32.gmra.mxu0 %v2295
    %v3285 = vpop.f32.mrf.mxu0
    %v3286 = vadd.f32 %v3251, %v3285
    %3287 = vmatmul.f32.gmra.mxu0 %v2298
    %v3288 = vpop.f32.mrf.mxu0
    %v3289 = vadd.f32 %v3251, %v3288
    %3290 = vmatmul.f32.gmra.mxu0 %v2301
    %v3291 = vpop.f32.mrf.mxu0
    %v3292 = vadd.f32 %v3251, %v3291
    %3293 = vmatmul.f32.gmra.mxu0 %v2688
    %v3294 = vpop.f32.mrf.mxu0
    %v3295 = vadd.f32 %v3251, %v3294
    %3296 = vmatmul.f32.gmra.mxu0 %v2691
    %v3297 = vpop.f32.mrf.mxu0
    %v3298 = vadd.f32 %v3251, %v3297
    %3299 = vmatmul.f32.gmra.mxu0 %v2694
    %v3300 = vpop.f32.mrf.mxu0
    %v3301 = vadd.f32 %v3251, %v3300
    %3302 = vmatmul.f32.gmra.mxu0 %v2697
    %v3303 = vpop.f32.mrf.mxu0
    %v3304 = vadd.f32 %v3251, %v3303
    %3305 = vmatmul.f32.gmra.mxu0 %v3092
    %v3306 = vpop.f32.mrf.mxu0
    %v3307 = vadd.f32 %v3251, %v3306
    %3308 = vmatmul.f32.gmra.mxu0 %v3095
    %v3309 = vpop.f32.mrf.mxu0
    %v3310 = vadd.f32 %v3251, %v3309
    %3311 = vmatmul.f32.gmra.mxu0 %v3098
    %v3312 = vpop.f32.mrf.mxu0
    %v3313 = vadd.f32 %v3251, %v3312
    %3314 = vmatmul.f32.gmra.mxu0 %v3101
    %v3315 = vpop.f32.mrf.mxu0
    %v3316 = vadd.f32 %v3251, %v3315
    %3317 = vdwg.mxu0
    %s3318 = scalar_lea.vmem [#allocation6], 96
    %v3319 = vld [vmem:[%s3318] sm:$0xff]
    %v3320 = vld [vmem:[%s3318 + $0x8] sm:$0xff]
    %v3321 = vld [vmem:[%s3318 + $0x10] sm:$0xff]
    %v3322 = vld [vmem:[%s3318 + $0x18] sm:$0xff]
    %s3323 = scalar_lea.vmem %s13, 3
    %v3324 = vld [vmem:[%s3323] sm:$0x1]
    %v3326 = vperm.slane %v3324, 0
    %3328 = vmatpush.msra.mxu0 0.0
    %3329 = vmatpush.msra.mxu0 0.0
    %3330 = vmatpush.msra.mxu0 0.0
    %3331 = vmatpush.msra.mxu0 0.0
    %3332 = vmatpush.msra.mxu0 0.0
    %3333 = vmatpush.msra.mxu0 0.0
    %3334 = vmatpush.msra.mxu0 0.0
    %3335 = vmatpush.msra.mxu0 0.0
    %3336 = vmatpush.msra.mxu0 0.0
    %3337 = vmatpush.msra.mxu0 0.0
    %3338 = vmatpush.msra.mxu0 0.0
    %3339 = vmatpush.msra.mxu0 0.0
    %3340 = vmatpush.msra.mxu0 %v3322
    %3341 = vmatpush.msra.mxu0 %v3321
    %3342 = vmatpush.msra.mxu0 %v3320
    %3343 = vmatpush.msra.mxu0 %v3319
    %3344 = vmatmul.f32.gmra.mxu0 %v1896
    %v3345 = vpop.f32.mrf.mxu0
    %v3346 = vadd.f32 %v3326, %v3345
    %3347 = vmatmul.f32.gmra.mxu0 %v1899
    %v3348 = vpop.f32.mrf.mxu0
    %v3349 = vadd.f32 %v3326, %v3348
    %3350 = vmatmul.f32.gmra.mxu0 %v1902
    %v3351 = vpop.f32.mrf.mxu0
    %v3352 = vadd.f32 %v3326, %v3351
    %3353 = vmatmul.f32.gmra.mxu0 %v1905
    %v3354 = vpop.f32.mrf.mxu0
    %v3355 = vadd.f32 %v3326, %v3354
    %3356 = vmatmul.f32.gmra.mxu0 %v2292
    %v3357 = vpop.f32.mrf.mxu0
    %v3358 = vadd.f32 %v3326, %v3357
    %3359 = vmatmul.f32.gmra.mxu0 %v2295
    %v3360 = vpop.f32.mrf.mxu0
    %v3361 = vadd.f32 %v3326, %v3360
    %3362 = vmatmul.f32.gmra.mxu0 %v2298
    %v3363 = vpop.f32.mrf.mxu0
    %v3364 = vadd.f32 %v3326, %v3363
    %3365 = vmatmul.f32.gmra.mxu0 %v2301
    %v3366 = vpop.f32.mrf.mxu0
    %v3367 = vadd.f32 %v3326, %v3366
    %3368 = vmatmul.f32.gmra.mxu0 %v2688
    %v3369 = vpop.f32.mrf.mxu0
    %v3370 = vadd.f32 %v3326, %v3369
    %3371 = vmatmul.f32.gmra.mxu0 %v2691
    %v3372 = vpop.f32.mrf.mxu0
    %v3373 = vadd.f32 %v3326, %v3372
    %3374 = vmatmul.f32.gmra.mxu0 %v2694
    %v3375 = vpop.f32.mrf.mxu0
    %v3376 = vadd.f32 %v3326, %v3375
    %3377 = vmatmul.f32.gmra.mxu0 %v2697
    %v3378 = vpop.f32.mrf.mxu0
    %v3379 = vadd.f32 %v3326, %v3378
    %3380 = vmatmul.f32.gmra.mxu0 %v3092
    %v3381 = vpop.f32.mrf.mxu0
    %v3382 = vadd.f32 %v3326, %v3381
    %3383 = vmatmul.f32.gmra.mxu0 %v3095
    %v3384 = vpop.f32.mrf.mxu0
    %v3385 = vadd.f32 %v3326, %v3384
    %3386 = vmatmul.f32.gmra.mxu0 %v3098
    %v3387 = vpop.f32.mrf.mxu0
    %v3388 = vadd.f32 %v3326, %v3387
    %3389 = vmatmul.f32.gmra.mxu0 %v3101
    %v3390 = vpop.f32.mrf.mxu0
    %v3391 = vadd.f32 %v3326, %v3390
    %3392 = vdwg.mxu0
    %v3393 = vld [vmem:[#allocation7] sm:$0xff]
    %v3394 = vld [vmem:[#allocation7 + $0x8] sm:$0xff]
    %v3395 = vld [vmem:[#allocation7 + $0x10] sm:$0xff]
    %v3396 = vld [vmem:[#allocation7 + $0x18] sm:$0xff]
    %s3397 = scalar_lea.vmem [#allocation7], 32
    %v3398 = vld [vmem:[%s3397] sm:$0xff]
    %v3399 = vld [vmem:[%s3397 + $0x8] sm:$0xff]
    %v3400 = vld [vmem:[%s3397 + $0x10] sm:$0xff]
    %v3401 = vld [vmem:[%s3397 + $0x18] sm:$0xff]
    %s3402 = scalar_lea.vmem [#allocation7], 64
    %v3403 = vld [vmem:[%s3402] sm:$0xff]
    %v3404 = vld [vmem:[%s3402 + $0x8] sm:$0xff]
    %v3405 = vld [vmem:[%s3402 + $0x10] sm:$0xff]
    %v3406 = vld [vmem:[%s3402 + $0x18] sm:$0xff]
    %s3407 = scalar_lea.vmem [#allocation7], 96
    %v3408 = vld [vmem:[%s3407] sm:$0xff]
    %v3409 = vld [vmem:[%s3407 + $0x8] sm:$0xff]
    %v3410 = vld [vmem:[%s3407 + $0x10] sm:$0xff]
    %v3411 = vld [vmem:[%s3407 + $0x18] sm:$0xff]
    %3412 = vmatpush.msra.mxu0 0.0
    %3413 = vmatpush.msra.mxu0 0.0
    %3414 = vmatpush.msra.mxu0 0.0
    %3415 = vmatpush.msra.mxu0 0.0
    %3416 = vmatpush.msra.mxu0 0.0
    %3417 = vmatpush.msra.mxu0 0.0
    %3418 = vmatpush.msra.mxu0 0.0
    %3419 = vmatpush.msra.mxu0 0.0
    %3420 = vmatpush.msra.mxu0 0.0
    %3421 = vmatpush.msra.mxu0 0.0
    %3422 = vmatpush.msra.mxu0 0.0
    %3423 = vmatpush.msra.mxu0 0.0
    %3424 = vmatpush.msra.mxu0 %v3396
    %3425 = vmatpush.msra.mxu0 %v3395
    %3426 = vmatpush.msra.mxu0 %v3394
    %3427 = vmatpush.msra.mxu0 %v3393
    %3428 = vmatmul.f32.gmra.mxu0 %v1509
    %v3429 = vpop.f32.mrf.mxu0
    %v3430 = vadd.f32 0.0, %v3429
    %3431 = vmatmul.f32.gmra.mxu0 %v1509
    %v3432 = vpop.f32.mrf.mxu0
    %v3433 = vadd.f32 0.0, %v3432
    %3434 = vmatmul.f32.gmra.mxu0 %v1509
    %v3435 = vpop.f32.mrf.mxu0
    %v3436 = vadd.f32 0.0, %v3435
    %3437 = vmatmul.f32.gmra.mxu0 %v1509
    %v3438 = vpop.f32.mrf.mxu0
    %v3439 = vadd.f32 0.0, %v3438
    %3440 = vdwg.mxu0
    %v3441 = vadd.f32 %v3121, %v3430
    %v3442 = vadd.f32 %v3124, %v3433
    %v3443 = vadd.f32 %v3127, %v3436
    %v3444 = vadd.f32 %v3130, %v3439
    %3445 = vmatpush.msra.mxu0 0.0
    %3446 = vmatpush.msra.mxu0 0.0
    %3447 = vmatpush.msra.mxu0 0.0
    %3448 = vmatpush.msra.mxu0 0.0
    %3449 = vmatpush.msra.mxu0 0.0
    %3450 = vmatpush.msra.mxu0 0.0
    %3451 = vmatpush.msra.mxu0 0.0
    %3452 = vmatpush.msra.mxu0 0.0
    %3453 = vmatpush.msra.mxu0 0.0
    %3454 = vmatpush.msra.mxu0 0.0
    %3455 = vmatpush.msra.mxu0 0.0
    %3456 = vmatpush.msra.mxu0 0.0
    %3457 = vmatpush.msra.mxu0 %v3401
    %3458 = vmatpush.msra.mxu0 %v3400
    %3459 = vmatpush.msra.mxu0 %v3399
    %3460 = vmatpush.msra.mxu0 %v3398
    %3461 = vmatmul.f32.gmra.mxu0 %v1509
    %v3462 = vpop.f32.mrf.mxu0
    %v3463 = vadd.f32 0.0, %v3462
    %3464 = vmatmul.f32.gmra.mxu0 %v1509
    %v3465 = vpop.f32.mrf.mxu0
    %v3466 = vadd.f32 0.0, %v3465
    %3467 = vmatmul.f32.gmra.mxu0 %v1509
    %v3468 = vpop.f32.mrf.mxu0
    %v3469 = vadd.f32 0.0, %v3468
    %3470 = vmatmul.f32.gmra.mxu0 %v1509
    %v3471 = vpop.f32.mrf.mxu0
    %v3472 = vadd.f32 0.0, %v3471
    %3473 = vdwg.mxu0
    %v3474 = vadd.f32 %v3196, %v3463
    %v3475 = vadd.f32 %v3199, %v3466
    %v3476 = vadd.f32 %v3202, %v3469
    %v3477 = vadd.f32 %v3205, %v3472
    %3478 = vmatpush.msra.mxu0 0.0
    %3479 = vmatpush.msra.mxu0 0.0
    %3480 = vmatpush.msra.mxu0 0.0
    %3481 = vmatpush.msra.mxu0 0.0
    %3482 = vmatpush.msra.mxu0 0.0
    %3483 = vmatpush.msra.mxu0 0.0
    %3484 = vmatpush.msra.mxu0 0.0
    %3485 = vmatpush.msra.mxu0 0.0
    %3486 = vmatpush.msra.mxu0 0.0
    %3487 = vmatpush.msra.mxu0 0.0
    %3488 = vmatpush.msra.mxu0 0.0
    %3489 = vmatpush.msra.mxu0 0.0
    %3490 = vmatpush.msra.mxu0 %v3406
    %3491 = vmatpush.msra.mxu0 %v3405
    %3492 = vmatpush.msra.mxu0 %v3404
    %3493 = vmatpush.msra.mxu0 %v3403
    %3494 = vmatmul.f32.gmra.mxu0 %v1509
    %v3495 = vpop.f32.mrf.mxu0
    %v3496 = vadd.f32 0.0, %v3495
    %3497 = vmatmul.f32.gmra.mxu0 %v1509
    %v3498 = vpop.f32.mrf.mxu0
    %v3499 = vadd.f32 0.0, %v3498
    %3500 = vmatmul.f32.gmra.mxu0 %v1509
    %v3501 = vpop.f32.mrf.mxu0
    %v3502 = vadd.f32 0.0, %v3501
    %3503 = vmatmul.f32.gmra.mxu0 %v1509
    %v3504 = vpop.f32.mrf.mxu0
    %v3505 = vadd.f32 0.0, %v3504
    %3506 = vdwg.mxu0
    %v3507 = vadd.f32 %v3271, %v3496
    %v3508 = vadd.f32 %v3274, %v3499
    %v3509 = vadd.f32 %v3277, %v3502
    %v3510 = vadd.f32 %v3280, %v3505
    %3511 = vmatpush.msra.mxu0 0.0
    %3512 = vmatpush.msra.mxu0 0.0
    %3513 = vmatpush.msra.mxu0 0.0
    %3514 = vmatpush.msra.mxu0 0.0
    %3515 = vmatpush.msra.mxu0 0.0
    %3516 = vmatpush.msra.mxu0 0.0
    %3517 = vmatpush.msra.mxu0 0.0
    %3518 = vmatpush.msra.mxu0 0.0
    %3519 = vmatpush.msra.mxu0 0.0
    %3520 = vmatpush.msra.mxu0 0.0
    %3521 = vmatpush.msra.mxu0 0.0
    %3522 = vmatpush.msra.mxu0 0.0
    %3523 = vmatpush.msra.mxu0 %v3411
    %3524 = vmatpush.msra.mxu0 %v3410
    %3525 = vmatpush.msra.mxu0 %v3409
    %3526 = vmatpush.msra.mxu0 %v3408
    %3527 = vmatmul.f32.gmra.mxu0 %v1509
    %v3528 = vpop.f32.mrf.mxu0
    %v3529 = vadd.f32 0.0, %v3528
    %3530 = vmatmul.f32.gmra.mxu0 %v1509
    %v3531 = vpop.f32.mrf.mxu0
    %v3532 = vadd.f32 0.0, %v3531
    %3533 = vmatmul.f32.gmra.mxu0 %v1509
    %v3534 = vpop.f32.mrf.mxu0
    %v3535 = vadd.f32 0.0, %v3534
    %3536 = vmatmul.f32.gmra.mxu0 %v1509
    %v3537 = vpop.f32.mrf.mxu0
    %v3538 = vadd.f32 0.0, %v3537
    %3539 = vdwg.mxu0
    %v3540 = vadd.f32 %v3346, %v3529
    %v3541 = vadd.f32 %v3349, %v3532
    %v3542 = vadd.f32 %v3352, %v3535
    %v3543 = vadd.f32 %v3355, %v3538
    %v3544 = vxor.u32 %v3441, 2147483648
    %v3545 = vxor.u32 %v3442, 2147483648
    %v3546 = vxor.u32 %v3443, 2147483648
    %v3547 = vxor.u32 %v3444, 2147483648
    %v3548 = vmul.f32 %v3544, 1.442695
    %v3549 = vpow.pop %v3548
    %v3550 = vmul.f32 %v3545, 1.442695
    %v3551 = vpow.pop %v3550
    %v3552 = vmul.f32 %v3546, 1.442695
    %v3553 = vpow.pop %v3552
    %v3554 = vmul.f32 %v3547, 1.442695
    %v3555 = vpow.pop %v3554
    %v3556 = vadd.f32 %v3549, 1.0
    %v3557 = vadd.f32 %v3551, 1.0
    %v3558 = vadd.f32 %v3553, 1.0
    %v3559 = vadd.f32 %v3555, 1.0
    %v3560 = vrcp.pop %v3556
    %v3561 = vmul.f32 %v3556, %v3560
    %v3562 = vsub.f32 1.0, %v3561
    %v3563 = vmul.f32 %v3560, %v3562
    %v3564 = vadd.f32 %v3560, %v3563
    %vm3565 = vweird.f32 %v3556
    %vm3566 = vweird.f32 %v3560
    %vm3567 = vmor %vm3565, %vm3566
    %v3568 = vsel %vm3567, %v3560, %v3564
    %v3569 = vand.u32 2147483647, %v3556
    %vm3570 = vcmp.eq.f32.partialorder %v3569, 8.507059e+37
    %v3571 = vand.u32 %v3556, 2147483648
    %v3572 = vor.u32 1.1754944e-38, %v3571
    %v3573 = vsel %vm3570, %v3572, %v3568
    %v3574 = vmul.f32 1.0, %v3573
    %v3575 = vrcp.pop %v3557
    %v3576 = vmul.f32 %v3557, %v3575
    %v3577 = vsub.f32 1.0, %v3576
    %v3578 = vmul.f32 %v3575, %v3577
    %v3579 = vadd.f32 %v3575, %v3578
    %vm3580 = vweird.f32 %v3557
    %vm3581 = vweird.f32 %v3575
    %vm3582 = vmor %vm3580, %vm3581
    %v3583 = vsel %vm3582, %v3575, %v3579
    %v3584 = vand.u32 2147483647, %v3557
    %vm3585 = vcmp.eq.f32.partialorder %v3584, 8.507059e+37
    %v3586 = vand.u32 %v3557, 2147483648
    %v3587 = vor.u32 1.1754944e-38, %v3586
    %v3588 = vsel %vm3585, %v3587, %v3583
    %v3589 = vmul.f32 1.0, %v3588
    %v3590 = vrcp.pop %v3558
    %v3591 = vmul.f32 %v3558, %v3590
    %v3592 = vsub.f32 1.0, %v3591
    %v3593 = vmul.f32 %v3590, %v3592
    %v3594 = vadd.f32 %v3590, %v3593
    %vm3595 = vweird.f32 %v3558
    %vm3596 = vweird.f32 %v3590
    %vm3597 = vmor %vm3595, %vm3596
    %v3598 = vsel %vm3597, %v3590, %v3594
    %v3599 = vand.u32 2147483647, %v3558
    %vm3600 = vcmp.eq.f32.partialorder %v3599, 8.507059e+37
    %v3601 = vand.u32 %v3558, 2147483648
    %v3602 = vor.u32 1.1754944e-38, %v3601
    %v3603 = vsel %vm3600, %v3602, %v3598
    %v3604 = vmul.f32 1.0, %v3603
    %v3605 = vrcp.pop %v3559
    %v3606 = vmul.f32 %v3559, %v3605
    %v3607 = vsub.f32 1.0, %v3606
    %v3608 = vmul.f32 %v3605, %v3607
    %v3609 = vadd.f32 %v3605, %v3608
    %vm3610 = vweird.f32 %v3559
    %vm3611 = vweird.f32 %v3605
    %vm3612 = vmor %vm3610, %vm3611
    %v3613 = vsel %vm3612, %v3605, %v3609
    %v3614 = vand.u32 2147483647, %v3559
    %vm3615 = vcmp.eq.f32.partialorder %v3614, 8.507059e+37
    %v3616 = vand.u32 %v3559, 2147483648
    %v3617 = vor.u32 1.1754944e-38, %v3616
    %v3618 = vsel %vm3615, %v3617, %v3613
    %v3619 = vmul.f32 1.0, %v3618
    %v3620 = vxor.u32 %v3474, 2147483648
    %v3621 = vxor.u32 %v3475, 2147483648
    %v3622 = vxor.u32 %v3476, 2147483648
    %v3623 = vxor.u32 %v3477, 2147483648
    %v3624 = vmul.f32 %v3620, 1.442695
    %v3625 = vpow.pop %v3624
    %v3626 = vmul.f32 %v3621, 1.442695
    %v3627 = vpow.pop %v3626
    %v3628 = vmul.f32 %v3622, 1.442695
    %v3629 = vpow.pop %v3628
    %v3630 = vmul.f32 %v3623, 1.442695
    %v3631 = vpow.pop %v3630
    %v3632 = vadd.f32 %v3625, 1.0
    %v3633 = vadd.f32 %v3627, 1.0
    %v3634 = vadd.f32 %v3629, 1.0
    %v3635 = vadd.f32 %v3631, 1.0
    %v3636 = vrcp.pop %v3632
    %v3637 = vmul.f32 %v3632, %v3636
    %v3638 = vsub.f32 1.0, %v3637
    %v3639 = vmul.f32 %v3636, %v3638
    %v3640 = vadd.f32 %v3636, %v3639
    %vm3641 = vweird.f32 %v3632
    %vm3642 = vweird.f32 %v3636
    %vm3643 = vmor %vm3641, %vm3642
    %v3644 = vsel %vm3643, %v3636, %v3640
    %v3645 = vand.u32 2147483647, %v3632
    %vm3646 = vcmp.eq.f32.partialorder %v3645, 8.507059e+37
    %v3647 = vand.u32 %v3632, 2147483648
    %v3648 = vor.u32 1.1754944e-38, %v3647
    %v3649 = vsel %vm3646, %v3648, %v3644
    %v3650 = vmul.f32 1.0, %v3649
    %v3651 = vrcp.pop %v3633
    %v3652 = vmul.f32 %v3633, %v3651
    %v3653 = vsub.f32 1.0, %v3652
    %v3654 = vmul.f32 %v3651, %v3653
    %v3655 = vadd.f32 %v3651, %v3654
    %vm3656 = vweird.f32 %v3633
    %vm3657 = vweird.f32 %v3651
    %vm3658 = vmor %vm3656, %vm3657
    %v3659 = vsel %vm3658, %v3651, %v3655
    %v3660 = vand.u32 2147483647, %v3633
    %vm3661 = vcmp.eq.f32.partialorder %v3660, 8.507059e+37
    %v3662 = vand.u32 %v3633, 2147483648
    %v3663 = vor.u32 1.1754944e-38, %v3662
    %v3664 = vsel %vm3661, %v3663, %v3659
    %v3665 = vmul.f32 1.0, %v3664
    %v3666 = vrcp.pop %v3634
    %v3667 = vmul.f32 %v3634, %v3666
    %v3668 = vsub.f32 1.0, %v3667
    %v3669 = vmul.f32 %v3666, %v3668
    %v3670 = vadd.f32 %v3666, %v3669
    %vm3671 = vweird.f32 %v3634
    %vm3672 = vweird.f32 %v3666
    %vm3673 = vmor %vm3671, %vm3672
    %v3674 = vsel %vm3673, %v3666, %v3670
    %v3675 = vand.u32 2147483647, %v3634
    %vm3676 = vcmp.eq.f32.partialorder %v3675, 8.507059e+37
    %v3677 = vand.u32 %v3634, 2147483648
    %v3678 = vor.u32 1.1754944e-38, %v3677
    %v3679 = vsel %vm3676, %v3678, %v3674
    %v3680 = vmul.f32 1.0, %v3679
    %v3681 = vrcp.pop %v3635
    %v3682 = vmul.f32 %v3635, %v3681
    %v3683 = vsub.f32 1.0, %v3682
    %v3684 = vmul.f32 %v3681, %v3683
    %v3685 = vadd.f32 %v3681, %v3684
    %vm3686 = vweird.f32 %v3635
    %vm3687 = vweird.f32 %v3681
    %vm3688 = vmor %vm3686, %vm3687
    %v3689 = vsel %vm3688, %v3681, %v3685
    %v3690 = vand.u32 2147483647, %v3635
    %vm3691 = vcmp.eq.f32.partialorder %v3690, 8.507059e+37
    %v3692 = vand.u32 %v3635, 2147483648
    %v3693 = vor.u32 1.1754944e-38, %v3692
    %v3694 = vsel %vm3691, %v3693, %v3689
    %v3695 = vmul.f32 1.0, %v3694
    %v3696 = vtanh.pop %v3507
    %v3697 = vtanh.pop %v3508
    %v3698 = vtanh.pop %v3509
    %v3699 = vtanh.pop %v3510
    %v3700 = vxor.u32 %v3540, 2147483648
    %v3701 = vxor.u32 %v3541, 2147483648
    %v3702 = vxor.u32 %v3542, 2147483648
    %v3703 = vxor.u32 %v3543, 2147483648
    %v3704 = vmul.f32 %v3700, 1.442695
    %v3705 = vpow.pop %v3704
    %v3706 = vmul.f32 %v3701, 1.442695
    %v3707 = vpow.pop %v3706
    %v3708 = vmul.f32 %v3702, 1.442695
    %v3709 = vpow.pop %v3708
    %v3710 = vmul.f32 %v3703, 1.442695
    %v3711 = vpow.pop %v3710
    %v3712 = vadd.f32 %v3705, 1.0
    %v3713 = vadd.f32 %v3707, 1.0
    %v3714 = vadd.f32 %v3709, 1.0
    %v3715 = vadd.f32 %v3711, 1.0
    %v3716 = vrcp.pop %v3712
    %v3717 = vmul.f32 %v3712, %v3716
    %v3718 = vsub.f32 1.0, %v3717
    %v3719 = vmul.f32 %v3716, %v3718
    %v3720 = vadd.f32 %v3716, %v3719
    %vm3721 = vweird.f32 %v3712
    %vm3722 = vweird.f32 %v3716
    %vm3723 = vmor %vm3721, %vm3722
    %v3724 = vsel %vm3723, %v3716, %v3720
    %v3725 = vand.u32 2147483647, %v3712
    %vm3726 = vcmp.eq.f32.partialorder %v3725, 8.507059e+37
    %v3727 = vand.u32 %v3712, 2147483648
    %v3728 = vor.u32 1.1754944e-38, %v3727
    %v3729 = vsel %vm3726, %v3728, %v3724
    %v3730 = vmul.f32 1.0, %v3729
    %v3731 = vrcp.pop %v3713
    %v3732 = vmul.f32 %v3713, %v3731
    %v3733 = vsub.f32 1.0, %v3732
    %v3734 = vmul.f32 %v3731, %v3733
    %v3735 = vadd.f32 %v3731, %v3734
    %vm3736 = vweird.f32 %v3713
    %vm3737 = vweird.f32 %v3731
    %vm3738 = vmor %vm3736, %vm3737
    %v3739 = vsel %vm3738, %v3731, %v3735
    %v3740 = vand.u32 2147483647, %v3713
    %vm3741 = vcmp.eq.f32.partialorder %v3740, 8.507059e+37
    %v3742 = vand.u32 %v3713, 2147483648
    %v3743 = vor.u32 1.1754944e-38, %v3742
    %v3744 = vsel %vm3741, %v3743, %v3739
    %v3745 = vmul.f32 1.0, %v3744
    %v3746 = vrcp.pop %v3714
    %v3747 = vmul.f32 %v3714, %v3746
    %v3748 = vsub.f32 1.0, %v3747
    %v3749 = vmul.f32 %v3746, %v3748
    %v3750 = vadd.f32 %v3746, %v3749
    %vm3751 = vweird.f32 %v3714
    %vm3752 = vweird.f32 %v3746
    %vm3753 = vmor %vm3751, %vm3752
    %v3754 = vsel %vm3753, %v3746, %v3750
    %v3755 = vand.u32 2147483647, %v3714
    %vm3756 = vcmp.eq.f32.partialorder %v3755, 8.507059e+37
    %v3757 = vand.u32 %v3714, 2147483648
    %v3758 = vor.u32 1.1754944e-38, %v3757
    %v3759 = vsel %vm3756, %v3758, %v3754
    %v3760 = vmul.f32 1.0, %v3759
    %v3761 = vrcp.pop %v3715
    %v3762 = vmul.f32 %v3715, %v3761
    %v3763 = vsub.f32 1.0, %v3762
    %v3764 = vmul.f32 %v3761, %v3763
    %v3765 = vadd.f32 %v3761, %v3764
    %vm3766 = vweird.f32 %v3715
    %vm3767 = vweird.f32 %v3761
    %vm3768 = vmor %vm3766, %vm3767
    %v3769 = vsel %vm3768, %v3761, %v3765
    %v3770 = vand.u32 2147483647, %v3715
    %vm3771 = vcmp.eq.f32.partialorder %v3770, 8.507059e+37
    %v3772 = vand.u32 %v3715, 2147483648
    %v3773 = vor.u32 1.1754944e-38, %v3772
    %v3774 = vsel %vm3771, %v3773, %v3769
    %v3775 = vmul.f32 1.0, %v3774
    %v3776 = vmul.f32 %v3650, 0.0
    %v3777 = vmul.f32 %v3665, 0.0
    %v3778 = vmul.f32 %v3680, 0.0
    %v3779 = vmul.f32 %v3695, 0.0
    %v3780 = vmul.f32 %v3574, %v3696
    %v3781 = vmul.f32 %v3589, %v3697
    %v3782 = vmul.f32 %v3604, %v3698
    %v3783 = vmul.f32 %v3619, %v3699
    %v3784 = vadd.f32 %v3776, %v3780
    %v3785 = vadd.f32 %v3777, %v3781
    %v3786 = vadd.f32 %v3778, %v3782
    %v3787 = vadd.f32 %v3779, %v3783
    %v3788 = vtanh.pop %v3784
    %v3789 = vtanh.pop %v3785
    %v3790 = vtanh.pop %v3786
    %v3791 = vtanh.pop %v3787
    %v3792 = vmul.f32 %v3730, %v3788
    %v3793 = vmul.f32 %v3745, %v3789
    %v3794 = vmul.f32 %v3760, %v3790
    %v3795 = vmul.f32 %v3775, %v3791
    %v3797 = vsel %vm1507, %v3792, 0
    %v3800 = vsel %vm1507, %v3793, 0
    %v3803 = vsel %vm1507, %v3794, 0
    %v3806 = vsel %vm1507, %v3795, 0
    %3808 = vmatpush.msra.mxu0 0.0
    %3809 = vmatpush.msra.mxu0 0.0
    %3810 = vmatpush.msra.mxu0 0.0
    %3811 = vmatpush.msra.mxu0 0.0
    %3812 = vmatpush.msra.mxu0 0.0
    %3813 = vmatpush.msra.mxu0 0.0
    %3814 = vmatpush.msra.mxu0 0.0
    %3815 = vmatpush.msra.mxu0 0.0
    %3816 = vmatpush.msra.mxu0 0.0
    %3817 = vmatpush.msra.mxu0 0.0
    %3818 = vmatpush.msra.mxu0 0.0
    %3819 = vmatpush.msra.mxu0 0.0
    %3820 = vmatpush.msra.mxu0 %v3396
    %3821 = vmatpush.msra.mxu0 %v3395
    %3822 = vmatpush.msra.mxu0 %v3394
    %3823 = vmatpush.msra.mxu0 %v3393
    %3824 = vmatmul.f32.gmra.mxu0 %v3797
    %v3825 = vpop.f32.mrf.mxu0
    %v3826 = vadd.f32 0.0, %v3825
    %3827 = vmatmul.f32.gmra.mxu0 %v3800
    %v3828 = vpop.f32.mrf.mxu0
    %v3829 = vadd.f32 0.0, %v3828
    %3830 = vmatmul.f32.gmra.mxu0 %v3803
    %v3831 = vpop.f32.mrf.mxu0
    %v3832 = vadd.f32 0.0, %v3831
    %3833 = vmatmul.f32.gmra.mxu0 %v3806
    %v3834 = vpop.f32.mrf.mxu0
    %v3835 = vadd.f32 0.0, %v3834
    %3836 = vdwg.mxu0
    %v3837 = vadd.f32 %v3133, %v3826
    %v3838 = vadd.f32 %v3136, %v3829
    %v3839 = vadd.f32 %v3139, %v3832
    %v3840 = vadd.f32 %v3142, %v3835
    %3841 = vmatpush.msra.mxu0 0.0
    %3842 = vmatpush.msra.mxu0 0.0
    %3843 = vmatpush.msra.mxu0 0.0
    %3844 = vmatpush.msra.mxu0 0.0
    %3845 = vmatpush.msra.mxu0 0.0
    %3846 = vmatpush.msra.mxu0 0.0
    %3847 = vmatpush.msra.mxu0 0.0
    %3848 = vmatpush.msra.mxu0 0.0
    %3849 = vmatpush.msra.mxu0 0.0
    %3850 = vmatpush.msra.mxu0 0.0
    %3851 = vmatpush.msra.mxu0 0.0
    %3852 = vmatpush.msra.mxu0 0.0
    %3853 = vmatpush.msra.mxu0 %v3401
    %3854 = vmatpush.msra.mxu0 %v3400
    %3855 = vmatpush.msra.mxu0 %v3399
    %3856 = vmatpush.msra.mxu0 %v3398
    %3857 = vmatmul.f32.gmra.mxu0 %v3797
    %v3858 = vpop.f32.mrf.mxu0
    %v3859 = vadd.f32 0.0, %v3858
    %3860 = vmatmul.f32.gmra.mxu0 %v3800
    %v3861 = vpop.f32.mrf.mxu0
    %v3862 = vadd.f32 0.0, %v3861
    %3863 = vmatmul.f32.gmra.mxu0 %v3803
    %v3864 = vpop.f32.mrf.mxu0
    %v3865 = vadd.f32 0.0, %v3864
    %3866 = vmatmul.f32.gmra.mxu0 %v3806
    %v3867 = vpop.f32.mrf.mxu0
    %v3868 = vadd.f32 0.0, %v3867
    %3869 = vdwg.mxu0
    %v3870 = vadd.f32 %v3208, %v3859
    %v3871 = vadd.f32 %v3211, %v3862
    %v3872 = vadd.f32 %v3214, %v3865
    %v3873 = vadd.f32 %v3217, %v3868
    %3874 = vmatpush.msra.mxu0 0.0
    %3875 = vmatpush.msra.mxu0 0.0
    %3876 = vmatpush.msra.mxu0 0.0
    %3877 = vmatpush.msra.mxu0 0.0
    %3878 = vmatpush.msra.mxu0 0.0
    %3879 = vmatpush.msra.mxu0 0.0
    %3880 = vmatpush.msra.mxu0 0.0
    %3881 = vmatpush.msra.mxu0 0.0
    %3882 = vmatpush.msra.mxu0 0.0
    %3883 = vmatpush.msra.mxu0 0.0
    %3884 = vmatpush.msra.mxu0 0.0
    %3885 = vmatpush.msra.mxu0 0.0
    %3886 = vmatpush.msra.mxu0 %v3406
    %3887 = vmatpush.msra.mxu0 %v3405
    %3888 = vmatpush.msra.mxu0 %v3404
    %3889 = vmatpush.msra.mxu0 %v3403
    %3890 = vmatmul.f32.gmra.mxu0 %v3797
    %v3891 = vpop.f32.mrf.mxu0
    %v3892 = vadd.f32 0.0, %v3891
    %3893 = vmatmul.f32.gmra.mxu0 %v3800
    %v3894 = vpop.f32.mrf.mxu0
    %v3895 = vadd.f32 0.0, %v3894
    %3896 = vmatmul.f32.gmra.mxu0 %v3803
    %v3897 = vpop.f32.mrf.mxu0
    %v3898 = vadd.f32 0.0, %v3897
    %3899 = vmatmul.f32.gmra.mxu0 %v3806
    %v3900 = vpop.f32.mrf.mxu0
    %v3901 = vadd.f32 0.0, %v3900
    %3902 = vdwg.mxu0
    %v3903 = vadd.f32 %v3283, %v3892
    %v3904 = vadd.f32 %v3286, %v3895
    %v3905 = vadd.f32 %v3289, %v3898
    %v3906 = vadd.f32 %v3292, %v3901
    %3907 = vmatpush.msra.mxu0 0.0
    %3908 = vmatpush.msra.mxu0 0.0
    %3909 = vmatpush.msra.mxu0 0.0
    %3910 = vmatpush.msra.mxu0 0.0
    %3911 = vmatpush.msra.mxu0 0.0
    %3912 = vmatpush.msra.mxu0 0.0
    %3913 = vmatpush.msra.mxu0 0.0
    %3914 = vmatpush.msra.mxu0 0.0
    %3915 = vmatpush.msra.mxu0 0.0
    %3916 = vmatpush.msra.mxu0 0.0
    %3917 = vmatpush.msra.mxu0 0.0
    %3918 = vmatpush.msra.mxu0 0.0
    %3919 = vmatpush.msra.mxu0 %v3411
    %3920 = vmatpush.msra.mxu0 %v3410
    %3921 = vmatpush.msra.mxu0 %v3409
    %3922 = vmatpush.msra.mxu0 %v3408
    %3923 = vmatmul.f32.gmra.mxu0 %v3797
    %v3924 = vpop.f32.mrf.mxu0
    %v3925 = vadd.f32 0.0, %v3924
    %3926 = vmatmul.f32.gmra.mxu0 %v3800
    %v3927 = vpop.f32.mrf.mxu0
    %v3928 = vadd.f32 0.0, %v3927
    %3929 = vmatmul.f32.gmra.mxu0 %v3803
    %v3930 = vpop.f32.mrf.mxu0
    %v3931 = vadd.f32 0.0, %v3930
    %3932 = vmatmul.f32.gmra.mxu0 %v3806
    %v3933 = vpop.f32.mrf.mxu0
    %v3934 = vadd.f32 0.0, %v3933
    %3935 = vdwg.mxu0
    %v3936 = vadd.f32 %v3358, %v3925
    %v3937 = vadd.f32 %v3361, %v3928
    %v3938 = vadd.f32 %v3364, %v3931
    %v3939 = vadd.f32 %v3367, %v3934
    %v3940 = vxor.u32 %v3837, 2147483648
    %v3941 = vxor.u32 %v3838, 2147483648
    %v3942 = vxor.u32 %v3839, 2147483648
    %v3943 = vxor.u32 %v3840, 2147483648
    %v3944 = vmul.f32 %v3940, 1.442695
    %v3945 = vpow.pop %v3944
    %v3946 = vmul.f32 %v3941, 1.442695
    %v3947 = vpow.pop %v3946
    %v3948 = vmul.f32 %v3942, 1.442695
    %v3949 = vpow.pop %v3948
    %v3950 = vmul.f32 %v3943, 1.442695
    %v3951 = vpow.pop %v3950
    %v3952 = vadd.f32 %v3945, 1.0
    %v3953 = vadd.f32 %v3947, 1.0
    %v3954 = vadd.f32 %v3949, 1.0
    %v3955 = vadd.f32 %v3951, 1.0
    %v3956 = vrcp.pop %v3952
    %v3957 = vmul.f32 %v3952, %v3956
    %v3958 = vsub.f32 1.0, %v3957
    %v3959 = vmul.f32 %v3956, %v3958
    %v3960 = vadd.f32 %v3956, %v3959
    %vm3961 = vweird.f32 %v3952
    %vm3962 = vweird.f32 %v3956
    %vm3963 = vmor %vm3961, %vm3962
    %v3964 = vsel %vm3963, %v3956, %v3960
    %v3965 = vand.u32 2147483647, %v3952
    %vm3966 = vcmp.eq.f32.partialorder %v3965, 8.507059e+37
    %v3967 = vand.u32 %v3952, 2147483648
    %v3968 = vor.u32 1.1754944e-38, %v3967
    %v3969 = vsel %vm3966, %v3968, %v3964
    %v3970 = vmul.f32 1.0, %v3969
    %v3971 = vrcp.pop %v3953
    %v3972 = vmul.f32 %v3953, %v3971
    %v3973 = vsub.f32 1.0, %v3972
    %v3974 = vmul.f32 %v3971, %v3973
    %v3975 = vadd.f32 %v3971, %v3974
    %vm3976 = vweird.f32 %v3953
    %vm3977 = vweird.f32 %v3971
    %vm3978 = vmor %vm3976, %vm3977
    %v3979 = vsel %vm3978, %v3971, %v3975
    %v3980 = vand.u32 2147483647, %v3953
    %vm3981 = vcmp.eq.f32.partialorder %v3980, 8.507059e+37
    %v3982 = vand.u32 %v3953, 2147483648
    %v3983 = vor.u32 1.1754944e-38, %v3982
    %v3984 = vsel %vm3981, %v3983, %v3979
    %v3985 = vmul.f32 1.0, %v3984
    %v3986 = vrcp.pop %v3954
    %v3987 = vmul.f32 %v3954, %v3986
    %v3988 = vsub.f32 1.0, %v3987
    %v3989 = vmul.f32 %v3986, %v3988
    %v3990 = vadd.f32 %v3986, %v3989
    %vm3991 = vweird.f32 %v3954
    %vm3992 = vweird.f32 %v3986
    %vm3993 = vmor %vm3991, %vm3992
    %v3994 = vsel %vm3993, %v3986, %v3990
    %v3995 = vand.u32 2147483647, %v3954
    %vm3996 = vcmp.eq.f32.partialorder %v3995, 8.507059e+37
    %v3997 = vand.u32 %v3954, 2147483648
    %v3998 = vor.u32 1.1754944e-38, %v3997
    %v3999 = vsel %vm3996, %v3998, %v3994
    %v4000 = vmul.f32 1.0, %v3999
    %v4001 = vrcp.pop %v3955
    %v4002 = vmul.f32 %v3955, %v4001
    %v4003 = vsub.f32 1.0, %v4002
    %v4004 = vmul.f32 %v4001, %v4003
    %v4005 = vadd.f32 %v4001, %v4004
    %vm4006 = vweird.f32 %v3955
    %vm4007 = vweird.f32 %v4001
    %vm4008 = vmor %vm4006, %vm4007
    %v4009 = vsel %vm4008, %v4001, %v4005
    %v4010 = vand.u32 2147483647, %v3955
    %vm4011 = vcmp.eq.f32.partialorder %v4010, 8.507059e+37
    %v4012 = vand.u32 %v3955, 2147483648
    %v4013 = vor.u32 1.1754944e-38, %v4012
    %v4014 = vsel %vm4011, %v4013, %v4009
    %v4015 = vmul.f32 1.0, %v4014
    %v4016 = vxor.u32 %v3870, 2147483648
    %v4017 = vxor.u32 %v3871, 2147483648
    %v4018 = vxor.u32 %v3872, 2147483648
    %v4019 = vxor.u32 %v3873, 2147483648
    %v4020 = vmul.f32 %v4016, 1.442695
    %v4021 = vpow.pop %v4020
    %v4022 = vmul.f32 %v4017, 1.442695
    %v4023 = vpow.pop %v4022
    %v4024 = vmul.f32 %v4018, 1.442695
    %v4025 = vpow.pop %v4024
    %v4026 = vmul.f32 %v4019, 1.442695
    %v4027 = vpow.pop %v4026
    %v4028 = vadd.f32 %v4021, 1.0
    %v4029 = vadd.f32 %v4023, 1.0
    %v4030 = vadd.f32 %v4025, 1.0
    %v4031 = vadd.f32 %v4027, 1.0
    %v4032 = vrcp.pop %v4028
    %v4033 = vmul.f32 %v4028, %v4032
    %v4034 = vsub.f32 1.0, %v4033
    %v4035 = vmul.f32 %v4032, %v4034
    %v4036 = vadd.f32 %v4032, %v4035
    %vm4037 = vweird.f32 %v4028
    %vm4038 = vweird.f32 %v4032
    %vm4039 = vmor %vm4037, %vm4038
    %v4040 = vsel %vm4039, %v4032, %v4036
    %v4041 = vand.u32 2147483647, %v4028
    %vm4042 = vcmp.eq.f32.partialorder %v4041, 8.507059e+37
    %v4043 = vand.u32 %v4028, 2147483648
    %v4044 = vor.u32 1.1754944e-38, %v4043
    %v4045 = vsel %vm4042, %v4044, %v4040
    %v4046 = vmul.f32 1.0, %v4045
    %v4047 = vrcp.pop %v4029
    %v4048 = vmul.f32 %v4029, %v4047
    %v4049 = vsub.f32 1.0, %v4048
    %v4050 = vmul.f32 %v4047, %v4049
    %v4051 = vadd.f32 %v4047, %v4050
    %vm4052 = vweird.f32 %v4029
    %vm4053 = vweird.f32 %v4047
    %vm4054 = vmor %vm4052, %vm4053
    %v4055 = vsel %vm4054, %v4047, %v4051
    %v4056 = vand.u32 2147483647, %v4029
    %vm4057 = vcmp.eq.f32.partialorder %v4056, 8.507059e+37
    %v4058 = vand.u32 %v4029, 2147483648
    %v4059 = vor.u32 1.1754944e-38, %v4058
    %v4060 = vsel %vm4057, %v4059, %v4055
    %v4061 = vmul.f32 1.0, %v4060
    %v4062 = vrcp.pop %v4030
    %v4063 = vmul.f32 %v4030, %v4062
    %v4064 = vsub.f32 1.0, %v4063
    %v4065 = vmul.f32 %v4062, %v4064
    %v4066 = vadd.f32 %v4062, %v4065
    %vm4067 = vweird.f32 %v4030
    %vm4068 = vweird.f32 %v4062
    %vm4069 = vmor %vm4067, %vm4068
    %v4070 = vsel %vm4069, %v4062, %v4066
    %v4071 = vand.u32 2147483647, %v4030
    %vm4072 = vcmp.eq.f32.partialorder %v4071, 8.507059e+37
    %v4073 = vand.u32 %v4030, 2147483648
    %v4074 = vor.u32 1.1754944e-38, %v4073
    %v4075 = vsel %vm4072, %v4074, %v4070
    %v4076 = vmul.f32 1.0, %v4075
    %v4077 = vrcp.pop %v4031
    %v4078 = vmul.f32 %v4031, %v4077
    %v4079 = vsub.f32 1.0, %v4078
    %v4080 = vmul.f32 %v4077, %v4079
    %v4081 = vadd.f32 %v4077, %v4080
    %vm4082 = vweird.f32 %v4031
    %vm4083 = vweird.f32 %v4077
    %vm4084 = vmor %vm4082, %vm4083
    %v4085 = vsel %vm4084, %v4077, %v4081
    %v4086 = vand.u32 2147483647, %v4031
    %vm4087 = vcmp.eq.f32.partialorder %v4086, 8.507059e+37
    %v4088 = vand.u32 %v4031, 2147483648
    %v4089 = vor.u32 1.1754944e-38, %v4088
    %v4090 = vsel %vm4087, %v4089, %v4085
    %v4091 = vmul.f32 1.0, %v4090
    %v4092 = vtanh.pop %v3903
    %v4093 = vtanh.pop %v3904
    %v4094 = vtanh.pop %v3905
    %v4095 = vtanh.pop %v3906
    %v4096 = vxor.u32 %v3936, 2147483648
    %v4097 = vxor.u32 %v3937, 2147483648
    %v4098 = vxor.u32 %v3938, 2147483648
    %v4099 = vxor.u32 %v3939, 2147483648
    %v4100 = vmul.f32 %v4096, 1.442695
    %v4101 = vpow.pop %v4100
    %v4102 = vmul.f32 %v4097, 1.442695
    %v4103 = vpow.pop %v4102
    %v4104 = vmul.f32 %v4098, 1.442695
    %v4105 = vpow.pop %v4104
    %v4106 = vmul.f32 %v4099, 1.442695
    %v4107 = vpow.pop %v4106
    %v4108 = vadd.f32 %v4101, 1.0
    %v4109 = vadd.f32 %v4103, 1.0
    %v4110 = vadd.f32 %v4105, 1.0
    %v4111 = vadd.f32 %v4107, 1.0
    %v4112 = vrcp.pop %v4108
    %v4113 = vmul.f32 %v4108, %v4112
    %v4114 = vsub.f32 1.0, %v4113
    %v4115 = vmul.f32 %v4112, %v4114
    %v4116 = vadd.f32 %v4112, %v4115
    %vm4117 = vweird.f32 %v4108
    %vm4118 = vweird.f32 %v4112
    %vm4119 = vmor %vm4117, %vm4118
    %v4120 = vsel %vm4119, %v4112, %v4116
    %v4121 = vand.u32 2147483647, %v4108
    %vm4122 = vcmp.eq.f32.partialorder %v4121, 8.507059e+37
    %v4123 = vand.u32 %v4108, 2147483648
    %v4124 = vor.u32 1.1754944e-38, %v4123
    %v4125 = vsel %vm4122, %v4124, %v4120
    %v4126 = vmul.f32 1.0, %v4125
    %v4127 = vrcp.pop %v4109
    %v4128 = vmul.f32 %v4109, %v4127
    %v4129 = vsub.f32 1.0, %v4128
    %v4130 = vmul.f32 %v4127, %v4129
    %v4131 = vadd.f32 %v4127, %v4130
    %vm4132 = vweird.f32 %v4109
    %vm4133 = vweird.f32 %v4127
    %vm4134 = vmor %vm4132, %vm4133
    %v4135 = vsel %vm4134, %v4127, %v4131
    %v4136 = vand.u32 2147483647, %v4109
    %vm4137 = vcmp.eq.f32.partialorder %v4136, 8.507059e+37
    %v4138 = vand.u32 %v4109, 2147483648
    %v4139 = vor.u32 1.1754944e-38, %v4138
    %v4140 = vsel %vm4137, %v4139, %v4135
    %v4141 = vmul.f32 1.0, %v4140
    %v4142 = vrcp.pop %v4110
    %v4143 = vmul.f32 %v4110, %v4142
    %v4144 = vsub.f32 1.0, %v4143
    %v4145 = vmul.f32 %v4142, %v4144
    %v4146 = vadd.f32 %v4142, %v4145
    %vm4147 = vweird.f32 %v4110
    %vm4148 = vweird.f32 %v4142
    %vm4149 = vmor %vm4147, %vm4148
    %v4150 = vsel %vm4149, %v4142, %v4146
    %v4151 = vand.u32 2147483647, %v4110
    %vm4152 = vcmp.eq.f32.partialorder %v4151, 8.507059e+37
    %v4153 = vand.u32 %v4110, 2147483648
    %v4154 = vor.u32 1.1754944e-38, %v4153
    %v4155 = vsel %vm4152, %v4154, %v4150
    %v4156 = vmul.f32 1.0, %v4155
    %v4157 = vrcp.pop %v4111
    %v4158 = vmul.f32 %v4111, %v4157
    %v4159 = vsub.f32 1.0, %v4158
    %v4160 = vmul.f32 %v4157, %v4159
    %v4161 = vadd.f32 %v4157, %v4160
    %vm4162 = vweird.f32 %v4111
    %vm4163 = vweird.f32 %v4157
    %vm4164 = vmor %vm4162, %vm4163
    %v4165 = vsel %vm4164, %v4157, %v4161
    %v4166 = vand.u32 2147483647, %v4111
    %vm4167 = vcmp.eq.f32.partialorder %v4166, 8.507059e+37
    %v4168 = vand.u32 %v4111, 2147483648
    %v4169 = vor.u32 1.1754944e-38, %v4168
    %v4170 = vsel %vm4167, %v4169, %v4165
    %v4171 = vmul.f32 1.0, %v4170
    %v4172 = vmul.f32 %v4046, %v3784
    %v4173 = vmul.f32 %v4061, %v3785
    %v4174 = vmul.f32 %v4076, %v3786
    %v4175 = vmul.f32 %v4091, %v3787
    %v4176 = vmul.f32 %v3970, %v4092
    %v4177 = vmul.f32 %v3985, %v4093
    %v4178 = vmul.f32 %v4000, %v4094
    %v4179 = vmul.f32 %v4015, %v4095
    %v4180 = vadd.f32 %v4172, %v4176
    %v4181 = vadd.f32 %v4173, %v4177
    %v4182 = vadd.f32 %v4174, %v4178
    %v4183 = vadd.f32 %v4175, %v4179
    %v4184 = vtanh.pop %v4180
    %v4185 = vtanh.pop %v4181
    %v4186 = vtanh.pop %v4182
    %v4187 = vtanh.pop %v4183
    %v4188 = vmul.f32 %v4126, %v4184
    %v4189 = vmul.f32 %v4141, %v4185
    %v4190 = vmul.f32 %v4156, %v4186
    %v4191 = vmul.f32 %v4171, %v4187
    %v4193 = vsel %vm1507, %v4188, 0
    %v4196 = vsel %vm1507, %v4189, 0
    %v4199 = vsel %vm1507, %v4190, 0
    %v4202 = vsel %vm1507, %v4191, 0
    %4204 = vmatpush.msra.mxu0 0.0
    %4205 = vmatpush.msra.mxu0 0.0
    %4206 = vmatpush.msra.mxu0 0.0
    %4207 = vmatpush.msra.mxu0 0.0
    %4208 = vmatpush.msra.mxu0 0.0
    %4209 = vmatpush.msra.mxu0 0.0
    %4210 = vmatpush.msra.mxu0 0.0
    %4211 = vmatpush.msra.mxu0 0.0
    %4212 = vmatpush.msra.mxu0 0.0
    %4213 = vmatpush.msra.mxu0 0.0
    %4214 = vmatpush.msra.mxu0 0.0
    %4215 = vmatpush.msra.mxu0 0.0
    %4216 = vmatpush.msra.mxu0 %v3396
    %4217 = vmatpush.msra.mxu0 %v3395
    %4218 = vmatpush.msra.mxu0 %v3394
    %4219 = vmatpush.msra.mxu0 %v3393
    %4220 = vmatmul.f32.gmra.mxu0 %v4193
    %v4221 = vpop.f32.mrf.mxu0
    %v4222 = vadd.f32 0.0, %v4221
    %4223 = vmatmul.f32.gmra.mxu0 %v4196
    %v4224 = vpop.f32.mrf.mxu0
    %v4225 = vadd.f32 0.0, %v4224
    %4226 = vmatmul.f32.gmra.mxu0 %v4199
    %v4227 = vpop.f32.mrf.mxu0
    %v4228 = vadd.f32 0.0, %v4227
    %4229 = vmatmul.f32.gmra.mxu0 %v4202
    %v4230 = vpop.f32.mrf.mxu0
    %v4231 = vadd.f32 0.0, %v4230
    %4232 = vdwg.mxu0
    %v4233 = vadd.f32 %v3145, %v4222
    %v4234 = vadd.f32 %v3148, %v4225
    %v4235 = vadd.f32 %v3151, %v4228
    %v4236 = vadd.f32 %v3154, %v4231
    %4237 = vmatpush.msra.mxu0 0.0
    %4238 = vmatpush.msra.mxu0 0.0
    %4239 = vmatpush.msra.mxu0 0.0
    %4240 = vmatpush.msra.mxu0 0.0
    %4241 = vmatpush.msra.mxu0 0.0
    %4242 = vmatpush.msra.mxu0 0.0
    %4243 = vmatpush.msra.mxu0 0.0
    %4244 = vmatpush.msra.mxu0 0.0
    %4245 = vmatpush.msra.mxu0 0.0
    %4246 = vmatpush.msra.mxu0 0.0
    %4247 = vmatpush.msra.mxu0 0.0
    %4248 = vmatpush.msra.mxu0 0.0
    %4249 = vmatpush.msra.mxu0 %v3401
    %4250 = vmatpush.msra.mxu0 %v3400
    %4251 = vmatpush.msra.mxu0 %v3399
    %4252 = vmatpush.msra.mxu0 %v3398
    %4253 = vmatmul.f32.gmra.mxu0 %v4193
    %v4254 = vpop.f32.mrf.mxu0
    %v4255 = vadd.f32 0.0, %v4254
    %4256 = vmatmul.f32.gmra.mxu0 %v4196
    %v4257 = vpop.f32.mrf.mxu0
    %v4258 = vadd.f32 0.0, %v4257
    %4259 = vmatmul.f32.gmra.mxu0 %v4199
    %v4260 = vpop.f32.mrf.mxu0
    %v4261 = vadd.f32 0.0, %v4260
    %4262 = vmatmul.f32.gmra.mxu0 %v4202
    %v4263 = vpop.f32.mrf.mxu0
    %v4264 = vadd.f32 0.0, %v4263
    %4265 = vdwg.mxu0
    %v4266 = vadd.f32 %v3220, %v4255
    %v4267 = vadd.f32 %v3223, %v4258
    %v4268 = vadd.f32 %v3226, %v4261
    %v4269 = vadd.f32 %v3229, %v4264
    %4270 = vmatpush.msra.mxu0 0.0
    %4271 = vmatpush.msra.mxu0 0.0
    %4272 = vmatpush.msra.mxu0 0.0
    %4273 = vmatpush.msra.mxu0 0.0
    %4274 = vmatpush.msra.mxu0 0.0
    %4275 = vmatpush.msra.mxu0 0.0
    %4276 = vmatpush.msra.mxu0 0.0
    %4277 = vmatpush.msra.mxu0 0.0
    %4278 = vmatpush.msra.mxu0 0.0
    %4279 = vmatpush.msra.mxu0 0.0
    %4280 = vmatpush.msra.mxu0 0.0
    %4281 = vmatpush.msra.mxu0 0.0
    %4282 = vmatpush.msra.mxu0 %v3406
    %4283 = vmatpush.msra.mxu0 %v3405
    %4284 = vmatpush.msra.mxu0 %v3404
    %4285 = vmatpush.msra.mxu0 %v3403
    %4286 = vmatmul.f32.gmra.mxu0 %v4193
    %v4287 = vpop.f32.mrf.mxu0
    %v4288 = vadd.f32 0.0, %v4287
    %4289 = vmatmul.f32.gmra.mxu0 %v4196
    %v4290 = vpop.f32.mrf.mxu0
    %v4291 = vadd.f32 0.0, %v4290
    %4292 = vmatmul.f32.gmra.mxu0 %v4199
    %v4293 = vpop.f32.mrf.mxu0
    %v4294 = vadd.f32 0.0, %v4293
    %4295 = vmatmul.f32.gmra.mxu0 %v4202
    %v4296 = vpop.f32.mrf.mxu0
    %v4297 = vadd.f32 0.0, %v4296
    %4298 = vdwg.mxu0
    %v4299 = vadd.f32 %v3295, %v4288
    %v4300 = vadd.f32 %v3298, %v4291
    %v4301 = vadd.f32 %v3301, %v4294
    %v4302 = vadd.f32 %v3304, %v4297
    %4303 = vmatpush.msra.mxu0 0.0
    %4304 = vmatpush.msra.mxu0 0.0
    %4305 = vmatpush.msra.mxu0 0.0
    %4306 = vmatpush.msra.mxu0 0.0
    %4307 = vmatpush.msra.mxu0 0.0
    %4308 = vmatpush.msra.mxu0 0.0
    %4309 = vmatpush.msra.mxu0 0.0
    %4310 = vmatpush.msra.mxu0 0.0
    %4311 = vmatpush.msra.mxu0 0.0
    %4312 = vmatpush.msra.mxu0 0.0
    %4313 = vmatpush.msra.mxu0 0.0
    %4314 = vmatpush.msra.mxu0 0.0
    %4315 = vmatpush.msra.mxu0 %v3411
    %4316 = vmatpush.msra.mxu0 %v3410
    %4317 = vmatpush.msra.mxu0 %v3409
    %4318 = vmatpush.msra.mxu0 %v3408
    %4319 = vmatmul.f32.gmra.mxu0 %v4193
    %v4320 = vpop.f32.mrf.mxu0
    %v4321 = vadd.f32 0.0, %v4320
    %4322 = vmatmul.f32.gmra.mxu0 %v4196
    %v4323 = vpop.f32.mrf.mxu0
    %v4324 = vadd.f32 0.0, %v4323
    %4325 = vmatmul.f32.gmra.mxu0 %v4199
    %v4326 = vpop.f32.mrf.mxu0
    %v4327 = vadd.f32 0.0, %v4326
    %4328 = vmatmul.f32.gmra.mxu0 %v4202
    %v4329 = vpop.f32.mrf.mxu0
    %v4330 = vadd.f32 0.0, %v4329
    %4331 = vdwg.mxu0
    %v4332 = vadd.f32 %v3370, %v4321
    %v4333 = vadd.f32 %v3373, %v4324
    %v4334 = vadd.f32 %v3376, %v4327
    %v4335 = vadd.f32 %v3379, %v4330
    %v4336 = vxor.u32 %v4233, 2147483648
    %v4337 = vxor.u32 %v4234, 2147483648
    %v4338 = vxor.u32 %v4235, 2147483648
    %v4339 = vxor.u32 %v4236, 2147483648
    %v4340 = vmul.f32 %v4336, 1.442695
    %v4341 = vpow.pop %v4340
    %v4342 = vmul.f32 %v4337, 1.442695
    %v4343 = vpow.pop %v4342
    %v4344 = vmul.f32 %v4338, 1.442695
    %v4345 = vpow.pop %v4344
    %v4346 = vmul.f32 %v4339, 1.442695
    %v4347 = vpow.pop %v4346
    %v4348 = vadd.f32 %v4341, 1.0
    %v4349 = vadd.f32 %v4343, 1.0
    %v4350 = vadd.f32 %v4345, 1.0
    %v4351 = vadd.f32 %v4347, 1.0
    %v4352 = vrcp.pop %v4348
    %v4353 = vmul.f32 %v4348, %v4352
    %v4354 = vsub.f32 1.0, %v4353
    %v4355 = vmul.f32 %v4352, %v4354
    %v4356 = vadd.f32 %v4352, %v4355
    %vm4357 = vweird.f32 %v4348
    %vm4358 = vweird.f32 %v4352
    %vm4359 = vmor %vm4357, %vm4358
    %v4360 = vsel %vm4359, %v4352, %v4356
    %v4361 = vand.u32 2147483647, %v4348
    %vm4362 = vcmp.eq.f32.partialorder %v4361, 8.507059e+37
    %v4363 = vand.u32 %v4348, 2147483648
    %v4364 = vor.u32 1.1754944e-38, %v4363
    %v4365 = vsel %vm4362, %v4364, %v4360
    %v4366 = vmul.f32 1.0, %v4365
    %v4367 = vrcp.pop %v4349
    %v4368 = vmul.f32 %v4349, %v4367
    %v4369 = vsub.f32 1.0, %v4368
    %v4370 = vmul.f32 %v4367, %v4369
    %v4371 = vadd.f32 %v4367, %v4370
    %vm4372 = vweird.f32 %v4349
    %vm4373 = vweird.f32 %v4367
    %vm4374 = vmor %vm4372, %vm4373
    %v4375 = vsel %vm4374, %v4367, %v4371
    %v4376 = vand.u32 2147483647, %v4349
    %vm4377 = vcmp.eq.f32.partialorder %v4376, 8.507059e+37
    %v4378 = vand.u32 %v4349, 2147483648
    %v4379 = vor.u32 1.1754944e-38, %v4378
    %v4380 = vsel %vm4377, %v4379, %v4375
    %v4381 = vmul.f32 1.0, %v4380
    %v4382 = vrcp.pop %v4350
    %v4383 = vmul.f32 %v4350, %v4382
    %v4384 = vsub.f32 1.0, %v4383
    %v4385 = vmul.f32 %v4382, %v4384
    %v4386 = vadd.f32 %v4382, %v4385
    %vm4387 = vweird.f32 %v4350
    %vm4388 = vweird.f32 %v4382
    %vm4389 = vmor %vm4387, %vm4388
    %v4390 = vsel %vm4389, %v4382, %v4386
    %v4391 = vand.u32 2147483647, %v4350
    %vm4392 = vcmp.eq.f32.partialorder %v4391, 8.507059e+37
    %v4393 = vand.u32 %v4350, 2147483648
    %v4394 = vor.u32 1.1754944e-38, %v4393
    %v4395 = vsel %vm4392, %v4394, %v4390
    %v4396 = vmul.f32 1.0, %v4395
    %v4397 = vrcp.pop %v4351
    %v4398 = vmul.f32 %v4351, %v4397
    %v4399 = vsub.f32 1.0, %v4398
    %v4400 = vmul.f32 %v4397, %v4399
    %v4401 = vadd.f32 %v4397, %v4400
    %vm4402 = vweird.f32 %v4351
    %vm4403 = vweird.f32 %v4397
    %vm4404 = vmor %vm4402, %vm4403
    %v4405 = vsel %vm4404, %v4397, %v4401
    %v4406 = vand.u32 2147483647, %v4351
    %vm4407 = vcmp.eq.f32.partialorder %v4406, 8.507059e+37
    %v4408 = vand.u32 %v4351, 2147483648
    %v4409 = vor.u32 1.1754944e-38, %v4408
    %v4410 = vsel %vm4407, %v4409, %v4405
    %v4411 = vmul.f32 1.0, %v4410
    %v4412 = vxor.u32 %v4266, 2147483648
    %v4413 = vxor.u32 %v4267, 2147483648
    %v4414 = vxor.u32 %v4268, 2147483648
    %v4415 = vxor.u32 %v4269, 2147483648
    %v4416 = vmul.f32 %v4412, 1.442695
    %v4417 = vpow.pop %v4416
    %v4418 = vmul.f32 %v4413, 1.442695
    %v4419 = vpow.pop %v4418
    %v4420 = vmul.f32 %v4414, 1.442695
    %v4421 = vpow.pop %v4420
    %v4422 = vmul.f32 %v4415, 1.442695
    %v4423 = vpow.pop %v4422
    %v4424 = vadd.f32 %v4417, 1.0
    %v4425 = vadd.f32 %v4419, 1.0
    %v4426 = vadd.f32 %v4421, 1.0
    %v4427 = vadd.f32 %v4423, 1.0
    %v4428 = vrcp.pop %v4424
    %v4429 = vmul.f32 %v4424, %v4428
    %v4430 = vsub.f32 1.0, %v4429
    %v4431 = vmul.f32 %v4428, %v4430
    %v4432 = vadd.f32 %v4428, %v4431
    %vm4433 = vweird.f32 %v4424
    %vm4434 = vweird.f32 %v4428
    %vm4435 = vmor %vm4433, %vm4434
    %v4436 = vsel %vm4435, %v4428, %v4432
    %v4437 = vand.u32 2147483647, %v4424
    %vm4438 = vcmp.eq.f32.partialorder %v4437, 8.507059e+37
    %v4439 = vand.u32 %v4424, 2147483648
    %v4440 = vor.u32 1.1754944e-38, %v4439
    %v4441 = vsel %vm4438, %v4440, %v4436
    %v4442 = vmul.f32 1.0, %v4441
    %v4443 = vrcp.pop %v4425
    %v4444 = vmul.f32 %v4425, %v4443
    %v4445 = vsub.f32 1.0, %v4444
    %v4446 = vmul.f32 %v4443, %v4445
    %v4447 = vadd.f32 %v4443, %v4446
    %vm4448 = vweird.f32 %v4425
    %vm4449 = vweird.f32 %v4443
    %vm4450 = vmor %vm4448, %vm4449
    %v4451 = vsel %vm4450, %v4443, %v4447
    %v4452 = vand.u32 2147483647, %v4425
    %vm4453 = vcmp.eq.f32.partialorder %v4452, 8.507059e+37
    %v4454 = vand.u32 %v4425, 2147483648
    %v4455 = vor.u32 1.1754944e-38, %v4454
    %v4456 = vsel %vm4453, %v4455, %v4451
    %v4457 = vmul.f32 1.0, %v4456
    %v4458 = vrcp.pop %v4426
    %v4459 = vmul.f32 %v4426, %v4458
    %v4460 = vsub.f32 1.0, %v4459
    %v4461 = vmul.f32 %v4458, %v4460
    %v4462 = vadd.f32 %v4458, %v4461
    %vm4463 = vweird.f32 %v4426
    %vm4464 = vweird.f32 %v4458
    %vm4465 = vmor %vm4463, %vm4464
    %v4466 = vsel %vm4465, %v4458, %v4462
    %v4467 = vand.u32 2147483647, %v4426
    %vm4468 = vcmp.eq.f32.partialorder %v4467, 8.507059e+37
    %v4469 = vand.u32 %v4426, 2147483648
    %v4470 = vor.u32 1.1754944e-38, %v4469
    %v4471 = vsel %vm4468, %v4470, %v4466
    %v4472 = vmul.f32 1.0, %v4471
    %v4473 = vrcp.pop %v4427
    %v4474 = vmul.f32 %v4427, %v4473
    %v4475 = vsub.f32 1.0, %v4474
    %v4476 = vmul.f32 %v4473, %v4475
    %v4477 = vadd.f32 %v4473, %v4476
    %vm4478 = vweird.f32 %v4427
    %vm4479 = vweird.f32 %v4473
    %vm4480 = vmor %vm4478, %vm4479
    %v4481 = vsel %vm4480, %v4473, %v4477
    %v4482 = vand.u32 2147483647, %v4427
    %vm4483 = vcmp.eq.f32.partialorder %v4482, 8.507059e+37
    %v4484 = vand.u32 %v4427, 2147483648
    %v4485 = vor.u32 1.1754944e-38, %v4484
    %v4486 = vsel %vm4483, %v4485, %v4481
    %v4487 = vmul.f32 1.0, %v4486
    %v4488 = vtanh.pop %v4299
    %v4489 = vtanh.pop %v4300
    %v4490 = vtanh.pop %v4301
    %v4491 = vtanh.pop %v4302
    %v4492 = vxor.u32 %v4332, 2147483648
    %v4493 = vxor.u32 %v4333, 2147483648
    %v4494 = vxor.u32 %v4334, 2147483648
    %v4495 = vxor.u32 %v4335, 2147483648
    %v4496 = vmul.f32 %v4492, 1.442695
    %v4497 = vpow.pop %v4496
    %v4498 = vmul.f32 %v4493, 1.442695
    %v4499 = vpow.pop %v4498
    %v4500 = vmul.f32 %v4494, 1.442695
    %v4501 = vpow.pop %v4500
    %v4502 = vmul.f32 %v4495, 1.442695
    %v4503 = vpow.pop %v4502
    %v4504 = vadd.f32 %v4497, 1.0
    %v4505 = vadd.f32 %v4499, 1.0
    %v4506 = vadd.f32 %v4501, 1.0
    %v4507 = vadd.f32 %v4503, 1.0
    %v4508 = vrcp.pop %v4504
    %v4509 = vmul.f32 %v4504, %v4508
    %v4510 = vsub.f32 1.0, %v4509
    %v4511 = vmul.f32 %v4508, %v4510
    %v4512 = vadd.f32 %v4508, %v4511
    %vm4513 = vweird.f32 %v4504
    %vm4514 = vweird.f32 %v4508
    %vm4515 = vmor %vm4513, %vm4514
    %v4516 = vsel %vm4515, %v4508, %v4512
    %v4517 = vand.u32 2147483647, %v4504
    %vm4518 = vcmp.eq.f32.partialorder %v4517, 8.507059e+37
    %v4519 = vand.u32 %v4504, 2147483648
    %v4520 = vor.u32 1.1754944e-38, %v4519
    %v4521 = vsel %vm4518, %v4520, %v4516
    %v4522 = vmul.f32 1.0, %v4521
    %v4523 = vrcp.pop %v4505
    %v4524 = vmul.f32 %v4505, %v4523
    %v4525 = vsub.f32 1.0, %v4524
    %v4526 = vmul.f32 %v4523, %v4525
    %v4527 = vadd.f32 %v4523, %v4526
    %vm4528 = vweird.f32 %v4505
    %vm4529 = vweird.f32 %v4523
    %vm4530 = vmor %vm4528, %vm4529
    %v4531 = vsel %vm4530, %v4523, %v4527
    %v4532 = vand.u32 2147483647, %v4505
    %vm4533 = vcmp.eq.f32.partialorder %v4532, 8.507059e+37
    %v4534 = vand.u32 %v4505, 2147483648
    %v4535 = vor.u32 1.1754944e-38, %v4534
    %v4536 = vsel %vm4533, %v4535, %v4531
    %v4537 = vmul.f32 1.0, %v4536
    %v4538 = vrcp.pop %v4506
    %v4539 = vmul.f32 %v4506, %v4538
    %v4540 = vsub.f32 1.0, %v4539
    %v4541 = vmul.f32 %v4538, %v4540
    %v4542 = vadd.f32 %v4538, %v4541
    %vm4543 = vweird.f32 %v4506
    %vm4544 = vweird.f32 %v4538
    %vm4545 = vmor %vm4543, %vm4544
    %v4546 = vsel %vm4545, %v4538, %v4542
    %v4547 = vand.u32 2147483647, %v4506
    %vm4548 = vcmp.eq.f32.partialorder %v4547, 8.507059e+37
    %v4549 = vand.u32 %v4506, 2147483648
    %v4550 = vor.u32 1.1754944e-38, %v4549
    %v4551 = vsel %vm4548, %v4550, %v4546
    %v4552 = vmul.f32 1.0, %v4551
    %v4553 = vrcp.pop %v4507
    %v4554 = vmul.f32 %v4507, %v4553
    %v4555 = vsub.f32 1.0, %v4554
    %v4556 = vmul.f32 %v4553, %v4555
    %v4557 = vadd.f32 %v4553, %v4556
    %vm4558 = vweird.f32 %v4507
    %vm4559 = vweird.f32 %v4553
    %vm4560 = vmor %vm4558, %vm4559
    %v4561 = vsel %vm4560, %v4553, %v4557
    %v4562 = vand.u32 2147483647, %v4507
    %vm4563 = vcmp.eq.f32.partialorder %v4562, 8.507059e+37
    %v4564 = vand.u32 %v4507, 2147483648
    %v4565 = vor.u32 1.1754944e-38, %v4564
    %v4566 = vsel %vm4563, %v4565, %v4561
    %v4567 = vmul.f32 1.0, %v4566
    %v4568 = vmul.f32 %v4442, %v4180
    %v4569 = vmul.f32 %v4457, %v4181
    %v4570 = vmul.f32 %v4472, %v4182
    %v4571 = vmul.f32 %v4487, %v4183
    %v4572 = vmul.f32 %v4366, %v4488
    %v4573 = vmul.f32 %v4381, %v4489
    %v4574 = vmul.f32 %v4396, %v4490
    %v4575 = vmul.f32 %v4411, %v4491
    %v4576 = vadd.f32 %v4568, %v4572
    %v4577 = vadd.f32 %v4569, %v4573
    %v4578 = vadd.f32 %v4570, %v4574
    %v4579 = vadd.f32 %v4571, %v4575
    %v4580 = vtanh.pop %v4576
    %v4581 = vtanh.pop %v4577
    %v4582 = vtanh.pop %v4578
    %v4583 = vtanh.pop %v4579
    %v4584 = vmul.f32 %v4522, %v4580
    %v4585 = vmul.f32 %v4537, %v4581
    %v4586 = vmul.f32 %v4552, %v4582
    %v4587 = vmul.f32 %v4567, %v4583
    %v4589 = vsel %vm1507, %v4584, 0
    %v4592 = vsel %vm1507, %v4585, 0
    %v4595 = vsel %vm1507, %v4586, 0
    %v4598 = vsel %vm1507, %v4587, 0
    %4600 = vmatpush.msra.mxu0 0.0
    %4601 = vmatpush.msra.mxu0 0.0
    %4602 = vmatpush.msra.mxu0 0.0
    %4603 = vmatpush.msra.mxu0 0.0
    %4604 = vmatpush.msra.mxu0 0.0
    %4605 = vmatpush.msra.mxu0 0.0
    %4606 = vmatpush.msra.mxu0 0.0
    %4607 = vmatpush.msra.mxu0 0.0
    %4608 = vmatpush.msra.mxu0 0.0
    %4609 = vmatpush.msra.mxu0 0.0
    %4610 = vmatpush.msra.mxu0 0.0
    %4611 = vmatpush.msra.mxu0 0.0
    %4612 = vmatpush.msra.mxu0 %v3396
    %4613 = vmatpush.msra.mxu0 %v3395
    %4614 = vmatpush.msra.mxu0 %v3394
    %4615 = vmatpush.msra.mxu0 %v3393
    %4616 = vmatmul.f32.gmra.mxu0 %v4589
    %v4617 = vpop.f32.mrf.mxu0
    %v4618 = vadd.f32 0.0, %v4617
    %4619 = vmatmul.f32.gmra.mxu0 %v4592
    %v4620 = vpop.f32.mrf.mxu0
    %v4621 = vadd.f32 0.0, %v4620
    %4622 = vmatmul.f32.gmra.mxu0 %v4595
    %v4623 = vpop.f32.mrf.mxu0
    %v4624 = vadd.f32 0.0, %v4623
    %4625 = vmatmul.f32.gmra.mxu0 %v4598
    %v4626 = vpop.f32.mrf.mxu0
    %v4627 = vadd.f32 0.0, %v4626
    %4628 = vdwg.mxu0
    %v4629 = vadd.f32 %v3157, %v4618
    %v4630 = vadd.f32 %v3160, %v4621
    %v4631 = vadd.f32 %v3163, %v4624
    %v4632 = vadd.f32 %v3166, %v4627
    %4633 = vmatpush.msra.mxu0 0.0
    %4634 = vmatpush.msra.mxu0 0.0
    %4635 = vmatpush.msra.mxu0 0.0
    %4636 = vmatpush.msra.mxu0 0.0
    %4637 = vmatpush.msra.mxu0 0.0
    %4638 = vmatpush.msra.mxu0 0.0
    %4639 = vmatpush.msra.mxu0 0.0
    %4640 = vmatpush.msra.mxu0 0.0
    %4641 = vmatpush.msra.mxu0 0.0
    %4642 = vmatpush.msra.mxu0 0.0
    %4643 = vmatpush.msra.mxu0 0.0
    %4644 = vmatpush.msra.mxu0 0.0
    %4645 = vmatpush.msra.mxu0 %v3401
    %4646 = vmatpush.msra.mxu0 %v3400
    %4647 = vmatpush.msra.mxu0 %v3399
    %4648 = vmatpush.msra.mxu0 %v3398
    %4649 = vmatmul.f32.gmra.mxu0 %v4589
    %v4650 = vpop.f32.mrf.mxu0
    %v4651 = vadd.f32 0.0, %v4650
    %4652 = vmatmul.f32.gmra.mxu0 %v4592
    %v4653 = vpop.f32.mrf.mxu0
    %v4654 = vadd.f32 0.0, %v4653
    %4655 = vmatmul.f32.gmra.mxu0 %v4595
    %v4656 = vpop.f32.mrf.mxu0
    %v4657 = vadd.f32 0.0, %v4656
    %4658 = vmatmul.f32.gmra.mxu0 %v4598
    %v4659 = vpop.f32.mrf.mxu0
    %v4660 = vadd.f32 0.0, %v4659
    %4661 = vdwg.mxu0
    %v4662 = vadd.f32 %v3232, %v4651
    %v4663 = vadd.f32 %v3235, %v4654
    %v4664 = vadd.f32 %v3238, %v4657
    %v4665 = vadd.f32 %v3241, %v4660
    %4666 = vmatpush.msra.mxu0 0.0
    %4667 = vmatpush.msra.mxu0 0.0
    %4668 = vmatpush.msra.mxu0 0.0
    %4669 = vmatpush.msra.mxu0 0.0
    %4670 = vmatpush.msra.mxu0 0.0
    %4671 = vmatpush.msra.mxu0 0.0
    %4672 = vmatpush.msra.mxu0 0.0
    %4673 = vmatpush.msra.mxu0 0.0
    %4674 = vmatpush.msra.mxu0 0.0
    %4675 = vmatpush.msra.mxu0 0.0
    %4676 = vmatpush.msra.mxu0 0.0
    %4677 = vmatpush.msra.mxu0 0.0
    %4678 = vmatpush.msra.mxu0 %v3406
    %4679 = vmatpush.msra.mxu0 %v3405
    %4680 = vmatpush.msra.mxu0 %v3404
    %4681 = vmatpush.msra.mxu0 %v3403
    %4682 = vmatmul.f32.gmra.mxu0 %v4589
    %v4683 = vpop.f32.mrf.mxu0
    %v4684 = vadd.f32 0.0, %v4683
    %4685 = vmatmul.f32.gmra.mxu0 %v4592
    %v4686 = vpop.f32.mrf.mxu0
    %v4687 = vadd.f32 0.0, %v4686
    %4688 = vmatmul.f32.gmra.mxu0 %v4595
    %v4689 = vpop.f32.mrf.mxu0
    %v4690 = vadd.f32 0.0, %v4689
    %4691 = vmatmul.f32.gmra.mxu0 %v4598
    %v4692 = vpop.f32.mrf.mxu0
    %v4693 = vadd.f32 0.0, %v4692
    %4694 = vdwg.mxu0
    %v4695 = vadd.f32 %v3307, %v4684
    %v4696 = vadd.f32 %v3310, %v4687
    %v4697 = vadd.f32 %v3313, %v4690
    %v4698 = vadd.f32 %v3316, %v4693
    %4699 = vmatpush.msra.mxu0 0.0
    %4700 = vmatpush.msra.mxu0 0.0
    %4701 = vmatpush.msra.mxu0 0.0
    %4702 = vmatpush.msra.mxu0 0.0
    %4703 = vmatpush.msra.mxu0 0.0
    %4704 = vmatpush.msra.mxu0 0.0
    %4705 = vmatpush.msra.mxu0 0.0
    %4706 = vmatpush.msra.mxu0 0.0
    %4707 = vmatpush.msra.mxu0 0.0
    %4708 = vmatpush.msra.mxu0 0.0
    %4709 = vmatpush.msra.mxu0 0.0
    %4710 = vmatpush.msra.mxu0 0.0
    %4711 = vmatpush.msra.mxu0 %v3411
    %4712 = vmatpush.msra.mxu0 %v3410
    %4713 = vmatpush.msra.mxu0 %v3409
    %4714 = vmatpush.msra.mxu0 %v3408
    %4715 = vmatmul.f32.gmra.mxu0 %v4589
    %v4716 = vpop.f32.mrf.mxu0
    %v4717 = vadd.f32 0.0, %v4716
    %4718 = vmatmul.f32.gmra.mxu0 %v4592
    %v4719 = vpop.f32.mrf.mxu0
    %v4720 = vadd.f32 0.0, %v4719
    %4721 = vmatmul.f32.gmra.mxu0 %v4595
    %v4722 = vpop.f32.mrf.mxu0
    %v4723 = vadd.f32 0.0, %v4722
    %4724 = vmatmul.f32.gmra.mxu0 %v4598
    %v4725 = vpop.f32.mrf.mxu0
    %v4726 = vadd.f32 0.0, %v4725
    %4727 = vdwg.mxu0
    %v4728 = vadd.f32 %v3382, %v4717
    %v4729 = vadd.f32 %v3385, %v4720
    %v4730 = vadd.f32 %v3388, %v4723
    %v4731 = vadd.f32 %v3391, %v4726
    %v4732 = vxor.u32 %v4629, 2147483648
    %v4733 = vxor.u32 %v4630, 2147483648
    %v4734 = vxor.u32 %v4631, 2147483648
    %v4735 = vxor.u32 %v4632, 2147483648
    %v4736 = vmul.f32 %v4732, 1.442695
    %v4737 = vpow.pop %v4736
    %v4738 = vmul.f32 %v4733, 1.442695
    %v4739 = vpow.pop %v4738
    %v4740 = vmul.f32 %v4734, 1.442695
    %v4741 = vpow.pop %v4740
    %v4742 = vmul.f32 %v4735, 1.442695
    %v4743 = vpow.pop %v4742
    %v4744 = vadd.f32 %v4737, 1.0
    %v4745 = vadd.f32 %v4739, 1.0
    %v4746 = vadd.f32 %v4741, 1.0
    %v4747 = vadd.f32 %v4743, 1.0
    %v4748 = vrcp.pop %v4744
    %v4749 = vmul.f32 %v4744, %v4748
    %v4750 = vsub.f32 1.0, %v4749
    %v4751 = vmul.f32 %v4748, %v4750
    %v4752 = vadd.f32 %v4748, %v4751
    %vm4753 = vweird.f32 %v4744
    %vm4754 = vweird.f32 %v4748
    %vm4755 = vmor %vm4753, %vm4754
    %v4756 = vsel %vm4755, %v4748, %v4752
    %v4757 = vand.u32 2147483647, %v4744
    %vm4758 = vcmp.eq.f32.partialorder %v4757, 8.507059e+37
    %v4759 = vand.u32 %v4744, 2147483648
    %v4760 = vor.u32 1.1754944e-38, %v4759
    %v4761 = vsel %vm4758, %v4760, %v4756
    %v4762 = vmul.f32 1.0, %v4761
    %v4763 = vrcp.pop %v4745
    %v4764 = vmul.f32 %v4745, %v4763
    %v4765 = vsub.f32 1.0, %v4764
    %v4766 = vmul.f32 %v4763, %v4765
    %v4767 = vadd.f32 %v4763, %v4766
    %vm4768 = vweird.f32 %v4745
    %vm4769 = vweird.f32 %v4763
    %vm4770 = vmor %vm4768, %vm4769
    %v4771 = vsel %vm4770, %v4763, %v4767
    %v4772 = vand.u32 2147483647, %v4745
    %vm4773 = vcmp.eq.f32.partialorder %v4772, 8.507059e+37
    %v4774 = vand.u32 %v4745, 2147483648
    %v4775 = vor.u32 1.1754944e-38, %v4774
    %v4776 = vsel %vm4773, %v4775, %v4771
    %v4777 = vmul.f32 1.0, %v4776
    %v4778 = vrcp.pop %v4746
    %v4779 = vmul.f32 %v4746, %v4778
    %v4780 = vsub.f32 1.0, %v4779
    %v4781 = vmul.f32 %v4778, %v4780
    %v4782 = vadd.f32 %v4778, %v4781
    %vm4783 = vweird.f32 %v4746
    %vm4784 = vweird.f32 %v4778
    %vm4785 = vmor %vm4783, %vm4784
    %v4786 = vsel %vm4785, %v4778, %v4782
    %v4787 = vand.u32 2147483647, %v4746
    %vm4788 = vcmp.eq.f32.partialorder %v4787, 8.507059e+37
    %v4789 = vand.u32 %v4746, 2147483648
    %v4790 = vor.u32 1.1754944e-38, %v4789
    %v4791 = vsel %vm4788, %v4790, %v4786
    %v4792 = vmul.f32 1.0, %v4791
    %v4793 = vrcp.pop %v4747
    %v4794 = vmul.f32 %v4747, %v4793
    %v4795 = vsub.f32 1.0, %v4794
    %v4796 = vmul.f32 %v4793, %v4795
    %v4797 = vadd.f32 %v4793, %v4796
    %vm4798 = vweird.f32 %v4747
    %vm4799 = vweird.f32 %v4793
    %vm4800 = vmor %vm4798, %vm4799
    %v4801 = vsel %vm4800, %v4793, %v4797
    %v4802 = vand.u32 2147483647, %v4747
    %vm4803 = vcmp.eq.f32.partialorder %v4802, 8.507059e+37
    %v4804 = vand.u32 %v4747, 2147483648
    %v4805 = vor.u32 1.1754944e-38, %v4804
    %v4806 = vsel %vm4803, %v4805, %v4801
    %v4807 = vmul.f32 1.0, %v4806
    %v4808 = vxor.u32 %v4662, 2147483648
    %v4809 = vxor.u32 %v4663, 2147483648
    %v4810 = vxor.u32 %v4664, 2147483648
    %v4811 = vxor.u32 %v4665, 2147483648
    %v4812 = vmul.f32 %v4808, 1.442695
    %v4813 = vpow.pop %v4812
    %v4814 = vmul.f32 %v4809, 1.442695
    %v4815 = vpow.pop %v4814
    %v4816 = vmul.f32 %v4810, 1.442695
    %v4817 = vpow.pop %v4816
    %v4818 = vmul.f32 %v4811, 1.442695
    %v4819 = vpow.pop %v4818
    %v4820 = vadd.f32 %v4813, 1.0
    %v4821 = vadd.f32 %v4815, 1.0
    %v4822 = vadd.f32 %v4817, 1.0
    %v4823 = vadd.f32 %v4819, 1.0
    %v4824 = vrcp.pop %v4820
    %v4825 = vmul.f32 %v4820, %v4824
    %v4826 = vsub.f32 1.0, %v4825
    %v4827 = vmul.f32 %v4824, %v4826
    %v4828 = vadd.f32 %v4824, %v4827
    %vm4829 = vweird.f32 %v4820
    %vm4830 = vweird.f32 %v4824
    %vm4831 = vmor %vm4829, %vm4830
    %v4832 = vsel %vm4831, %v4824, %v4828
    %v4833 = vand.u32 2147483647, %v4820
    %vm4834 = vcmp.eq.f32.partialorder %v4833, 8.507059e+37
    %v4835 = vand.u32 %v4820, 2147483648
    %v4836 = vor.u32 1.1754944e-38, %v4835
    %v4837 = vsel %vm4834, %v4836, %v4832
    %v4838 = vmul.f32 1.0, %v4837
    %v4839 = vrcp.pop %v4821
    %v4840 = vmul.f32 %v4821, %v4839
    %v4841 = vsub.f32 1.0, %v4840
    %v4842 = vmul.f32 %v4839, %v4841
    %v4843 = vadd.f32 %v4839, %v4842
    %vm4844 = vweird.f32 %v4821
    %vm4845 = vweird.f32 %v4839
    %vm4846 = vmor %vm4844, %vm4845
    %v4847 = vsel %vm4846, %v4839, %v4843
    %v4848 = vand.u32 2147483647, %v4821
    %vm4849 = vcmp.eq.f32.partialorder %v4848, 8.507059e+37
    %v4850 = vand.u32 %v4821, 2147483648
    %v4851 = vor.u32 1.1754944e-38, %v4850
    %v4852 = vsel %vm4849, %v4851, %v4847
    %v4853 = vmul.f32 1.0, %v4852
    %v4854 = vrcp.pop %v4822
    %v4855 = vmul.f32 %v4822, %v4854
    %v4856 = vsub.f32 1.0, %v4855
    %v4857 = vmul.f32 %v4854, %v4856
    %v4858 = vadd.f32 %v4854, %v4857
    %vm4859 = vweird.f32 %v4822
    %vm4860 = vweird.f32 %v4854
    %vm4861 = vmor %vm4859, %vm4860
    %v4862 = vsel %vm4861, %v4854, %v4858
    %v4863 = vand.u32 2147483647, %v4822
    %vm4864 = vcmp.eq.f32.partialorder %v4863, 8.507059e+37
    %v4865 = vand.u32 %v4822, 2147483648
    %v4866 = vor.u32 1.1754944e-38, %v4865
    %v4867 = vsel %vm4864, %v4866, %v4862
    %v4868 = vmul.f32 1.0, %v4867
    %v4869 = vrcp.pop %v4823
    %v4870 = vmul.f32 %v4823, %v4869
    %v4871 = vsub.f32 1.0, %v4870
    %v4872 = vmul.f32 %v4869, %v4871
    %v4873 = vadd.f32 %v4869, %v4872
    %vm4874 = vweird.f32 %v4823
    %vm4875 = vweird.f32 %v4869
    %vm4876 = vmor %vm4874, %vm4875
    %v4877 = vsel %vm4876, %v4869, %v4873
    %v4878 = vand.u32 2147483647, %v4823
    %vm4879 = vcmp.eq.f32.partialorder %v4878, 8.507059e+37
    %v4880 = vand.u32 %v4823, 2147483648
    %v4881 = vor.u32 1.1754944e-38, %v4880
    %v4882 = vsel %vm4879, %v4881, %v4877
    %v4883 = vmul.f32 1.0, %v4882
    %v4884 = vtanh.pop %v4695
    %v4885 = vtanh.pop %v4696
    %v4886 = vtanh.pop %v4697
    %v4887 = vtanh.pop %v4698
    %v4888 = vxor.u32 %v4728, 2147483648
    %v4889 = vxor.u32 %v4729, 2147483648
    %v4890 = vxor.u32 %v4730, 2147483648
    %v4891 = vxor.u32 %v4731, 2147483648
    %v4892 = vmul.f32 %v4888, 1.442695
    %v4893 = vpow.pop %v4892
    %v4894 = vmul.f32 %v4889, 1.442695
    %v4895 = vpow.pop %v4894
    %v4896 = vmul.f32 %v4890, 1.442695
    %v4897 = vpow.pop %v4896
    %v4898 = vmul.f32 %v4891, 1.442695
    %v4899 = vpow.pop %v4898
    %v4900 = vadd.f32 %v4893, 1.0
    %v4901 = vadd.f32 %v4895, 1.0
    %v4902 = vadd.f32 %v4897, 1.0
    %v4903 = vadd.f32 %v4899, 1.0
    %v4904 = vrcp.pop %v4900
    %v4905 = vmul.f32 %v4900, %v4904
    %v4906 = vsub.f32 1.0, %v4905
    %v4907 = vmul.f32 %v4904, %v4906
    %v4908 = vadd.f32 %v4904, %v4907
    %vm4909 = vweird.f32 %v4900
    %vm4910 = vweird.f32 %v4904
    %vm4911 = vmor %vm4909, %vm4910
    %v4912 = vsel %vm4911, %v4904, %v4908
    %v4913 = vand.u32 2147483647, %v4900
    %vm4914 = vcmp.eq.f32.partialorder %v4913, 8.507059e+37
    %v4915 = vand.u32 %v4900, 2147483648
    %v4916 = vor.u32 1.1754944e-38, %v4915
    %v4917 = vsel %vm4914, %v4916, %v4912
    %v4918 = vmul.f32 1.0, %v4917
    %v4919 = vrcp.pop %v4901
    %v4920 = vmul.f32 %v4901, %v4919
    %v4921 = vsub.f32 1.0, %v4920
    %v4922 = vmul.f32 %v4919, %v4921
    %v4923 = vadd.f32 %v4919, %v4922
    %vm4924 = vweird.f32 %v4901
    %vm4925 = vweird.f32 %v4919
    %vm4926 = vmor %vm4924, %vm4925
    %v4927 = vsel %vm4926, %v4919, %v4923
    %v4928 = vand.u32 2147483647, %v4901
    %vm4929 = vcmp.eq.f32.partialorder %v4928, 8.507059e+37
    %v4930 = vand.u32 %v4901, 2147483648
    %v4931 = vor.u32 1.1754944e-38, %v4930
    %v4932 = vsel %vm4929, %v4931, %v4927
    %v4933 = vmul.f32 1.0, %v4932
    %v4934 = vrcp.pop %v4902
    %v4935 = vmul.f32 %v4902, %v4934
    %v4936 = vsub.f32 1.0, %v4935
    %v4937 = vmul.f32 %v4934, %v4936
    %v4938 = vadd.f32 %v4934, %v4937
    %vm4939 = vweird.f32 %v4902
    %vm4940 = vweird.f32 %v4934
    %vm4941 = vmor %vm4939, %vm4940
    %v4942 = vsel %vm4941, %v4934, %v4938
    %v4943 = vand.u32 2147483647, %v4902
    %vm4944 = vcmp.eq.f32.partialorder %v4943, 8.507059e+37
    %v4945 = vand.u32 %v4902, 2147483648
    %v4946 = vor.u32 1.1754944e-38, %v4945
    %v4947 = vsel %vm4944, %v4946, %v4942
    %v4948 = vmul.f32 1.0, %v4947
    %v4949 = vrcp.pop %v4903
    %v4950 = vmul.f32 %v4903, %v4949
    %v4951 = vsub.f32 1.0, %v4950
    %v4952 = vmul.f32 %v4949, %v4951
    %v4953 = vadd.f32 %v4949, %v4952
    %vm4954 = vweird.f32 %v4903
    %vm4955 = vweird.f32 %v4949
    %vm4956 = vmor %vm4954, %vm4955
    %v4957 = vsel %vm4956, %v4949, %v4953
    %v4958 = vand.u32 2147483647, %v4903
    %vm4959 = vcmp.eq.f32.partialorder %v4958, 8.507059e+37
    %v4960 = vand.u32 %v4903, 2147483648
    %v4961 = vor.u32 1.1754944e-38, %v4960
    %v4962 = vsel %vm4959, %v4961, %v4957
    %v4963 = vmul.f32 1.0, %v4962
    %v4964 = vmul.f32 %v4838, %v4576
    %v4965 = vmul.f32 %v4853, %v4577
    %v4966 = vmul.f32 %v4868, %v4578
    %v4967 = vmul.f32 %v4883, %v4579
    %v4968 = vmul.f32 %v4762, %v4884
    %v4969 = vmul.f32 %v4777, %v4885
    %v4970 = vmul.f32 %v4792, %v4886
    %v4971 = vmul.f32 %v4807, %v4887
    %v4972 = vadd.f32 %v4964, %v4968
    %v4973 = vadd.f32 %v4965, %v4969
    %v4974 = vadd.f32 %v4966, %v4970
    %v4975 = vadd.f32 %v4967, %v4971
    %v4976 = vtanh.pop %v4972
    %v4977 = vtanh.pop %v4973
    %v4978 = vtanh.pop %v4974
    %v4979 = vtanh.pop %v4975
    %v4980 = vmul.f32 %v4918, %v4976
    %v4981 = vmul.f32 %v4933, %v4977
    %v4982 = vmul.f32 %v4948, %v4978
    %v4983 = vmul.f32 %v4963, %v4979
    %v4984 = vld [vmem:[%s14] sm:$0xff]
    %v4985 = vld [vmem:[%s14 + $0x8] sm:$0xff]
    %v4986 = vld [vmem:[%s14 + $0x10] sm:$0xff]
    %v4987 = vld [vmem:[%s14 + $0x18] sm:$0xff]
    %v4988 = vld [vmem:[%s14 + $0x20] sm:$0xff]
    %v4989 = vld [vmem:[%s14 + $0x28] sm:$0xff]
    %v4990 = vld [vmem:[%s14 + $0x30] sm:$0xff]
    %v4991 = vld [vmem:[%s14 + $0x38] sm:$0xff]
    %v4993 = vsel %vm1507, %v4982, 0
    %v4996 = vsel %vm1507, %v4983, 0
    %4998 = vmatpush.msra.mxu0 0.0
    %4999 = vmatpush.msra.mxu0 0.0
    %5000 = vmatpush.msra.mxu0 0.0
    %5001 = vmatpush.msra.mxu0 0.0
    %5002 = vmatpush.msra.mxu0 0.0
    %5003 = vmatpush.msra.mxu0 0.0
    %5004 = vmatpush.msra.mxu0 0.0
    %5005 = vmatpush.msra.mxu0 0.0
    %5006 = vmatpush.msra.mxu0 0.0
    %5007 = vmatpush.msra.mxu0 0.0
    %5008 = vmatpush.msra.mxu0 0.0
    %5009 = vmatpush.msra.mxu0 0.0
    %5010 = vmatpush.msra.mxu0 %v4991
    %5011 = vmatpush.msra.mxu0 %v4990
    %5012 = vmatpush.msra.mxu0 %v4989
    %5013 = vmatpush.msra.mxu0 %v4988
    %5014 = vmatmul.f32.gmra.mxu0 %v4993
    %v5015 = vpop.f32.mrf.mxu0
    %v5016 = vadd.f32 0.0, %v5015
    %5017 = vmatmul.f32.gmra.mxu0 %v4996
    %v5018 = vpop.f32.mrf.mxu0
    %v5019 = vadd.f32 0.0, %v5018
    %5020 = vdwg.mxu0
    %v5022 = vsel %vm1507, %v4980, 0
    %v5025 = vsel %vm1507, %v4981, 0
    %5027 = vmatpush.msra.mxu0 0.0
    %5028 = vmatpush.msra.mxu0 0.0
    %5029 = vmatpush.msra.mxu0 0.0
    %5030 = vmatpush.msra.mxu0 0.0
    %5031 = vmatpush.msra.mxu0 0.0
    %5032 = vmatpush.msra.mxu0 0.0
    %5033 = vmatpush.msra.mxu0 0.0
    %5034 = vmatpush.msra.mxu0 0.0
    %5035 = vmatpush.msra.mxu0 0.0
    %5036 = vmatpush.msra.mxu0 0.0
    %5037 = vmatpush.msra.mxu0 0.0
    %5038 = vmatpush.msra.mxu0 0.0
    %5039 = vmatpush.msra.mxu0 %v4987
    %5040 = vmatpush.msra.mxu0 %v4986
    %5041 = vmatpush.msra.mxu0 %v4985
    %5042 = vmatpush.msra.mxu0 %v4984
    %5043 = vmatmul.f32.gmra.mxu0 %v5022
    %v5044 = vpop.f32.mrf.mxu0
    %v5045 = vadd.f32 %v5016, %v5044
    %5046 = vmatmul.f32.gmra.mxu0 %v5025
    %v5047 = vpop.f32.mrf.mxu0
    %v5048 = vadd.f32 %v5019, %v5047
    %5049 = vdwg.mxu0
    %v5050 = vld [vmem:[%s15] sm:$0x1]
    %v5052 = vperm.slane %v5050, 0
    %v5054 = vadd.f32 %v5045, %v5052
    %v5055 = vadd.f32 %v5048, %v5052
    %5056 = vst.msk [vmem:[%s16] sm:$0xff] %vm386, %v5054
    %5057 = vst.msk [vmem:[%s16 + $0x8] sm:$0xff] %vm386, %v5055
    // Predicated region
    $region82: #{_lambda_.1} parent=1 // pred_check
      _
    $region83: #{_lambda_.1} parent=1 // pred_check_branch
      %5059 = sbr.rel (0) target = $region85
    $region84: #{_lambda_.1} parent=1 // pred_region
      _
    $region85: #{_lambda_.1} parent=1 // pred_fallthru
      _
    // Predicated region
    $region86: #{_lambda_.1} parent=1 // pred_check
      _
    $region87: #{_lambda_.1} parent=1 // pred_check_branch
      %5061 = sbr.rel (0) target = $region89
    $region88: #{_lambda_.1} parent=1 // pred_region
      _
    $region89: #{_lambda_.1} parent=1 // pred_fallthru
      _
    %5062 = vsyncpa [#allocation3], 1
    %5063 = vsyncpa [#allocation5], 1
    %5064 = vsyncpa [#allocation8], 1

</llo_original>
